<compile_context>
chip_gen: v7x
topology: tpu7x:2x2x1
jax: 0.10.0
libtpu: 0.0.40
codegen_flags: <defaults>
</compile_context>

<pallas_src>
import functools

import jax
import jax.numpy as jnp
from jax import lax
from jax.experimental import pallas as pl
from jax.experimental.pallas import tpu as pltpu


SQRT_HALF = 0.7071067811865476
LANE = 128

# Abramowitz & Stegun 7.1.26 erf polynomial, |abs error| <= 1.5e-7.
_ERF_P = 0.3275911
_ERF_A1 = 0.254829592
_ERF_A2 = -0.284496736
_ERF_A3 = 1.421413741
_ERF_A4 = -1.453152027
_ERF_A5 = 1.061405429


def _round_up(x, m):
    return (x + m - 1) // m * m


def _erf_approx(x):
    """erf(x) from mul/add/div/exp/where only (always lowers in Mosaic, any dtype)."""
    ax = jnp.abs(x)
    t = 1.0 / (1.0 + _ERF_P * ax)
    poly = t * (_ERF_A1 + t * (_ERF_A2 + t * (_ERF_A3 + t * (_ERF_A4 + t * _ERF_A5))))
    y = 1.0 - poly * jnp.exp(-(ax * ax))
    return jnp.where(x < 0, -y, y)


def _gelu_erf(x):
    # v = (x * 0.5) * (erf(x * 0.7071067811865476) + 1)  -- exactly the module's math
    return (x * 0.5) * (_erf_approx(x * SQRT_HALF) + 1.0)


def _make_fused_kernel(gelu_dtype):
    def fused_conv_gelu_kernel(p_ref, w1_ref, b1_ref, w2_ref, b2_ref, w3_ref, b3_ref,
                               o_ref):
        # p_ref : (tm, K1p)  im2col patches for a tile of output pixels
        # w*_ref: matmul-form conv weights; b*_ref: (1, Cxp) f32 biases
        mm_dtype = w2_ref.dtype
        h1 = jnp.dot(p_ref[...], w1_ref[...],
                     preferred_element_type=jnp.float32) + b1_ref[...]
        g1 = _gelu_erf(h1.astype(gelu_dtype)).astype(mm_dtype)
        h2 = jnp.dot(g1, w2_ref[...],
                     preferred_element_type=jnp.float32) + b2_ref[...]
        g2 = _gelu_erf(h2.astype(gelu_dtype)).astype(mm_dtype)
        out = jnp.dot(g2, w3_ref[...],
                      preferred_element_type=jnp.float32) + b3_ref[...]
        o_ref[...] = out.astype(o_ref.dtype)
    return fused_conv_gelu_kernel


def im2col_3x3_s2_p1(x, dtype):
    """x: (N, Cin, H, W) -> patches (N*Ho*Wo, 9*Cin) in `dtype`.

    x is cast to `dtype` BEFORE the gather so the f32 patch matrix is never
    materialized. Column order is (kh, kw, cin)."""
    N, Cin, H, W = x.shape
    Ho = (H + 2 - 3) // 2 + 1
    Wo = (W + 2 - 3) // 2 + 1
    xp = jnp.pad(x.astype(dtype), ((0, 0), (0, 0), (1, 1), (1, 1)))
    cols = []
    for kh in range(3):
        for kw in range(3):
            cols.append(xp[:, :, kh:kh + 2 * Ho:2, kw:kw + 2 * Wo:2])  # (N,Cin,Ho,Wo)
    p = jnp.stack(cols, axis=1)            # (N, 9, Cin, Ho, Wo)
    p = p.transpose(0, 3, 4, 1, 2)         # (N, Ho, Wo, 9, Cin)
    return p.reshape(N * Ho * Wo, 9 * Cin), Ho, Wo


def model_forward(x, params, *, tm=512, use_bf16=True, gelu_in_bf16=None,
                  single_buffer_weights=True):
    """x: (N, Cin, H, W) float32 (NCHW like PyTorch). Returns (N, C3, Ho, Wo) f32."""
    (w1, b1), (w2, b2), (w3, b3) = params
    N, Cin = x.shape[0], x.shape[1]
    C1, C2, C3 = w1.shape[0], w2.shape[0], w3.shape[0]

    mm_dtype = jnp.bfloat16 if use_bf16 else jnp.float32
    if gelu_in_bf16 is None:
        kind = jax.devices()[0].device_kind.lower()
        old_gen = any(s in kind for s in ("v2", "v3", "v4", "v5"))
        gelu_in_bf16 = use_bf16 and not old_gen       # bf16 VPU/EUP only on v6e/v7x+
    gelu_dtype = jnp.bfloat16 if (use_bf16 and gelu_in_bf16) else jnp.float32

    patches, Ho, Wo = im2col_3x3_s2_p1(x, mm_dtype)   # (M, 9*Cin), already mm_dtype
    M, K1 = patches.shape

    # Lane-aligned (128) channel dims; row tile multiple of 8, capped so the grid has
    # >= 2 steps (megacore / both v7x TensorCores; amortizes per-step overhead).
    K1p = _round_up(K1, LANE)
    C1p = _round_up(C1, LANE)
    C2p = _round_up(C2, LANE)
    C3p = _round_up(C3, LANE)
    tm = _round_up(max(8, tm), 8)
    tm = max(8, min(tm, _round_up(-(-M // 2), 8)))
    Mp = _round_up(M, tm)

    # Zero padding on weight rows/cols and bias lanes keeps padded lanes exactly 0;
    # padded rows/lanes are sliced off after the kernel, so numerics are unchanged.
    patches_p = jnp.pad(patches, ((0, Mp - M), (0, K1p - K1)))

    w1m = jnp.transpose(w1, (2, 3, 1, 0)).reshape(9 * Cin, C1)   # (kh,kw,cin) x C1
    w1m = jnp.pad(w1m, ((0, K1p - K1), (0, C1p - C1))).astype(mm_dtype)
    w2m = jnp.pad(jnp.transpose(w2[:, :, 0, 0], (1, 0)),
                  ((0, C1p - C1), (0, C2p - C2))).astype(mm_dtype)
    w3m = jnp.pad(jnp.transpose(w3[:, :, 0, 0], (1, 0)),
                  ((0, C2p - C2), (0, C3p - C3))).astype(mm_dtype)
    b1m = jnp.pad(b1, (0, C1p - C1)).reshape(1, C1p).astype(jnp.float32)
    b2m = jnp.pad(b2, (0, C2p - C2)).reshape(1, C2p).astype(jnp.float32)
    b3m = jnp.pad(b3, (0, C3p - C3)).reshape(1, C3p).astype(jnp.float32)

    def const_spec(shape):
        # Weights/biases: constant index_map -> VMEM-resident across the whole grid.
        # Single-buffer them; double-buffering a never-changing block only burns VMEM.
        if single_buffer_weights:
            return pl.BlockSpec(shape, lambda i: (0, 0), pipeline_mode=pl.Buffered(1))
        return pl.BlockSpec(shape, lambda i: (0, 0))

    itemsize = jnp.dtype(mm_dtype).itemsize
    cost = pl.CostEstimate(
        flops=int(2 * M * (K1 * C1 + C1 * C2 + C2 * C3)),
        transcendentals=int(M * (C1 + C2)),           # one exp per GELU element
        bytes_accessed=int(Mp * K1p * itemsize
                           + (K1p * C1p + C1p * C2p + C2p * C3p) * itemsize
                           + (C1p + C2p + C3p) * 4
                           + Mp * C3p * 4),
    )

    grid = (Mp // tm,)
    out_mat = pl.pallas_call(
        _make_fused_kernel(gelu_dtype),
        out_shape=jax.ShapeDtypeStruct((Mp, C3p), jnp.float32),
        grid_spec=pltpu.PrefetchScalarGridSpec(
            num_scalar_prefetch=0,
            grid=grid,
            in_specs=[
                pl.BlockSpec((tm, K1p), lambda i: (i, 0)),
                const_spec((K1p, C1p)),
                const_spec((1, C1p)),
                const_spec((C1p, C2p)),
                const_spec((1, C2p)),
                const_spec((C2p, C3p)),
                const_spec((1, C3p)),
            ],
            out_specs=pl.BlockSpec((tm, C3p), lambda i: (i, 0)),
        ),
        compiler_params=pltpu.CompilerParams(
            dimension_semantics=("parallel",),
            vmem_limit_bytes=48 * 1024 * 1024,        # stays under v7x 64 MiB physical
        ),
        cost_estimate=cost,
    )(patches_p, w1m, b1m, w2m, b2m, w3m, b3m)

    # Slice off padding; single NCHW transpose outside the hot loop (module semantics).
    # TODO(synk): expose an NHWC / bf16 output option to drop this extra HBM pass.
    out = out_mat[:M, :C3].reshape(N, Ho, Wo, C3).transpose(0, 3, 1, 2)
    return out


def reference_forward(x, params):
    """Pure-JAX reference (lax convs, f32, exact erf) for sanity checking."""
    (w1, b1), (w2, b2), (w3, b3) = params
    dn = lax.conv_dimension_numbers(x.shape, w1.shape, ("NCHW", "OIHW", "NCHW"))

    def conv(v, w, b, stride, pad):
        y = lax.conv_general_dilated(v, w, (stride, stride), [(pad, pad), (pad, pad)],
                                     dimension_numbers=dn)
        return y + b.reshape(1, -1, 1, 1)

    def gelu(v):
        return (v * 0.5) * (jax.scipy.special.erf(v * SQRT_HALF) + 1.0)

    v1 = conv(x, w1, b1, 2, 1)
    v6 = gelu(v1)
    v7 = conv(v6, w2, b2, 1, 0)
    v12 = gelu(v7)
    return conv(v12, w3, b3, 1, 0)


if __name__ == "__main__":
    # Small shapes consistent with the module structure:
    # original: 212 -> 197 (3x3 s2 p1) -> 70 (1x1) -> 107 (1x1) on 1x 136x104.
    # scaled:     8 ->  16 (3x3 s2 p1) ->  8 (1x1) ->  12 (1x1) on 2x  32x32.
    N, Cin, H, W = 2, 8, 32, 32
    C1, C2, C3 = 16, 8, 12

    key = jax.random.PRNGKey(0)
    k = jax.random.split(key, 7)
    x = jax.random.normal(k[0], (N, Cin, H, W), jnp.float32)

    # PyTorch Conv2d parameter shapes: (Cout, Cin, kh, kw) + (Cout,).
    w1 = jax.random.normal(k[1], (C1, Cin, 3, 3), jnp.float32) * 0.1
    b1 = jax.random.normal(k[2], (C1,), jnp.float32) * 0.1
    w2 = jax.random.normal(k[3], (C2, C1, 1, 1), jnp.float32) * 0.1
    b2 = jax.random.normal(k[4], (C2,), jnp.float32) * 0.1
    w3 = jax.random.normal(k[5], (C3, C2, 1, 1), jnp.float32) * 0.1
    b3 = jax.random.normal(k[6], (C3,), jnp.float32) * 0.1
    params = ((w1, b1), (w2, b2), (w3, b3))

    fwd = jax.jit(functools.partial(model_forward, tm=512, use_bf16=True,
                                    single_buffer_weights=True))
    try:
        out = jax.block_until_ready(fwd(x, params))
    except Exception:
        # Conservative fallback: default double-buffering and f32 GELU (covers jax/
        # libtpu combos that reject pl.Buffered(1) or bf16 transcendentals).
        fwd = jax.jit(functools.partial(model_forward, tm=512, use_bf16=True,
                                        single_buffer_weights=False,
                                        gelu_in_bf16=False))
        out = jax.block_until_ready(fwd(x, params))

    ref = jax.block_until_ready(reference_forward(x, params))

    assert out.shape == (N, C3, H // 2, W // 2), out.shape
    # bf16 MXU operands + (possibly) bf16 GELU vs f32 reference: loosened tolerance.
    err = float(jnp.abs(out - ref).max())
    assert bool(jnp.allclose(out, ref, rtol=5e-2, atol=5e-2)), err
    print("KERNEL_OK")
</pallas_src>

<mosaic_0001>
module attributes {stable_mosaic.version = 11 : i64} {
  func.func @fused_conv_gelu_kernel(%arg0: i32, %arg1: memref<256x128xbf16, #tpu.memory_space<vmem>>, %arg2: memref<128x128xbf16, #tpu.memory_space<vmem>>, %arg3: memref<1x128xf32, #tpu.memory_space<vmem>>, %arg4: memref<128x128xbf16, #tpu.memory_space<vmem>>, %arg5: memref<1x128xf32, #tpu.memory_space<vmem>>, %arg6: memref<128x128xbf16, #tpu.memory_space<vmem>>, %arg7: memref<1x128xf32, #tpu.memory_space<vmem>>, %arg8: memref<256x128xf32, #tpu.memory_space<vmem>>) attributes {dimension_semantics = [#tpu.dimension_semantics<parallel>], iteration_bounds = array<i64: 2>, scalar_prefetch = 0 : i64, scratch_operands = 0 : i64, tpu.core_type = #tpu.core_type<tc>, window_params = [{transform_indices = @transform_0, window_bounds = array<i64: 256, 128>}, {pipeline_mode = #tpu.pipeline_mode<synchronous>, transform_indices = @transform_1, window_bounds = array<i64: 128, 128>}, {pipeline_mode = #tpu.pipeline_mode<synchronous>, transform_indices = @transform_2, window_bounds = array<i64: 1, 128>}, {pipeline_mode = #tpu.pipeline_mode<synchronous>, transform_indices = @transform_3, window_bounds = array<i64: 128, 128>}, {pipeline_mode = #tpu.pipeline_mode<synchronous>, transform_indices = @transform_4, window_bounds = array<i64: 1, 128>}, {pipeline_mode = #tpu.pipeline_mode<synchronous>, transform_indices = @transform_5, window_bounds = array<i64: 128, 128>}, {pipeline_mode = #tpu.pipeline_mode<synchronous>, transform_indices = @transform_6, window_bounds = array<i64: 1, 128>}, {transform_indices = @transform_7, window_bounds = array<i64: 256, 128>}]} {
    %c0 = arith.constant 0 : index
    %c0_0 = arith.constant 0 : index
    %0 = vector.load %arg1[%c0, %c0_0] : memref<256x128xbf16, #tpu.memory_space<vmem>>, vector<256x128xbf16>
    %c0_1 = arith.constant 0 : index
    %c0_2 = arith.constant 0 : index
    %1 = vector.load %arg2[%c0_1, %c0_2] : memref<128x128xbf16, #tpu.memory_space<vmem>>, vector<128x128xbf16>
    %cst = arith.constant dense<0.000000e+00> : vector<256x128xf32>
    %2 = tpu.matmul %0, %1, %cst {dimension_numbers = #tpu.dot_dimension_numbers<[1], [0], [0], [1], [0, 0, 1, 1], [], []>} : vector<256x128xbf16>, vector<128x128xbf16>, vector<256x128xf32> -> vector<256x128xf32>
    %c0_3 = arith.constant 0 : index
    %c0_4 = arith.constant 0 : index
    %3 = vector.load %arg3[%c0_3, %c0_4] : memref<1x128xf32, #tpu.memory_space<vmem>>, vector<1x128xf32>
    %4 = vector.broadcast %3 : vector<1x128xf32> to vector<256x128xf32>
    %5 = arith.addf %2, %4 : vector<256x128xf32>
    %6 = arith.truncf %5 : vector<256x128xf32> to vector<256x128xbf16>
    %cst_5 = arith.constant 5.000000e-01 : bf16
    %7 = vector.broadcast %cst_5 : bf16 to vector<256x128xbf16>
    %8 = arith.mulf %6, %7 : vector<256x128xbf16>
    %cst_6 = arith.constant 7.070310e-01 : bf16
    %9 = vector.broadcast %cst_6 : bf16 to vector<256x128xbf16>
    %10 = arith.mulf %6, %9 : vector<256x128xbf16>
    %11 = math.absf %10 : vector<256x128xbf16>
    %cst_7 = arith.constant 3.281250e-01 : bf16
    %12 = vector.broadcast %cst_7 : bf16 to vector<256x128xbf16>
    %13 = arith.mulf %12, %11 : vector<256x128xbf16>
    %cst_8 = arith.constant 1.000000e+00 : bf16
    %14 = vector.broadcast %cst_8 : bf16 to vector<256x128xbf16>
    %15 = arith.addf %14, %13 : vector<256x128xbf16>
    %cst_9 = arith.constant 1.000000e+00 : bf16
    %16 = vector.broadcast %cst_9 : bf16 to vector<256x128xbf16>
    %17 = arith.divf %16, %15 : vector<256x128xbf16>
    %cst_10 = arith.constant 1.062500e+00 : bf16
    %18 = vector.broadcast %cst_10 : bf16 to vector<256x128xbf16>
    %19 = arith.mulf %17, %18 : vector<256x128xbf16>
    %cst_11 = arith.constant -1.453130e+00 : bf16
    %20 = vector.broadcast %cst_11 : bf16 to vector<256x128xbf16>
    %21 = arith.addf %20, %19 : vector<256x128xbf16>
    %22 = arith.mulf %17, %21 : vector<256x128xbf16>
    %cst_12 = arith.constant 1.421880e+00 : bf16
    %23 = vector.broadcast %cst_12 : bf16 to vector<256x128xbf16>
    %24 = arith.addf %23, %22 : vector<256x128xbf16>
    %25 = arith.mulf %17, %24 : vector<256x128xbf16>
    %cst_13 = arith.constant -2.851560e-01 : bf16
    %26 = vector.broadcast %cst_13 : bf16 to vector<256x128xbf16>
    %27 = arith.addf %26, %25 : vector<256x128xbf16>
    %28 = arith.mulf %17, %27 : vector<256x128xbf16>
    %cst_14 = arith.constant 2.539060e-01 : bf16
    %29 = vector.broadcast %cst_14 : bf16 to vector<256x128xbf16>
    %30 = arith.addf %29, %28 : vector<256x128xbf16>
    %31 = arith.mulf %17, %30 : vector<256x128xbf16>
    %32 = arith.mulf %11, %11 : vector<256x128xbf16>
    %cst_15 = arith.constant 0.000000e+00 : bf16
    %33 = vector.broadcast %cst_15 : bf16 to vector<256x128xbf16>
    %34 = arith.subf %33, %32 : vector<256x128xbf16>
    %35 = math.exp %34 : vector<256x128xbf16>
    %36 = arith.mulf %31, %35 : vector<256x128xbf16>
    %cst_16 = arith.constant 1.000000e+00 : bf16
    %37 = vector.broadcast %cst_16 : bf16 to vector<256x128xbf16>
    %38 = arith.subf %37, %36 : vector<256x128xbf16>
    %cst_17 = arith.constant 0.000000e+00 : bf16
    %39 = vector.broadcast %cst_17 : bf16 to vector<256x128xbf16>
    %40 = arith.cmpf olt, %10, %39 : vector<256x128xbf16>
    %cst_18 = arith.constant 0.000000e+00 : bf16
    %41 = vector.broadcast %cst_18 : bf16 to vector<256x128xbf16>
    %42 = arith.subf %41, %38 : vector<256x128xbf16>
    %43 = arith.select %40, %42, %38 : vector<256x128xi1>, vector<256x128xbf16>
    %cst_19 = arith.constant 1.000000e+00 : bf16
    %44 = vector.broadcast %cst_19 : bf16 to vector<256x128xbf16>
    %45 = arith.addf %43, %44 : vector<256x128xbf16>
    %46 = arith.mulf %8, %45 : vector<256x128xbf16>
    %c0_20 = arith.constant 0 : index
    %c0_21 = arith.constant 0 : index
    %47 = vector.load %arg4[%c0_20, %c0_21] : memref<128x128xbf16, #tpu.memory_space<vmem>>, vector<128x128xbf16>
    %cst_22 = arith.constant dense<0.000000e+00> : vector<256x128xf32>
    %48 = tpu.matmul %46, %47, %cst_22 {dimension_numbers = #tpu.dot_dimension_numbers<[1], [0], [0], [1], [0, 0, 1, 1], [], []>} : vector<256x128xbf16>, vector<128x128xbf16>, vector<256x128xf32> -> vector<256x128xf32>
    %c0_23 = arith.constant 0 : index
    %c0_24 = arith.constant 0 : index
    %49 = vector.load %arg5[%c0_23, %c0_24] : memref<1x128xf32, #tpu.memory_space<vmem>>, vector<1x128xf32>
    %50 = vector.broadcast %49 : vector<1x128xf32> to vector<256x128xf32>
    %51 = arith.addf %48, %50 : vector<256x128xf32>
    %52 = arith.truncf %51 : vector<256x128xf32> to vector<256x128xbf16>
    %cst_25 = arith.constant 5.000000e-01 : bf16
    %53 = vector.broadcast %cst_25 : bf16 to vector<256x128xbf16>
    %54 = arith.mulf %52, %53 : vector<256x128xbf16>
    %cst_26 = arith.constant 7.070310e-01 : bf16
    %55 = vector.broadcast %cst_26 : bf16 to vector<256x128xbf16>
    %56 = arith.mulf %52, %55 : vector<256x128xbf16>
    %57 = math.absf %56 : vector<256x128xbf16>
    %cst_27 = arith.constant 3.281250e-01 : bf16
    %58 = vector.broadcast %cst_27 : bf16 to vector<256x128xbf16>
    %59 = arith.mulf %58, %57 : vector<256x128xbf16>
    %cst_28 = arith.constant 1.000000e+00 : bf16
    %60 = vector.broadcast %cst_28 : bf16 to vector<256x128xbf16>
    %61 = arith.addf %60, %59 : vector<256x128xbf16>
    %cst_29 = arith.constant 1.000000e+00 : bf16
    %62 = vector.broadcast %cst_29 : bf16 to vector<256x128xbf16>
    %63 = arith.divf %62, %61 : vector<256x128xbf16>
    %cst_30 = arith.constant 1.062500e+00 : bf16
    %64 = vector.broadcast %cst_30 : bf16 to vector<256x128xbf16>
    %65 = arith.mulf %63, %64 : vector<256x128xbf16>
    %cst_31 = arith.constant -1.453130e+00 : bf16
    %66 = vector.broadcast %cst_31 : bf16 to vector<256x128xbf16>
    %67 = arith.addf %66, %65 : vector<256x128xbf16>
    %68 = arith.mulf %63, %67 : vector<256x128xbf16>
    %cst_32 = arith.constant 1.421880e+00 : bf16
    %69 = vector.broadcast %cst_32 : bf16 to vector<256x128xbf16>
    %70 = arith.addf %69, %68 : vector<256x128xbf16>
    %71 = arith.mulf %63, %70 : vector<256x128xbf16>
    %cst_33 = arith.constant -2.851560e-01 : bf16
    %72 = vector.broadcast %cst_33 : bf16 to vector<256x128xbf16>
    %73 = arith.addf %72, %71 : vector<256x128xbf16>
    %74 = arith.mulf %63, %73 : vector<256x128xbf16>
    %cst_34 = arith.constant 2.539060e-01 : bf16
    %75 = vector.broadcast %cst_34 : bf16 to vector<256x128xbf16>
    %76 = arith.addf %75, %74 : vector<256x128xbf16>
    %77 = arith.mulf %63, %76 : vector<256x128xbf16>
    %78 = arith.mulf %57, %57 : vector<256x128xbf16>
    %cst_35 = arith.constant 0.000000e+00 : bf16
    %79 = vector.broadcast %cst_35 : bf16 to vector<256x128xbf16>
    %80 = arith.subf %79, %78 : vector<256x128xbf16>
    %81 = math.exp %80 : vector<256x128xbf16>
    %82 = arith.mulf %77, %81 : vector<256x128xbf16>
    %cst_36 = arith.constant 1.000000e+00 : bf16
    %83 = vector.broadcast %cst_36 : bf16 to vector<256x128xbf16>
    %84 = arith.subf %83, %82 : vector<256x128xbf16>
    %cst_37 = arith.constant 0.000000e+00 : bf16
    %85 = vector.broadcast %cst_37 : bf16 to vector<256x128xbf16>
    %86 = arith.cmpf olt, %56, %85 : vector<256x128xbf16>
    %cst_38 = arith.constant 0.000000e+00 : bf16
    %87 = vector.broadcast %cst_38 : bf16 to vector<256x128xbf16>
    %88 = arith.subf %87, %84 : vector<256x128xbf16>
    %89 = arith.select %86, %88, %84 : vector<256x128xi1>, vector<256x128xbf16>
    %cst_39 = arith.constant 1.000000e+00 : bf16
    %90 = vector.broadcast %cst_39 : bf16 to vector<256x128xbf16>
    %91 = arith.addf %89, %90 : vector<256x128xbf16>
    %92 = arith.mulf %54, %91 : vector<256x128xbf16>
    %c0_40 = arith.constant 0 : index
    %c0_41 = arith.constant 0 : index
    %93 = vector.load %arg6[%c0_40, %c0_41] : memref<128x128xbf16, #tpu.memory_space<vmem>>, vector<128x128xbf16>
    %cst_42 = arith.constant dense<0.000000e+00> : vector<256x128xf32>
    %94 = tpu.matmul %92, %93, %cst_42 {dimension_numbers = #tpu.dot_dimension_numbers<[1], [0], [0], [1], [0, 0, 1, 1], [], []>} : vector<256x128xbf16>, vector<128x128xbf16>, vector<256x128xf32> -> vector<256x128xf32>
    %c0_43 = arith.constant 0 : index
    %c0_44 = arith.constant 0 : index
    %95 = vector.load %arg7[%c0_43, %c0_44] : memref<1x128xf32, #tpu.memory_space<vmem>>, vector<1x128xf32>
    %96 = vector.broadcast %95 : vector<1x128xf32> to vector<256x128xf32>
    %97 = arith.addf %94, %96 : vector<256x128xf32>
    %c0_45 = arith.constant 0 : index
    %c0_46 = arith.constant 0 : index
    %98 = vector.load %arg8[%c0_45, %c0_46] : memref<256x128xf32, #tpu.memory_space<vmem>>, vector<256x128xf32>
    tpu.vector_store %arg8[%c0_45, %c0_46], %97 {strides = array<i32>} : memref<256x128xf32, #tpu.memory_space<vmem>>, vector<256x128xf32>,
    return
  }
  func.func @transform_0(%arg0: i32) -> (i32, i32) {
    %c0_i32 = arith.constant 0 : i32
    %c0_i32_0 = arith.constant 0 : i32
    return %arg0, %c0_i32 : i32, i32
  }
  func.func @transform_1(%arg0: i32) -> (i32, i32) {
    %c0_i32 = arith.constant 0 : i32
    %c0_i32_0 = arith.constant 0 : i32
    %c0_i32_1 = arith.constant 0 : i32
    return %c0_i32, %c0_i32_0 : i32, i32
  }
  func.func @transform_2(%arg0: i32) -> (i32, i32) {
    %c0_i32 = arith.constant 0 : i32
    %c0_i32_0 = arith.constant 0 : i32
    %c0_i32_1 = arith.constant 0 : i32
    return %c0_i32, %c0_i32_0 : i32, i32
  }
  func.func @transform_3(%arg0: i32) -> (i32, i32) {
    %c0_i32 = arith.constant 0 : i32
    %c0_i32_0 = arith.constant 0 : i32
    %c0_i32_1 = arith.constant 0 : i32
    return %c0_i32, %c0_i32_0 : i32, i32
  }
  func.func @transform_4(%arg0: i32) -> (i32, i32) {
    %c0_i32 = arith.constant 0 : i32
    %c0_i32_0 = arith.constant 0 : i32
    %c0_i32_1 = arith.constant 0 : i32
    return %c0_i32, %c0_i32_0 : i32, i32
  }
  func.func @transform_5(%arg0: i32) -> (i32, i32) {
    %c0_i32 = arith.constant 0 : i32
    %c0_i32_0 = arith.constant 0 : i32
    %c0_i32_1 = arith.constant 0 : i32
    return %c0_i32, %c0_i32_0 : i32, i32
  }
  func.func @transform_6(%arg0: i32) -> (i32, i32) {
    %c0_i32 = arith.constant 0 : i32
    %c0_i32_0 = arith.constant 0 : i32
    %c0_i32_1 = arith.constant 0 : i32
    return %c0_i32, %c0_i32_0 : i32, i32
  }
  func.func @transform_7(%arg0: i32) -> (i32, i32) {
    %c0_i32 = arith.constant 0 : i32
    %c0_i32_0 = arith.constant 0 : i32
    return %arg0, %c0_i32 : i32, i32
  }
}

module attributes {stable_mosaic.version = 11 : i64} {
  func.func @fused_conv_gelu_kernel(%arg0: i32, %arg1: memref<256x128xbf16, #tpu.memory_space<vmem>>, %arg2: memref<128x128xbf16, #tpu.memory_space<vmem>>, %arg3: memref<1x128xf32, #tpu.memory_space<vmem>>, %arg4: memref<128x128xbf16, #tpu.memory_space<vmem>>, %arg5: memref<1x128xf32, #tpu.memory_space<vmem>>, %arg6: memref<128x128xbf16, #tpu.memory_space<vmem>>, %arg7: memref<1x128xf32, #tpu.memory_space<vmem>>, %arg8: memref<256x128xf32, #tpu.memory_space<vmem>>) attributes {dimension_semantics = [#tpu.dimension_semantics<parallel>], iteration_bounds = array<i64: 2>, scalar_prefetch = 0 : i64, scratch_operands = 0 : i64, tpu.core_type = #tpu.core_type<tc>, window_params = [{transform_indices = @transform_0, window_bounds = array<i64: 256, 128>}, {pipeline_mode = #tpu.pipeline_mode<synchronous>, transform_indices = @transform_1, window_bounds = array<i64: 128, 128>}, {pipeline_mode = #tpu.pipeline_mode<synchronous>, transform_indices = @transform_2, window_bounds = array<i64: 1, 128>}, {pipeline_mode = #tpu.pipeline_mode<synchronous>, transform_indices = @transform_3, window_bounds = array<i64: 128, 128>}, {pipeline_mode = #tpu.pipeline_mode<synchronous>, transform_indices = @transform_4, window_bounds = array<i64: 1, 128>}, {pipeline_mode = #tpu.pipeline_mode<synchronous>, transform_indices = @transform_5, window_bounds = array<i64: 128, 128>}, {pipeline_mode = #tpu.pipeline_mode<synchronous>, transform_indices = @transform_6, window_bounds = array<i64: 1, 128>}, {transform_indices = @transform_7, window_bounds = array<i64: 256, 128>}]} {
    %c0 = arith.constant 0 : index
    %c0_0 = arith.constant 0 : index
    %0 = vector.load %arg1[%c0, %c0_0] : memref<256x128xbf16, #tpu.memory_space<vmem>>, vector<256x128xbf16>
    %c0_1 = arith.constant 0 : index
    %c0_2 = arith.constant 0 : index
    %1 = vector.load %arg2[%c0_1, %c0_2] : memref<128x128xbf16, #tpu.memory_space<vmem>>, vector<128x128xbf16>
    %cst = arith.constant dense<0.000000e+00> : vector<256x128xf32>
    %2 = tpu.matmul %0, %1, %cst {dimension_numbers = #tpu.dot_dimension_numbers<[1], [0], [0], [1], [0, 0, 1, 1], [], []>} : vector<256x128xbf16>, vector<128x128xbf16>, vector<256x128xf32> -> vector<256x128xf32>
    %c0_3 = arith.constant 0 : index
    %c0_4 = arith.constant 0 : index
    %3 = vector.load %arg3[%c0_3, %c0_4] : memref<1x128xf32, #tpu.memory_space<vmem>>, vector<1x128xf32>
    %4 = vector.broadcast %3 : vector<1x128xf32> to vector<256x128xf32>
    %5 = arith.addf %2, %4 : vector<256x128xf32>
    %cst_5 = arith.constant 5.000000e-01 : f32
    %6 = vector.broadcast %cst_5 : f32 to vector<256x128xf32>
    %7 = arith.mulf %5, %6 : vector<256x128xf32>
    %cst_6 = arith.constant 0.707106769 : f32
    %8 = vector.broadcast %cst_6 : f32 to vector<256x128xf32>
    %9 = arith.mulf %5, %8 : vector<256x128xf32>
    %10 = math.absf %9 : vector<256x128xf32>
    %cst_7 = arith.constant 0.327591091 : f32
    %11 = vector.broadcast %cst_7 : f32 to vector<256x128xf32>
    %12 = arith.mulf %11, %10 : vector<256x128xf32>
    %cst_8 = arith.constant 1.000000e+00 : f32
    %13 = vector.broadcast %cst_8 : f32 to vector<256x128xf32>
    %14 = arith.addf %13, %12 : vector<256x128xf32>
    %cst_9 = arith.constant 1.000000e+00 : f32
    %15 = vector.broadcast %cst_9 : f32 to vector<256x128xf32>
    %16 = arith.divf %15, %14 : vector<256x128xf32>
    %cst_10 = arith.constant 1.06140542 : f32
    %17 = vector.broadcast %cst_10 : f32 to vector<256x128xf32>
    %18 = arith.mulf %16, %17 : vector<256x128xf32>
    %cst_11 = arith.constant -1.45315206 : f32
    %19 = vector.broadcast %cst_11 : f32 to vector<256x128xf32>
    %20 = arith.addf %19, %18 : vector<256x128xf32>
    %21 = arith.mulf %16, %20 : vector<256x128xf32>
    %cst_12 = arith.constant 1.42141378 : f32
    %22 = vector.broadcast %cst_12 : f32 to vector<256x128xf32>
    %23 = arith.addf %22, %21 : vector<256x128xf32>
    %24 = arith.mulf %16, %23 : vector<256x128xf32>
    %cst_13 = arith.constant -0.284496725 : f32
    %25 = vector.broadcast %cst_13 : f32 to vector<256x128xf32>
    %26 = arith.addf %25, %24 : vector<256x128xf32>
    %27 = arith.mulf %16, %26 : vector<256x128xf32>
    %cst_14 = arith.constant 0.254829586 : f32
    %28 = vector.broadcast %cst_14 : f32 to vector<256x128xf32>
    %29 = arith.addf %28, %27 : vector<256x128xf32>
    %30 = arith.mulf %16, %29 : vector<256x128xf32>
    %31 = arith.mulf %10, %10 : vector<256x128xf32>
    %cst_15 = arith.constant 0.000000e+00 : f32
    %32 = vector.broadcast %cst_15 : f32 to vector<256x128xf32>
    %33 = arith.subf %32, %31 : vector<256x128xf32>
    %34 = math.exp %33 : vector<256x128xf32>
    %35 = arith.mulf %30, %34 : vector<256x128xf32>
    %cst_16 = arith.constant 1.000000e+00 : f32
    %36 = vector.broadcast %cst_16 : f32 to vector<256x128xf32>
    %37 = arith.subf %36, %35 : vector<256x128xf32>
    %cst_17 = arith.constant 0.000000e+00 : f32
    %38 = vector.broadcast %cst_17 : f32 to vector<256x128xf32>
    %39 = arith.cmpf olt, %9, %38 : vector<256x128xf32>
    %cst_18 = arith.constant 0.000000e+00 : f32
    %40 = vector.broadcast %cst_18 : f32 to vector<256x128xf32>
    %41 = arith.subf %40, %37 : vector<256x128xf32>
    %42 = arith.select %39, %41, %37 : vector<256x128xi1>, vector<256x128xf32>
    %cst_19 = arith.constant 1.000000e+00 : f32
    %43 = vector.broadcast %cst_19 : f32 to vector<256x128xf32>
    %44 = arith.addf %42, %43 : vector<256x128xf32>
    %45 = arith.mulf %7, %44 : vector<256x128xf32>
    %46 = arith.truncf %45 : vector<256x128xf32> to vector<256x128xbf16>
    %c0_20 = arith.constant 0 : index
    %c0_21 = arith.constant 0 : index
    %47 = vector.load %arg4[%c0_20, %c0_21] : memref<128x128xbf16, #tpu.memory_space<vmem>>, vector<128x128xbf16>
    %cst_22 = arith.constant dense<0.000000e+00> : vector<256x128xf32>
    %48 = tpu.matmul %46, %47, %cst_22 {dimension_numbers = #tpu.dot_dimension_numbers<[1], [0], [0], [1], [0, 0, 1, 1], [], []>} : vector<256x128xbf16>, vector<128x128xbf16>, vector<256x128xf32> -> vector<256x128xf32>
    %c0_23 = arith.constant 0 : index
    %c0_24 = arith.constant 0 : index
    %49 = vector.load %arg5[%c0_23, %c0_24] : memref<1x128xf32, #tpu.memory_space<vmem>>, vector<1x128xf32>
    %50 = vector.broadcast %49 : vector<1x128xf32> to vector<256x128xf32>
    %51 = arith.addf %48, %50 : vector<256x128xf32>
    %cst_25 = arith.constant 5.000000e-01 : f32
    %52 = vector.broadcast %cst_25 : f32 to vector<256x128xf32>
    %53 = arith.mulf %51, %52 : vector<256x128xf32>
    %cst_26 = arith.constant 0.707106769 : f32
    %54 = vector.broadcast %cst_26 : f32 to vector<256x128xf32>
    %55 = arith.mulf %51, %54 : vector<256x128xf32>
    %56 = math.absf %55 : vector<256x128xf32>
    %cst_27 = arith.constant 0.327591091 : f32
    %57 = vector.broadcast %cst_27 : f32 to vector<256x128xf32>
    %58 = arith.mulf %57, %56 : vector<256x128xf32>
    %cst_28 = arith.constant 1.000000e+00 : f32
    %59 = vector.broadcast %cst_28 : f32 to vector<256x128xf32>
    %60 = arith.addf %59, %58 : vector<256x128xf32>
    %cst_29 = arith.constant 1.000000e+00 : f32
    %61 = vector.broadcast %cst_29 : f32 to vector<256x128xf32>
    %62 = arith.divf %61, %60 : vector<256x128xf32>
    %cst_30 = arith.constant 1.06140542 : f32
    %63 = vector.broadcast %cst_30 : f32 to vector<256x128xf32>
    %64 = arith.mulf %62, %63 : vector<256x128xf32>
    %cst_31 = arith.constant -1.45315206 : f32
    %65 = vector.broadcast %cst_31 : f32 to vector<256x128xf32>
    %66 = arith.addf %65, %64 : vector<256x128xf32>
    %67 = arith.mulf %62, %66 : vector<256x128xf32>
    %cst_32 = arith.constant 1.42141378 : f32
    %68 = vector.broadcast %cst_32 : f32 to vector<256x128xf32>
    %69 = arith.addf %68, %67 : vector<256x128xf32>
    %70 = arith.mulf %62, %69 : vector<256x128xf32>
    %cst_33 = arith.constant -0.284496725 : f32
    %71 = vector.broadcast %cst_33 : f32 to vector<256x128xf32>
    %72 = arith.addf %71, %70 : vector<256x128xf32>
    %73 = arith.mulf %62, %72 : vector<256x128xf32>
    %cst_34 = arith.constant 0.254829586 : f32
    %74 = vector.broadcast %cst_34 : f32 to vector<256x128xf32>
    %75 = arith.addf %74, %73 : vector<256x128xf32>
    %76 = arith.mulf %62, %75 : vector<256x128xf32>
    %77 = arith.mulf %56, %56 : vector<256x128xf32>
    %cst_35 = arith.constant 0.000000e+00 : f32
    %78 = vector.broadcast %cst_35 : f32 to vector<256x128xf32>
    %79 = arith.subf %78, %77 : vector<256x128xf32>
    %80 = math.exp %79 : vector<256x128xf32>
    %81 = arith.mulf %76, %80 : vector<256x128xf32>
    %cst_36 = arith.constant 1.000000e+00 : f32
    %82 = vector.broadcast %cst_36 : f32 to vector<256x128xf32>
    %83 = arith.subf %82, %81 : vector<256x128xf32>
    %cst_37 = arith.constant 0.000000e+00 : f32
    %84 = vector.broadcast %cst_37 : f32 to vector<256x128xf32>
    %85 = arith.cmpf olt, %55, %84 : vector<256x128xf32>
    %cst_38 = arith.constant 0.000000e+00 : f32
    %86 = vector.broadcast %cst_38 : f32 to vector<256x128xf32>
    %87 = arith.subf %86, %83 : vector<256x128xf32>
    %88 = arith.select %85, %87, %83 : vector<256x128xi1>, vector<256x128xf32>
    %cst_39 = arith.constant 1.000000e+00 : f32
    %89 = vector.broadcast %cst_39 : f32 to vector<256x128xf32>
    %90 = arith.addf %88, %89 : vector<256x128xf32>
    %91 = arith.mulf %53, %90 : vector<256x128xf32>
    %92 = arith.truncf %91 : vector<256x128xf32> to vector<256x128xbf16>
    %c0_40 = arith.constant 0 : index
    %c0_41 = arith.constant 0 : index
    %93 = vector.load %arg6[%c0_40, %c0_41] : memref<128x128xbf16, #tpu.memory_space<vmem>>, vector<128x128xbf16>
    %cst_42 = arith.constant dense<0.000000e+00> : vector<256x128xf32>
    %94 = tpu.matmul %92, %93, %cst_42 {dimension_numbers = #tpu.dot_dimension_numbers<[1], [0], [0], [1], [0, 0, 1, 1], [], []>} : vector<256x128xbf16>, vector<128x128xbf16>, vector<256x128xf32> -> vector<256x128xf32>
    %c0_43 = arith.constant 0 : index
    %c0_44 = arith.constant 0 : index
    %95 = vector.load %arg7[%c0_43, %c0_44] : memref<1x128xf32, #tpu.memory_space<vmem>>, vector<1x128xf32>
    %96 = vector.broadcast %95 : vector<1x128xf32> to vector<256x128xf32>
    %97 = arith.addf %94, %96 : vector<256x128xf32>
    %c0_45 = arith.constant 0 : index
    %c0_46 = arith.constant 0 : index
    %98 = vector.load %arg8[%c0_45, %c0_46] : memref<256x128xf32, #tpu.memory_space<vmem>>, vector<256x128xf32>
    tpu.vector_store %arg8[%c0_45, %c0_46], %97 {strides = array<i32>} : memref<256x128xf32, #tpu.memory_space<vmem>>, vector<256x128xf32>,
    return
  }
  func.func @transform_0(%arg0: i32) -> (i32, i32) {
    %c0_i32 = arith.constant 0 : i32
    %c0_i32_0 = arith.constant 0 : i32
    return %arg0, %c0_i32 : i32, i32
  }
  func.func @transform_1(%arg0: i32) -> (i32, i32) {
    %c0_i32 = arith.constant 0 : i32
    %c0_i32_0 = arith.constant 0 : i32
    %c0_i32_1 = arith.constant 0 : i32
    return %c0_i32, %c0_i32_0 : i32, i32
  }
  func.func @transform_2(%arg0: i32) -> (i32, i32) {
    %c0_i32 = arith.constant 0 : i32
    %c0_i32_0 = arith.constant 0 : i32
    %c0_i32_1 = arith.constant 0 : i32
    return %c0_i32, %c0_i32_0 : i32, i32
  }
  func.func @transform_3(%arg0: i32) -> (i32, i32) {
    %c0_i32 = arith.constant 0 : i32
    %c0_i32_0 = arith.constant 0 : i32
    %c0_i32_1 = arith.constant 0 : i32
    return %c0_i32, %c0_i32_0 : i32, i32
  }
  func.func @transform_4(%arg0: i32) -> (i32, i32) {
    %c0_i32 = arith.constant 0 : i32
    %c0_i32_0 = arith.constant 0 : i32
    %c0_i32_1 = arith.constant 0 : i32
    return %c0_i32, %c0_i32_0 : i32, i32
  }
  func.func @transform_5(%arg0: i32) -> (i32, i32) {
    %c0_i32 = arith.constant 0 : i32
    %c0_i32_0 = arith.constant 0 : i32
    %c0_i32_1 = arith.constant 0 : i32
    return %c0_i32, %c0_i32_0 : i32, i32
  }
  func.func @transform_6(%arg0: i32) -> (i32, i32) {
    %c0_i32 = arith.constant 0 : i32
    %c0_i32_0 = arith.constant 0 : i32
    %c0_i32_1 = arith.constant 0 : i32
    return %c0_i32, %c0_i32_0 : i32, i32
  }
  func.func @transform_7(%arg0: i32) -> (i32, i32) {
    %c0_i32 = arith.constant 0 : i32
    %c0_i32_0 = arith.constant 0 : i32
    return %arg0, %c0_i32 : i32, i32
  }
}

</mosaic_0001>

<llo_original>
// kernel: model_forward.1
$region0: #{model_forward.1}
  #allocation0 [shape = 'u32[]', space=smem, size = 0x4, offset = 0x4, fixed_abs, tag = 'smem constant byte address 0x4 - core index']
  #allocation1 [shape = 'u32[144,128]{1,0:T(1,128)}', space=vmem, size = 0x12000, scoped, tag = 'internal scratch']
  %s0 = inlined_call_operand.vmem [shape: bf16[512,128], index: 0, kind: input, shape index: {}]
  %s1 = inlined_call_operand.vmem [shape: bf16[128,128], index: 1, kind: input, shape index: {}]
  %s2 = inlined_call_operand.vmem [shape: f32[1,128], index: 2, kind: input, shape index: {}]
  %s3 = inlined_call_operand.vmem [shape: bf16[128,128], index: 3, kind: input, shape index: {}]
  %s4 = inlined_call_operand.vmem [shape: f32[1,128], index: 4, kind: input, shape index: {}]
  %s5 = inlined_call_operand.vmem [shape: bf16[128,128], index: 5, kind: input, shape index: {}]
  %s6 = inlined_call_operand.vmem [shape: f32[1,128], index: 6, kind: input, shape index: {}]
  %s7 = inlined_call_operand.vmem [shape: f32[512,128], index: 7, kind: output, shape index: {}]
  %s8 = sld [smem:[#allocation0]]
  $region61: #{model_forward.1} parent=0
    _
  %s10 = ssub.s32 1, %s8
  %s11 = scalar_select 0, %s10, %s8
  loop: start=0, step=1, limit=4
  $region2: #{model_forward.1} parent=0 // loop_pre_header
    _
  $region3: #{model_forward.1} parent=0 // loop_header
    %s13 = sphi 0, %s17
    %p14 = scmp.ge.s32.totalorder %s13, 4
    %s23 = sphi 0, %s25
    %s26 = sphi 0, %s23
    %s27 = sphi 0, %s26
    %s43 = sphi 0, %s27
    %s47 = sphi 0, %s47
    %s49 = sphi 0, %s47
    %s50 = sphi 0, %s49
    %s64 = sphi 0, %s50
    %s68 = sphi 0, %s68
    %s70 = sphi 0, %s68
    %s71 = sphi 0, %s70
    %s85 = sphi 0, %s71
    %s89 = sphi 0, %s89
    %s91 = sphi 0, %s89
    %s92 = sphi 0, %s91
    %s106 = sphi 0, %s92
    %s110 = sphi 0, %s110
    %s112 = sphi 0, %s110
    %s113 = sphi 0, %s112
    %s127 = sphi 0, %s113
    %s131 = sphi 0, %s131
    %s133 = sphi 0, %s131
    %s134 = sphi 0, %s133
    %s148 = sphi 0, %s134
    %s152 = sphi 0, %s152
    %s154 = sphi 0, %s152
    %s155 = sphi 0, %s154
    %s169 = sphi 0, %s155
    %s175 = sphi 0, %s177
    %s178 = sphi 0, %s175
    %s179 = sphi 0, %s178
    %s195 = sphi 0, %s179
  $region4: #{model_forward.1} parent=0 // loop_header_branch
    %16 = sbr.rel (%p14) target = $region8
  $region5: #{model_forward.1} parent=0 // loop_body
    %s18 = ssub.s32 %s13, 1
    %s19 = ssub.s32 %s13, 2
    %s20 = sadd.s32 %s13, 1
    %s21 = ssub.s32 %s13, %s20
    %p22 = scmp.eq.s32.totalorder %s21, 0
    %s24 = sadd.s32 %s23, 1
    %s25 = scalar_select %p22, %s23, %s24
    %p28 = pneg %p22
    %p29 = scmp.eq.s32.totalorder %s13, 1
    %p30 = por %p28, %p29
    %p31 = scmp.ne.s32.totalorder %s23, %s26
    %p32 = scmp.eq.s32.totalorder %s13, 0
    %p33 = por %p31, %p32
    %p34 = scmp.ne.s32.totalorder %s23, %s26
    %p35 = scmp.eq.s32.totalorder %s18, 1
    %p36 = por %p34, %p35
    %p37 = scmp.ne.s32.totalorder %s26, %s27
    %p38 = scmp.eq.s32.totalorder %s18, 0
    %p39 = por %p37, %p38
    %p40 = scmp.ne.s32.totalorder %s26, %s27
    %p41 = scmp.eq.s32.totalorder %s19, 1
    %p42 = por %p40, %p41
    %p44 = scmp.ne.s32.totalorder %s27, %s43
    %p45 = scmp.eq.s32.totalorder %s19, 0
    %p46 = por %p44, %p45
    %s48 = sadd.s32 %s47, 1
    %p51 = scmp.eq.s32.totalorder %s13, 1
    %p52 = scmp.ne.s32.totalorder %s47, %s49
    %p53 = scmp.eq.s32.totalorder %s13, 0
    %p54 = por %p52, %p53
    %p55 = scmp.ne.s32.totalorder %s47, %s49
    %p56 = scmp.eq.s32.totalorder %s18, 1
    %p57 = por %p55, %p56
    %p58 = scmp.ne.s32.totalorder %s49, %s50
    %p59 = scmp.eq.s32.totalorder %s18, 0
    %p60 = por %p58, %p59
    %p61 = scmp.ne.s32.totalorder %s49, %s50
    %p62 = scmp.eq.s32.totalorder %s19, 1
    %p63 = por %p61, %p62
    %p65 = scmp.ne.s32.totalorder %s50, %s64
    %p66 = scmp.eq.s32.totalorder %s19, 0
    %p67 = por %p65, %p66
    %s69 = sadd.s32 %s68, 1
    %p72 = scmp.eq.s32.totalorder %s13, 1
    %p73 = scmp.ne.s32.totalorder %s68, %s70
    %p74 = scmp.eq.s32.totalorder %s13, 0
    %p75 = por %p73, %p74
    %p76 = scmp.ne.s32.totalorder %s68, %s70
    %p77 = scmp.eq.s32.totalorder %s18, 1
    %p78 = por %p76, %p77
    %p79 = scmp.ne.s32.totalorder %s70, %s71
    %p80 = scmp.eq.s32.totalorder %s18, 0
    %p81 = por %p79, %p80
    %p82 = scmp.ne.s32.totalorder %s70, %s71
    %p83 = scmp.eq.s32.totalorder %s19, 1
    %p84 = por %p82, %p83
    %p86 = scmp.ne.s32.totalorder %s71, %s85
    %p87 = scmp.eq.s32.totalorder %s19, 0
    %p88 = por %p86, %p87
    %s90 = sadd.s32 %s89, 1
    %p93 = scmp.eq.s32.totalorder %s13, 1
    %p94 = scmp.ne.s32.totalorder %s89, %s91
    %p95 = scmp.eq.s32.totalorder %s13, 0
    %p96 = por %p94, %p95
    %p97 = scmp.ne.s32.totalorder %s89, %s91
    %p98 = scmp.eq.s32.totalorder %s18, 1
    %p99 = por %p97, %p98
    %p100 = scmp.ne.s32.totalorder %s91, %s92
    %p101 = scmp.eq.s32.totalorder %s18, 0
    %p102 = por %p100, %p101
    %p103 = scmp.ne.s32.totalorder %s91, %s92
    %p104 = scmp.eq.s32.totalorder %s19, 1
    %p105 = por %p103, %p104
    %p107 = scmp.ne.s32.totalorder %s92, %s106
    %p108 = scmp.eq.s32.totalorder %s19, 0
    %p109 = por %p107, %p108
    %s111 = sadd.s32 %s110, 1
    %p114 = scmp.eq.s32.totalorder %s13, 1
    %p115 = scmp.ne.s32.totalorder %s110, %s112
    %p116 = scmp.eq.s32.totalorder %s13, 0
    %p117 = por %p115, %p116
    %p118 = scmp.ne.s32.totalorder %s110, %s112
    %p119 = scmp.eq.s32.totalorder %s18, 1
    %p120 = por %p118, %p119
    %p121 = scmp.ne.s32.totalorder %s112, %s113
    %p122 = scmp.eq.s32.totalorder %s18, 0
    %p123 = por %p121, %p122
    %p124 = scmp.ne.s32.totalorder %s112, %s113
    %p125 = scmp.eq.s32.totalorder %s19, 1
    %p126 = por %p124, %p125
    %p128 = scmp.ne.s32.totalorder %s113, %s127
    %p129 = scmp.eq.s32.totalorder %s19, 0
    %p130 = por %p128, %p129
    %s132 = sadd.s32 %s131, 1
    %p135 = scmp.eq.s32.totalorder %s13, 1
    %p136 = scmp.ne.s32.totalorder %s131, %s133
    %p137 = scmp.eq.s32.totalorder %s13, 0
    %p138 = por %p136, %p137
    %p139 = scmp.ne.s32.totalorder %s131, %s133
    %p140 = scmp.eq.s32.totalorder %s18, 1
    %p141 = por %p139, %p140
    %p142 = scmp.ne.s32.totalorder %s133, %s134
    %p143 = scmp.eq.s32.totalorder %s18, 0
    %p144 = por %p142, %p143
    %p145 = scmp.ne.s32.totalorder %s133, %s134
    %p146 = scmp.eq.s32.totalorder %s19, 1
    %p147 = por %p145, %p146
    %p149 = scmp.ne.s32.totalorder %s134, %s148
    %p150 = scmp.eq.s32.totalorder %s19, 0
    %p151 = por %p149, %p150
    %s153 = sadd.s32 %s152, 1
    %p156 = scmp.eq.s32.totalorder %s13, 1
    %p157 = scmp.ne.s32.totalorder %s152, %s154
    %p158 = scmp.eq.s32.totalorder %s13, 0
    %p159 = por %p157, %p158
    %p160 = scmp.ne.s32.totalorder %s152, %s154
    %p161 = scmp.eq.s32.totalorder %s18, 1
    %p162 = por %p160, %p161
    %p163 = scmp.ne.s32.totalorder %s154, %s155
    %p164 = scmp.eq.s32.totalorder %s18, 0
    %p165 = por %p163, %p164
    %p166 = scmp.ne.s32.totalorder %s154, %s155
    %p167 = scmp.eq.s32.totalorder %s19, 1
    %p168 = por %p166, %p167
    %p170 = scmp.ne.s32.totalorder %s155, %s169
    %p171 = scmp.eq.s32.totalorder %s19, 0
    %p172 = por %p170, %p171
    %s173 = ssub.s32 %s13, %s20
    %p174 = scmp.eq.s32.totalorder %s173, 0
    %s176 = sadd.s32 %s175, 1
    %s177 = scalar_select %p174, %s175, %s176
    %p180 = pneg %p174
    %p181 = scmp.eq.s32.totalorder %s13, 1
    %p182 = por %p180, %p181
    %p183 = scmp.ne.s32.totalorder %s175, %s178
    %p184 = scmp.eq.s32.totalorder %s13, 0
    %p185 = por %p183, %p184
    %p186 = scmp.ne.s32.totalorder %s175, %s178
    %p187 = scmp.eq.s32.totalorder %s18, 1
    %p188 = por %p186, %p187
    %p189 = scmp.ne.s32.totalorder %s178, %s179
    %p190 = scmp.eq.s32.totalorder %s18, 0
    %p191 = por %p189, %p190
    %p192 = scmp.ne.s32.totalorder %s178, %s179
    %p193 = scmp.eq.s32.totalorder %s19, 1
    %p194 = por %p192, %p193
    %p196 = scmp.ne.s32.totalorder %s179, %s195
    %p197 = scmp.eq.s32.totalorder %s19, 0
    %p198 = por %p196, %p197
    %p199 = scmp.le.s32.totalorder 1, %s13
    %p200 = scmp.lt.s32.totalorder %s13, 3
    %p201 = pnand %p199, %p200
    %p202 = pneg %p201
    // Predicated region
    $region9: #{model_forward.1} parent=5 // pred_check
      _
    $region10: #{model_forward.1} parent=5 // pred_check_branch
      %204 = sbr.rel (%p201) target = $region12
    $region11: #{model_forward.1} parent=5 // pred_region
      %s205 = ssub.s32 %s13, 1
      // Predicated region
      $region13: #{model_forward.1} parent=11 // pred_check
        %p206 = pneg %p60
      $region14: #{model_forward.1} parent=11 // pred_check_branch
        %208 = sbr.rel (%p206) target = $region16
      $region15: #{model_forward.1} parent=11 // pred_region
        _
      $region16: #{model_forward.1} parent=11 // pred_fallthru
        _
      // Predicated region
      $region17: #{model_forward.1} parent=11 // pred_check
        %p209 = pneg %p81
      $region18: #{model_forward.1} parent=11 // pred_check_branch
        %211 = sbr.rel (%p209) target = $region20
      $region19: #{model_forward.1} parent=11 // pred_region
        _
      $region20: #{model_forward.1} parent=11 // pred_fallthru
        _
      // Predicated region
      $region21: #{model_forward.1} parent=11 // pred_check
        %p212 = pneg %p102
      $region22: #{model_forward.1} parent=11 // pred_check_branch
        %214 = sbr.rel (%p212) target = $region24
      $region23: #{model_forward.1} parent=11 // pred_region
        _
      $region24: #{model_forward.1} parent=11 // pred_fallthru
        _
      // Predicated region
      $region25: #{model_forward.1} parent=11 // pred_check
        %p215 = pneg %p123
      $region26: #{model_forward.1} parent=11 // pred_check_branch
        %217 = sbr.rel (%p215) target = $region28
      $region27: #{model_forward.1} parent=11 // pred_region
        _
      $region28: #{model_forward.1} parent=11 // pred_fallthru
        _
      // Predicated region
      $region29: #{model_forward.1} parent=11 // pred_check
        %p218 = pneg %p144
      $region30: #{model_forward.1} parent=11 // pred_check_branch
        %220 = sbr.rel (%p218) target = $region32
      $region31: #{model_forward.1} parent=11 // pred_region
        _
      $region32: #{model_forward.1} parent=11 // pred_fallthru
        _
      // Predicated region
      $region33: #{model_forward.1} parent=11 // pred_check
        %p221 = pneg %p165
      $region34: #{model_forward.1} parent=11 // pred_check_branch
        %223 = sbr.rel (%p221) target = $region36
      $region35: #{model_forward.1} parent=11 // pred_region
        _
      $region36: #{model_forward.1} parent=11 // pred_fallthru
        _
    $region12: #{model_forward.1} parent=5 // pred_fallthru
      _
    %p224 = scmp.lt.s32.totalorder %s13, 2
    // Predicated region
    $region37: #{model_forward.1} parent=5 // pred_check
      %p225 = pneg %p224
    $region38: #{model_forward.1} parent=5 // pred_check_branch
      %227 = sbr.rel (%p225) target = $region40
    $region39: #{model_forward.1} parent=5 // pred_region
      // Predicated region
      $region41: #{model_forward.1} parent=39 // pred_check
        %p228 = pneg %p33
      $region42: #{model_forward.1} parent=39 // pred_check_branch
        %230 = sbr.rel (%p228) target = $region44
      $region43: #{model_forward.1} parent=39 // pred_region
        %s231 = smul.u32 32, %s13
        %p232 = scmp.lt.s32.totalorder %s231, 63
        %s233 = scalar_select %p232, %s231, 63
        %s234 = smul.addr %s233, 4
        %s235 = scalar_lea.vmem %s0, %s234
        %s236 = smul.u32 32, %s13
      $region44: #{model_forward.1} parent=39 // pred_fallthru
        _
    $region40: #{model_forward.1} parent=5 // pred_fallthru
      _
    %p237 = scmp.le.s32.totalorder 1, %s13
    %p238 = scmp.lt.s32.totalorder %s13, 3
    %p239 = pnand %p237, %p238
    %p240 = pneg %p239
    // Predicated region
    $region45: #{model_forward.1} parent=5 // pred_check
      _
    $region46: #{model_forward.1} parent=5 // pred_check_branch
      %242 = sbr.rel (%p239) target = $region48
    $region47: #{model_forward.1} parent=5 // pred_region
      %s243 = ssub.s32 %s13, 1
      %s244 = smul.u32 32, %s18
      %p245 = scmp.lt.s32.totalorder %s244, 63
      %s246 = scalar_select %p245, %s244, 63
      %s247 = smul.addr %s246, 4
      %s248 = scalar_lea.vmem %s0, %s247
      %p249 = pneg %p39
      %p250 = pneg %p36
      %p251 = pneg %p60
      %p252 = pneg %p57
      %p253 = pneg %p81
      %p254 = pneg %p78
      %p255 = pneg %p102
      %p256 = pneg %p99
      %p257 = pneg %p123
      %p258 = pneg %p120
      %p259 = pneg %p144
      %p260 = pneg %p141
      %p261 = pneg %p165
      %p262 = pneg %p162
      %p263 = pneg %p191
      %p264 = pneg %p188
      %s265 = smul.u32 32, %s18
      %p266 = scmp.lt.s32.totalorder %s265, 63
      %s267 = scalar_select %p266, %s265, 63
      %s268 = smul.addr %s267, 8
      %s269 = scalar_lea.vmem %s7, %s268
      %s270 = smul.u32 32, %s18
      %p271 = scmp.lt.s32.totalorder %s270, 63
      %s272 = scalar_select %p271, %s270, 63
      %s273 = smul.addr %s272, 4
      %s274 = scalar_lea.vmem %s0, %s273
      %s275 = smul.u32 32, %s18
      %s276 = smul.u32 32, %s18
      %p277 = scmp.lt.s32.totalorder %s276, 63
      %s278 = scalar_select %p277, %s276, 63
      %s279 = smul.addr %s278, 8
      %s280 = scalar_lea.vmem %s7, %s279
      %s281 = smul.u32 32, %s18
      %v292 = vld [vmem:[%s274] sm:$0xf]
      %v293 = vld [vmem:[%s274 + $0x4] sm:$0xf]
      %v294 = vld [vmem:[%s274 + $0x8] sm:$0xf]
      %v295 = vld [vmem:[%s274 + $0xc] sm:$0xf]
      %v296 = vld [vmem:[%s274 + $0x10] sm:$0xf]
      %v297 = vld [vmem:[%s274 + $0x14] sm:$0xf]
      %v298 = vld [vmem:[%s274 + $0x18] sm:$0xf]
      %v299 = vld [vmem:[%s274 + $0x1c] sm:$0xf]
      %v300 = vld [vmem:[%s274 + $0x20] sm:$0xf]
      %v301 = vld [vmem:[%s274 + $0x24] sm:$0xf]
      %v302 = vld [vmem:[%s274 + $0x28] sm:$0xf]
      %v303 = vld [vmem:[%s274 + $0x2c] sm:$0xf]
      %v304 = vld [vmem:[%s274 + $0x30] sm:$0xf]
      %v305 = vld [vmem:[%s274 + $0x34] sm:$0xf]
      %v306 = vld [vmem:[%s274 + $0x38] sm:$0xf]
      %v307 = vld [vmem:[%s274 + $0x3c] sm:$0xf]
      %v308 = vld [vmem:[%s274 + $0x40] sm:$0xf]
      %v309 = vld [vmem:[%s274 + $0x44] sm:$0xf]
      %v310 = vld [vmem:[%s274 + $0x48] sm:$0xf]
      %v311 = vld [vmem:[%s274 + $0x4c] sm:$0xf]
      %v312 = vld [vmem:[%s274 + $0x50] sm:$0xf]
      %v313 = vld [vmem:[%s274 + $0x54] sm:$0xf]
      %v314 = vld [vmem:[%s274 + $0x58] sm:$0xf]
      %v315 = vld [vmem:[%s274 + $0x5c] sm:$0xf]
      %v316 = vld [vmem:[%s274 + $0x60] sm:$0xf]
      %v317 = vld [vmem:[%s274 + $0x64] sm:$0xf]
      %v318 = vld [vmem:[%s274 + $0x68] sm:$0xf]
      %v319 = vld [vmem:[%s274 + $0x6c] sm:$0xf]
      %v320 = vld [vmem:[%s274 + $0x70] sm:$0xf]
      %v321 = vld [vmem:[%s274 + $0x74] sm:$0xf]
      %v322 = vld [vmem:[%s274 + $0x78] sm:$0xf]
      %v323 = vld [vmem:[%s274 + $0x7c] sm:$0xf]
      %v324 = vld [vmem:[%s1] sm:$0xf]
      %v325 = vld [vmem:[%s1 + $0x4] sm:$0xf]
      %v326 = vld [vmem:[%s1 + $0x8] sm:$0xf]
      %v327 = vld [vmem:[%s1 + $0xc] sm:$0xf]
      %v328 = vld [vmem:[%s1 + $0x10] sm:$0xf]
      %v329 = vld [vmem:[%s1 + $0x14] sm:$0xf]
      %v330 = vld [vmem:[%s1 + $0x18] sm:$0xf]
      %v331 = vld [vmem:[%s1 + $0x1c] sm:$0xf]
      %v332 = vld [vmem:[%s1 + $0x20] sm:$0xf]
      %v333 = vld [vmem:[%s1 + $0x24] sm:$0xf]
      %v334 = vld [vmem:[%s1 + $0x28] sm:$0xf]
      %v335 = vld [vmem:[%s1 + $0x2c] sm:$0xf]
      %v336 = vld [vmem:[%s1 + $0x30] sm:$0xf]
      %v337 = vld [vmem:[%s1 + $0x34] sm:$0xf]
      %v338 = vld [vmem:[%s1 + $0x38] sm:$0xf]
      %v339 = vld [vmem:[%s1 + $0x3c] sm:$0xf]
      %v340 = vld [vmem:[%s2] sm:$0x1]
      %v342 = vlaneseq
      %v343 = vshrl.u32 %v342, 7
      %v344 = vsub.s32 0, %v343
      %v345 = vrot.slane %v340, %v344
      %v379 = vunpack.c.l.b16 %v292
      %v380 = vunpack.c.l.b16 %v293
      %v381 = vunpack.c.l.b16 %v294
      %v382 = vunpack.c.l.b16 %v295
      %v383 = vunpack.c.l.b16 %v296
      %v384 = vunpack.c.l.b16 %v297
      %v385 = vunpack.c.l.b16 %v298
      %v386 = vunpack.c.l.b16 %v299
      %v387 = vunpack.c.l.b16 %v300
      %v388 = vunpack.c.l.b16 %v301
      %v389 = vunpack.c.l.b16 %v302
      %v390 = vunpack.c.l.b16 %v303
      %v391 = vunpack.c.l.b16 %v304
      %v392 = vunpack.c.l.b16 %v305
      %v393 = vunpack.c.l.b16 %v306
      %v394 = vunpack.c.l.b16 %v307
      %v395 = vunpack.c.l.b16 %v308
      %v396 = vunpack.c.l.b16 %v309
      %v397 = vunpack.c.l.b16 %v310
      %v398 = vunpack.c.l.b16 %v311
      %v399 = vunpack.c.l.b16 %v312
      %v400 = vunpack.c.l.b16 %v313
      %v401 = vunpack.c.l.b16 %v314
      %v402 = vunpack.c.l.b16 %v315
      %v403 = vunpack.c.l.b16 %v316
      %v404 = vunpack.c.l.b16 %v317
      %v405 = vunpack.c.l.b16 %v318
      %v406 = vunpack.c.l.b16 %v319
      %v407 = vunpack.c.l.b16 %v320
      %v408 = vunpack.c.l.b16 %v321
      %v409 = vunpack.c.l.b16 %v322
      %v410 = vunpack.c.l.b16 %v323
      %v411 = vpack.c.b16 %v380, %v379
      %v412 = vpack.c.b16 %v382, %v381
      %v413 = vpack.c.b16 %v384, %v383
      %v414 = vpack.c.b16 %v386, %v385
      %v415 = vpack.c.b16 %v388, %v387
      %v416 = vpack.c.b16 %v390, %v389
      %v417 = vpack.c.b16 %v392, %v391
      %v418 = vpack.c.b16 %v394, %v393
      %v419 = vpack.c.b16 %v396, %v395
      %v420 = vpack.c.b16 %v398, %v397
      %v421 = vpack.c.b16 %v400, %v399
      %v422 = vpack.c.b16 %v402, %v401
      %v423 = vpack.c.b16 %v404, %v403
      %v424 = vpack.c.b16 %v406, %v405
      %v425 = vpack.c.b16 %v408, %v407
      %v426 = vpack.c.b16 %v410, %v409
      %v459 = vunpack.c.l.b16 %v324
      %v460 = vunpack.c.l.b16 %v325
      %v461 = vunpack.c.l.b16 %v326
      %v462 = vunpack.c.l.b16 %v327
      %v463 = vunpack.c.l.b16 %v328
      %v464 = vunpack.c.l.b16 %v329
      %v465 = vunpack.c.l.b16 %v330
      %v466 = vunpack.c.l.b16 %v331
      %v467 = vunpack.c.l.b16 %v332
      %v468 = vunpack.c.l.b16 %v333
      %v469 = vunpack.c.l.b16 %v334
      %v470 = vunpack.c.l.b16 %v335
      %v471 = vunpack.c.l.b16 %v336
      %v472 = vunpack.c.l.b16 %v337
      %v473 = vunpack.c.l.b16 %v338
      %v474 = vunpack.c.l.b16 %v339
      %v475 = vpack.c.b16 %v460, %v459
      %v476 = vpack.c.b16 %v462, %v461
      %v477 = vpack.c.b16 %v464, %v463
      %v478 = vpack.c.b16 %v466, %v465
      %v479 = vpack.c.b16 %v468, %v467
      %v480 = vpack.c.b16 %v470, %v469
      %v481 = vpack.c.b16 %v472, %v471
      %v482 = vpack.c.b16 %v474, %v473
      %491 = vmatprep.subr.bf16.mxu0 0
      %492 = vmatpush1.bf16.msra.mxu0 %v475
      %493 = vmatprep.subr.bf16.mxu0 0
      %494 = vmatpush1.bf16.msra.mxu0 %v476
      %495 = vmatprep.subr.bf16.mxu0 0
      %496 = vmatpush1.bf16.msra.mxu0 %v477
      %497 = vmatprep.subr.bf16.mxu0 0
      %498 = vmatpush1.bf16.msra.mxu0 %v478
      %499 = vmatprep.subr.bf16.mxu0 0
      %500 = vmatpush1.bf16.msra.mxu0 %v479
      %501 = vmatprep.subr.bf16.mxu0 0
      %502 = vmatpush1.bf16.msra.mxu0 %v480
      %503 = vmatprep.subr.bf16.mxu0 0
      %504 = vmatpush1.bf16.msra.mxu0 %v481
      %505 = vmatprep.subr.bf16.mxu0 0
      %506 = vmatpush1.bf16.msra.mxu0 %v482
      %507 = vmatprep.subr.bf16.mxu0 0
      %508 = vmatpush1.bf16.msra.mxu0 0
      %509 = vmatprep.subr.bf16.mxu0 0
      %510 = vmatpush1.bf16.msra.mxu0 0
      %511 = vmatprep.subr.bf16.mxu0 0
      %512 = vmatpush1.bf16.msra.mxu0 0
      %513 = vmatprep.subr.bf16.mxu0 0
      %514 = vmatpush1.bf16.msra.mxu0 0
      %515 = vmatprep.subr.bf16.mxu0 0
      %516 = vmatpush1.bf16.msra.mxu0 0
      %517 = vmatprep.subr.bf16.mxu0 0
      %518 = vmatpush1.bf16.msra.mxu0 0
      %519 = vmatprep.subr.bf16.mxu0 0
      %520 = vmatpush1.bf16.msra.mxu0 0
      %521 = vmatprep.subr.bf16.mxu0 0
      %522 = vmatpush1.bf16.msra.mxu0 0
      %523 = vmatprep.mubr.bf16.mxu0 0
      %524 = vmatmul.mubr.bf16.gmra.mrb[0].mxu0 %v411
      %v525 = vpop.f32.mrb[0].mxu0
      %v526 = vadd.f32 %v345, %v525
      %v527 = vpop.f32.mrb[0].mxu0
      %v528 = vpop.f32.mrb[0].mxu0
      %v529 = vadd.f32 %v345, %v528
      %v530 = vpop.f32.mrb[0].mxu0
      %531 = vmatprep.mubr.bf16.mxu0 0
      %532 = vmatmul.mubr.bf16.gmra.mrb[0].mxu0 %v412
      %v533 = vpop.f32.mrb[0].mxu0
      %v534 = vadd.f32 %v345, %v533
      %v535 = vpop.f32.mrb[0].mxu0
      %v536 = vpop.f32.mrb[0].mxu0
      %v537 = vadd.f32 %v345, %v536
      %v538 = vpop.f32.mrb[0].mxu0
      %539 = vmatprep.mubr.bf16.mxu0 0
      %540 = vmatmul.mubr.bf16.gmra.mrb[0].mxu0 %v413
      %v541 = vpop.f32.mrb[0].mxu0
      %v542 = vadd.f32 %v345, %v541
      %v543 = vpop.f32.mrb[0].mxu0
      %v544 = vpop.f32.mrb[0].mxu0
      %v545 = vadd.f32 %v345, %v544
      %v546 = vpop.f32.mrb[0].mxu0
      %547 = vmatprep.mubr.bf16.mxu0 0
      %548 = vmatmul.mubr.bf16.gmra.mrb[0].mxu0 %v414
      %v549 = vpop.f32.mrb[0].mxu0
      %v550 = vadd.f32 %v345, %v549
      %v551 = vpop.f32.mrb[0].mxu0
      %v552 = vpop.f32.mrb[0].mxu0
      %v553 = vadd.f32 %v345, %v552
      %v554 = vpop.f32.mrb[0].mxu0
      %555 = vmatprep.mubr.bf16.mxu0 0
      %556 = vmatmul.mubr.bf16.gmra.mrb[0].mxu0 %v415
      %v557 = vpop.f32.mrb[0].mxu0
      %v558 = vadd.f32 %v345, %v557
      %v559 = vpop.f32.mrb[0].mxu0
      %v560 = vpop.f32.mrb[0].mxu0
      %v561 = vadd.f32 %v345, %v560
      %v562 = vpop.f32.mrb[0].mxu0
      %563 = vmatprep.mubr.bf16.mxu0 0
      %564 = vmatmul.mubr.bf16.gmra.mrb[0].mxu0 %v416
      %v565 = vpop.f32.mrb[0].mxu0
      %v566 = vadd.f32 %v345, %v565
      %v567 = vpop.f32.mrb[0].mxu0
      %v568 = vpop.f32.mrb[0].mxu0
      %v569 = vadd.f32 %v345, %v568
      %v570 = vpop.f32.mrb[0].mxu0
      %571 = vmatprep.mubr.bf16.mxu0 0
      %572 = vmatmul.mubr.bf16.gmra.mrb[0].mxu0 %v417
      %v573 = vpop.f32.mrb[0].mxu0
      %v574 = vadd.f32 %v345, %v573
      %v575 = vpop.f32.mrb[0].mxu0
      %v576 = vpop.f32.mrb[0].mxu0
      %v577 = vadd.f32 %v345, %v576
      %v578 = vpop.f32.mrb[0].mxu0
      %579 = vmatprep.mubr.bf16.mxu0 0
      %580 = vmatmul.mubr.bf16.gmra.mrb[0].mxu0 %v418
      %v581 = vpop.f32.mrb[0].mxu0
      %v582 = vadd.f32 %v345, %v581
      %v583 = vpop.f32.mrb[0].mxu0
      %v584 = vpop.f32.mrb[0].mxu0
      %v585 = vadd.f32 %v345, %v584
      %v586 = vpop.f32.mrb[0].mxu0
      %587 = vmatprep.mubr.bf16.mxu0 0
      %588 = vmatmul.mubr.bf16.gmra.mrb[0].mxu0 %v419
      %v589 = vpop.f32.mrb[0].mxu0
      %v590 = vadd.f32 %v345, %v589
      %v591 = vpop.f32.mrb[0].mxu0
      %v592 = vpop.f32.mrb[0].mxu0
      %v593 = vadd.f32 %v345, %v592
      %v594 = vpop.f32.mrb[0].mxu0
      %595 = vmatprep.mubr.bf16.mxu0 0
      %596 = vmatmul.mubr.bf16.gmra.mrb[0].mxu0 %v420
      %v597 = vpop.f32.mrb[0].mxu0
      %v598 = vadd.f32 %v345, %v597
      %v599 = vpop.f32.mrb[0].mxu0
      %v600 = vpop.f32.mrb[0].mxu0
      %v601 = vadd.f32 %v345, %v600
      %v602 = vpop.f32.mrb[0].mxu0
      %603 = vmatprep.mubr.bf16.mxu0 0
      %604 = vmatmul.mubr.bf16.gmra.mrb[0].mxu0 %v421
      %v605 = vpop.f32.mrb[0].mxu0
      %v606 = vadd.f32 %v345, %v605
      %v607 = vpop.f32.mrb[0].mxu0
      %v608 = vpop.f32.mrb[0].mxu0
      %v609 = vadd.f32 %v345, %v608
      %v610 = vpop.f32.mrb[0].mxu0
      %611 = vmatprep.mubr.bf16.mxu0 0
      %612 = vmatmul.mubr.bf16.gmra.mrb[0].mxu0 %v422
      %v613 = vpop.f32.mrb[0].mxu0
      %v614 = vadd.f32 %v345, %v613
      %v615 = vpop.f32.mrb[0].mxu0
      %v616 = vpop.f32.mrb[0].mxu0
      %v617 = vadd.f32 %v345, %v616
      %v618 = vpop.f32.mrb[0].mxu0
      %619 = vmatprep.mubr.bf16.mxu0 0
      %620 = vmatmul.mubr.bf16.gmra.mrb[0].mxu0 %v423
      %v621 = vpop.f32.mrb[0].mxu0
      %v622 = vadd.f32 %v345, %v621
      %v623 = vpop.f32.mrb[0].mxu0
      %v624 = vpop.f32.mrb[0].mxu0
      %v625 = vadd.f32 %v345, %v624
      %v626 = vpop.f32.mrb[0].mxu0
      %627 = vmatprep.mubr.bf16.mxu0 0
      %628 = vmatmul.mubr.bf16.gmra.mrb[0].mxu0 %v424
      %v629 = vpop.f32.mrb[0].mxu0
      %v630 = vadd.f32 %v345, %v629
      %v631 = vpop.f32.mrb[0].mxu0
      %v632 = vpop.f32.mrb[0].mxu0
      %v633 = vadd.f32 %v345, %v632
      %v634 = vpop.f32.mrb[0].mxu0
      %635 = vmatprep.mubr.bf16.mxu0 0
      %636 = vmatmul.mubr.bf16.gmra.mrb[0].mxu0 %v425
      %v637 = vpop.f32.mrb[0].mxu0
      %v638 = vadd.f32 %v345, %v637
      %v639 = vpop.f32.mrb[0].mxu0
      %v640 = vpop.f32.mrb[0].mxu0
      %v641 = vadd.f32 %v345, %v640
      %v642 = vpop.f32.mrb[0].mxu0
      %643 = vmatprep.mubr.bf16.mxu0 0
      %644 = vmatmul.mubr.bf16.gmra.mrb[0].mxu0 %v426
      %v645 = vpop.f32.mrb[0].mxu0
      %v646 = vadd.f32 %v345, %v645
      %v647 = vpop.f32.mrb[0].mxu0
      %v648 = vpop.f32.mrb[0].mxu0
      %v649 = vadd.f32 %v345, %v648
      %v650 = vpop.f32.mrb[0].mxu0
      %651 = vdwg.mxu0
      %v652 = vpack.c.bf16 %v529, %v526
      %v653 = vpack.c.bf16 %v537, %v534
      %v654 = vpack.c.bf16 %v545, %v542
      %v655 = vpack.c.bf16 %v553, %v550
      %v656 = vpack.c.bf16 %v561, %v558
      %v657 = vpack.c.bf16 %v569, %v566
      %v658 = vpack.c.bf16 %v577, %v574
      %v659 = vpack.c.bf16 %v585, %v582
      %v660 = vpack.c.bf16 %v593, %v590
      %v661 = vpack.c.bf16 %v601, %v598
      %v662 = vpack.c.bf16 %v609, %v606
      %v663 = vpack.c.bf16 %v617, %v614
      %v664 = vpack.c.bf16 %v625, %v622
      %v665 = vpack.c.bf16 %v633, %v630
      %v666 = vpack.c.bf16 %v641, %v638
      %v667 = vpack.c.bf16 %v649, %v646
      %v668 = vmul.bf16 %v652, 1056980736
      %v669 = vmul.bf16 %v653, 1056980736
      %v670 = vmul.bf16 %v654, 1056980736
      %v671 = vmul.bf16 %v655, 1056980736
      %v672 = vmul.bf16 %v656, 1056980736
      %v673 = vmul.bf16 %v657, 1056980736
      %v674 = vmul.bf16 %v658, 1056980736
      %v675 = vmul.bf16 %v659, 1056980736
      %v676 = vmul.bf16 %v660, 1056980736
      %v677 = vmul.bf16 %v661, 1056980736
      %v678 = vmul.bf16 %v662, 1056980736
      %v679 = vmul.bf16 %v663, 1056980736
      %v680 = vmul.bf16 %v664, 1056980736
      %v681 = vmul.bf16 %v665, 1056980736
      %v682 = vmul.bf16 %v666, 1056980736
      %v683 = vmul.bf16 %v667, 1056980736
      %v684 = vmul.bf16 %v652, 1060454197
      %v685 = vmul.bf16 %v653, 1060454197
      %v686 = vmul.bf16 %v654, 1060454197
      %v687 = vmul.bf16 %v655, 1060454197
      %v688 = vmul.bf16 %v656, 1060454197
      %v689 = vmul.bf16 %v657, 1060454197
      %v690 = vmul.bf16 %v658, 1060454197
      %v691 = vmul.bf16 %v659, 1060454197
      %v692 = vmul.bf16 %v660, 1060454197
      %v693 = vmul.bf16 %v661, 1060454197
      %v694 = vmul.bf16 %v662, 1060454197
      %v695 = vmul.bf16 %v663, 1060454197
      %v696 = vmul.bf16 %v664, 1060454197
      %v697 = vmul.bf16 %v665, 1060454197
      %v698 = vmul.bf16 %v666, 1060454197
      %v699 = vmul.bf16 %v667, 1060454197
      %v700 = vand.u32 2147450879, %v684
      %v701 = vand.u32 2147450879, %v685
      %v702 = vand.u32 2147450879, %v686
      %v703 = vand.u32 2147450879, %v687
      %v704 = vand.u32 2147450879, %v688
      %v705 = vand.u32 2147450879, %v689
      %v706 = vand.u32 2147450879, %v690
      %v707 = vand.u32 2147450879, %v691
      %v708 = vand.u32 2147450879, %v692
      %v709 = vand.u32 2147450879, %v693
      %v710 = vand.u32 2147450879, %v694
      %v711 = vand.u32 2147450879, %v695
      %v712 = vand.u32 2147450879, %v696
      %v713 = vand.u32 2147450879, %v697
      %v714 = vand.u32 2147450879, %v698
      %v715 = vand.u32 2147450879, %v699
      %v716 = vmul.bf16 %v700, 1051213480
      %v717 = vmul.bf16 %v701, 1051213480
      %v718 = vmul.bf16 %v702, 1051213480
      %v719 = vmul.bf16 %v703, 1051213480
      %v720 = vmul.bf16 %v704, 1051213480
      %v721 = vmul.bf16 %v705, 1051213480
      %v722 = vmul.bf16 %v706, 1051213480
      %v723 = vmul.bf16 %v707, 1051213480
      %v724 = vmul.bf16 %v708, 1051213480
      %v725 = vmul.bf16 %v709, 1051213480
      %v726 = vmul.bf16 %v710, 1051213480
      %v727 = vmul.bf16 %v711, 1051213480
      %v728 = vmul.bf16 %v712, 1051213480
      %v729 = vmul.bf16 %v713, 1051213480
      %v730 = vmul.bf16 %v714, 1051213480
      %v731 = vmul.bf16 %v715, 1051213480
      %v732 = vadd.bf16 %v716, 1065369472
      %v733 = vadd.bf16 %v717, 1065369472
      %v734 = vadd.bf16 %v718, 1065369472
      %v735 = vadd.bf16 %v719, 1065369472
      %v736 = vadd.bf16 %v720, 1065369472
      %v737 = vadd.bf16 %v721, 1065369472
      %v738 = vadd.bf16 %v722, 1065369472
      %v739 = vadd.bf16 %v723, 1065369472
      %v740 = vadd.bf16 %v724, 1065369472
      %v741 = vadd.bf16 %v725, 1065369472
      %v742 = vadd.bf16 %v726, 1065369472
      %v743 = vadd.bf16 %v727, 1065369472
      %v744 = vadd.bf16 %v728, 1065369472
      %v745 = vadd.bf16 %v729, 1065369472
      %v746 = vadd.bf16 %v730, 1065369472
      %v747 = vadd.bf16 %v731, 1065369472
      %v748 = vrcp.bf16.pop %v732
      %v749 = vmul.bf16 1065369472, %v748
      %v750 = vrcp.bf16.pop %v733
      %v751 = vmul.bf16 1065369472, %v750
      %v752 = vrcp.bf16.pop %v734
      %v753 = vmul.bf16 1065369472, %v752
      %v754 = vrcp.bf16.pop %v735
      %v755 = vmul.bf16 1065369472, %v754
      %v756 = vrcp.bf16.pop %v736
      %v757 = vmul.bf16 1065369472, %v756
      %v758 = vrcp.bf16.pop %v737
      %v759 = vmul.bf16 1065369472, %v758
      %v760 = vrcp.bf16.pop %v738
      %v761 = vmul.bf16 1065369472, %v760
      %v762 = vrcp.bf16.pop %v739
      %v763 = vmul.bf16 1065369472, %v762
      %v764 = vrcp.bf16.pop %v740
      %v765 = vmul.bf16 1065369472, %v764
      %v766 = vrcp.bf16.pop %v741
      %v767 = vmul.bf16 1065369472, %v766
      %v768 = vrcp.bf16.pop %v742
      %v769 = vmul.bf16 1065369472, %v768
      %v770 = vrcp.bf16.pop %v743
      %v771 = vmul.bf16 1065369472, %v770
      %v772 = vrcp.bf16.pop %v744
      %v773 = vmul.bf16 1065369472, %v772
      %v774 = vrcp.bf16.pop %v745
      %v775 = vmul.bf16 1065369472, %v774
      %v776 = vrcp.bf16.pop %v746
      %v777 = vmul.bf16 1065369472, %v776
      %v778 = vrcp.bf16.pop %v747
      %v779 = vmul.bf16 1065369472, %v778
      %v780 = vmul.bf16 %v749, 1065893768
      %v781 = vmul.bf16 %v751, 1065893768
      %v782 = vmul.bf16 %v753, 1065893768
      %v783 = vmul.bf16 %v755, 1065893768
      %v784 = vmul.bf16 %v757, 1065893768
      %v785 = vmul.bf16 %v759, 1065893768
      %v786 = vmul.bf16 %v761, 1065893768
      %v787 = vmul.bf16 %v763, 1065893768
      %v788 = vmul.bf16 %v765, 1065893768
      %v789 = vmul.bf16 %v767, 1065893768
      %v790 = vmul.bf16 %v769, 1065893768
      %v791 = vmul.bf16 %v771, 1065893768
      %v792 = vmul.bf16 %v773, 1065893768
      %v793 = vmul.bf16 %v775, 1065893768
      %v794 = vmul.bf16 %v777, 1065893768
      %v795 = vmul.bf16 %v779, 1065893768
      %v796 = vadd.bf16 %v780, 3216687034
      %v797 = vadd.bf16 %v781, 3216687034
      %v798 = vadd.bf16 %v782, 3216687034
      %v799 = vadd.bf16 %v783, 3216687034
      %v800 = vadd.bf16 %v784, 3216687034
      %v801 = vadd.bf16 %v785, 3216687034
      %v802 = vadd.bf16 %v786, 3216687034
      %v803 = vadd.bf16 %v787, 3216687034
      %v804 = vadd.bf16 %v788, 3216687034
      %v805 = vadd.bf16 %v789, 3216687034
      %v806 = vadd.bf16 %v790, 3216687034
      %v807 = vadd.bf16 %v791, 3216687034
      %v808 = vadd.bf16 %v792, 3216687034
      %v809 = vadd.bf16 %v793, 3216687034
      %v810 = vadd.bf16 %v794, 3216687034
      %v811 = vadd.bf16 %v795, 3216687034
      %v812 = vmul.bf16 %v749, %v796
      %v813 = vmul.bf16 %v751, %v797
      %v814 = vmul.bf16 %v753, %v798
      %v815 = vmul.bf16 %v755, %v799
      %v816 = vmul.bf16 %v757, %v800
      %v817 = vmul.bf16 %v759, %v801
      %v818 = vmul.bf16 %v761, %v802
      %v819 = vmul.bf16 %v763, %v803
      %v820 = vmul.bf16 %v765, %v804
      %v821 = vmul.bf16 %v767, %v805
      %v822 = vmul.bf16 %v769, %v806
      %v823 = vmul.bf16 %v771, %v807
      %v824 = vmul.bf16 %v773, %v808
      %v825 = vmul.bf16 %v775, %v809
      %v826 = vmul.bf16 %v777, %v810
      %v827 = vmul.bf16 %v779, %v811
      %v828 = vadd.bf16 %v812, 1068908470
      %v829 = vadd.bf16 %v813, 1068908470
      %v830 = vadd.bf16 %v814, 1068908470
      %v831 = vadd.bf16 %v815, 1068908470
      %v832 = vadd.bf16 %v816, 1068908470
      %v833 = vadd.bf16 %v817, 1068908470
      %v834 = vadd.bf16 %v818, 1068908470
      %v835 = vadd.bf16 %v819, 1068908470
      %v836 = vadd.bf16 %v820, 1068908470
      %v837 = vadd.bf16 %v821, 1068908470
      %v838 = vadd.bf16 %v822, 1068908470
      %v839 = vadd.bf16 %v823, 1068908470
      %v840 = vadd.bf16 %v824, 1068908470
      %v841 = vadd.bf16 %v825, 1068908470
      %v842 = vadd.bf16 %v826, 1068908470
      %v843 = vadd.bf16 %v827, 1068908470
      %v844 = vmul.bf16 %v749, %v828
      %v845 = vmul.bf16 %v751, %v829
      %v846 = vmul.bf16 %v753, %v830
      %v847 = vmul.bf16 %v755, %v831
      %v848 = vmul.bf16 %v757, %v832
      %v849 = vmul.bf16 %v759, %v833
      %v850 = vmul.bf16 %v761, %v834
      %v851 = vmul.bf16 %v763, %v835
      %v852 = vmul.bf16 %v765, %v836
      %v853 = vmul.bf16 %v767, %v837
      %v854 = vmul.bf16 %v769, %v838
      %v855 = vmul.bf16 %v771, %v839
      %v856 = vmul.bf16 %v773, %v840
      %v857 = vmul.bf16 %v775, %v841
      %v858 = vmul.bf16 %v777, %v842
      %v859 = vmul.bf16 %v779, %v843
      %v860 = vadd.bf16 %v844, 3197288082
      %v861 = vadd.bf16 %v845, 3197288082
      %v862 = vadd.bf16 %v846, 3197288082
      %v863 = vadd.bf16 %v847, 3197288082
      %v864 = vadd.bf16 %v848, 3197288082
      %v865 = vadd.bf16 %v849, 3197288082
      %v866 = vadd.bf16 %v850, 3197288082
      %v867 = vadd.bf16 %v851, 3197288082
      %v868 = vadd.bf16 %v852, 3197288082
      %v869 = vadd.bf16 %v853, 3197288082
      %v870 = vadd.bf16 %v854, 3197288082
      %v871 = vadd.bf16 %v855, 3197288082
      %v872 = vadd.bf16 %v856, 3197288082
      %v873 = vadd.bf16 %v857, 3197288082
      %v874 = vadd.bf16 %v858, 3197288082
      %v875 = vadd.bf16 %v859, 3197288082
      %v876 = vmul.bf16 %v749, %v860
      %v877 = vmul.bf16 %v751, %v861
      %v878 = vmul.bf16 %v753, %v862
      %v879 = vmul.bf16 %v755, %v863
      %v880 = vmul.bf16 %v757, %v864
      %v881 = vmul.bf16 %v759, %v865
      %v882 = vmul.bf16 %v761, %v866
      %v883 = vmul.bf16 %v763, %v867
      %v884 = vmul.bf16 %v765, %v868
      %v885 = vmul.bf16 %v767, %v869
      %v886 = vmul.bf16 %v769, %v870
      %v887 = vmul.bf16 %v771, %v871
      %v888 = vmul.bf16 %v773, %v872
      %v889 = vmul.bf16 %v775, %v873
      %v890 = vmul.bf16 %v777, %v874
      %v891 = vmul.bf16 %v779, %v875
      %v892 = vadd.bf16 %v876, 1048723074
      %v893 = vadd.bf16 %v877, 1048723074
      %v894 = vadd.bf16 %v878, 1048723074
      %v895 = vadd.bf16 %v879, 1048723074
      %v896 = vadd.bf16 %v880, 1048723074
      %v897 = vadd.bf16 %v881, 1048723074
      %v898 = vadd.bf16 %v882, 1048723074
      %v899 = vadd.bf16 %v883, 1048723074
      %v900 = vadd.bf16 %v884, 1048723074
      %v901 = vadd.bf16 %v885, 1048723074
      %v902 = vadd.bf16 %v886, 1048723074
      %v903 = vadd.bf16 %v887, 1048723074
      %v904 = vadd.bf16 %v888, 1048723074
      %v905 = vadd.bf16 %v889, 1048723074
      %v906 = vadd.bf16 %v890, 1048723074
      %v907 = vadd.bf16 %v891, 1048723074
      %v908 = vmul.bf16 %v749, %v892
      %v909 = vmul.bf16 %v751, %v893
      %v910 = vmul.bf16 %v753, %v894
      %v911 = vmul.bf16 %v755, %v895
      %v912 = vmul.bf16 %v757, %v896
      %v913 = vmul.bf16 %v759, %v897
      %v914 = vmul.bf16 %v761, %v898
      %v915 = vmul.bf16 %v763, %v899
      %v916 = vmul.bf16 %v765, %v900
      %v917 = vmul.bf16 %v767, %v901
      %v918 = vmul.bf16 %v769, %v902
      %v919 = vmul.bf16 %v771, %v903
      %v920 = vmul.bf16 %v773, %v904
      %v921 = vmul.bf16 %v775, %v905
      %v922 = vmul.bf16 %v777, %v906
      %v923 = vmul.bf16 %v779, %v907
      %v924 = vmul.bf16 %v700, %v700
      %v925 = vmul.bf16 %v701, %v701
      %v926 = vmul.bf16 %v702, %v702
      %v927 = vmul.bf16 %v703, %v703
      %v928 = vmul.bf16 %v704, %v704
      %v929 = vmul.bf16 %v705, %v705
      %v930 = vmul.bf16 %v706, %v706
      %v931 = vmul.bf16 %v707, %v707
      %v932 = vmul.bf16 %v708, %v708
      %v933 = vmul.bf16 %v709, %v709
      %v934 = vmul.bf16 %v710, %v710
      %v935 = vmul.bf16 %v711, %v711
      %v936 = vmul.bf16 %v712, %v712
      %v937 = vmul.bf16 %v713, %v713
      %v938 = vmul.bf16 %v714, %v714
      %v939 = vmul.bf16 %v715, %v715
      %v940 = vsub.bf16 0, %v924
      %v941 = vsub.bf16 0, %v925
      %v942 = vsub.bf16 0, %v926
      %v943 = vsub.bf16 0, %v927
      %v944 = vsub.bf16 0, %v928
      %v945 = vsub.bf16 0, %v929
      %v946 = vsub.bf16 0, %v930
      %v947 = vsub.bf16 0, %v931
      %v948 = vsub.bf16 0, %v932
      %v949 = vsub.bf16 0, %v933
      %v950 = vsub.bf16 0, %v934
      %v951 = vsub.bf16 0, %v935
      %v952 = vsub.bf16 0, %v936
      %v953 = vsub.bf16 0, %v937
      %v954 = vsub.bf16 0, %v938
      %v955 = vsub.bf16 0, %v939
      %v957 = vmul.bf16 %v940, 1069105081
      %v958 = vpow.bf16.pop %v957
      %v960 = vmul.bf16 %v941, 1069105081
      %v961 = vpow.bf16.pop %v960
      %v963 = vmul.bf16 %v942, 1069105081
      %v964 = vpow.bf16.pop %v963
      %v966 = vmul.bf16 %v943, 1069105081
      %v967 = vpow.bf16.pop %v966
      %v969 = vmul.bf16 %v944, 1069105081
      %v970 = vpow.bf16.pop %v969
      %v972 = vmul.bf16 %v945, 1069105081
      %v973 = vpow.bf16.pop %v972
      %v975 = vmul.bf16 %v946, 1069105081
      %v976 = vpow.bf16.pop %v975
      %v978 = vmul.bf16 %v947, 1069105081
      %v979 = vpow.bf16.pop %v978
      %v981 = vmul.bf16 %v948, 1069105081
      %v982 = vpow.bf16.pop %v981
      %v984 = vmul.bf16 %v949, 1069105081
      %v985 = vpow.bf16.pop %v984
      %v987 = vmul.bf16 %v950, 1069105081
      %v988 = vpow.bf16.pop %v987
      %v990 = vmul.bf16 %v951, 1069105081
      %v991 = vpow.bf16.pop %v990
      %v993 = vmul.bf16 %v952, 1069105081
      %v994 = vpow.bf16.pop %v993
      %v996 = vmul.bf16 %v953, 1069105081
      %v997 = vpow.bf16.pop %v996
      %v999 = vmul.bf16 %v954, 1069105081
      %v1000 = vpow.bf16.pop %v999
      %v1002 = vmul.bf16 %v955, 1069105081
      %v1003 = vpow.bf16.pop %v1002
      %v1004 = vmul.bf16 %v908, %v958
      %v1005 = vmul.bf16 %v909, %v961
      %v1006 = vmul.bf16 %v910, %v964
      %v1007 = vmul.bf16 %v911, %v967
      %v1008 = vmul.bf16 %v912, %v970
      %v1009 = vmul.bf16 %v913, %v973
      %v1010 = vmul.bf16 %v914, %v976
      %v1011 = vmul.bf16 %v915, %v979
      %v1012 = vmul.bf16 %v916, %v982
      %v1013 = vmul.bf16 %v917, %v985
      %v1014 = vmul.bf16 %v918, %v988
      %v1015 = vmul.bf16 %v919, %v991
      %v1016 = vmul.bf16 %v920, %v994
      %v1017 = vmul.bf16 %v921, %v997
      %v1018 = vmul.bf16 %v922, %v1000
      %v1019 = vmul.bf16 %v923, %v1003
      %v1020 = vsub.bf16 1065369472, %v1004
      %v1021 = vsub.bf16 1065369472, %v1005
      %v1022 = vsub.bf16 1065369472, %v1006
      %v1023 = vsub.bf16 1065369472, %v1007
      %v1024 = vsub.bf16 1065369472, %v1008
      %v1025 = vsub.bf16 1065369472, %v1009
      %v1026 = vsub.bf16 1065369472, %v1010
      %v1027 = vsub.bf16 1065369472, %v1011
      %v1028 = vsub.bf16 1065369472, %v1012
      %v1029 = vsub.bf16 1065369472, %v1013
      %v1030 = vsub.bf16 1065369472, %v1014
      %v1031 = vsub.bf16 1065369472, %v1015
      %v1032 = vsub.bf16 1065369472, %v1016
      %v1033 = vsub.bf16 1065369472, %v1017
      %v1034 = vsub.bf16 1065369472, %v1018
      %v1035 = vsub.bf16 1065369472, %v1019
      %vm1036 = vcmp.lt.bf16.partialorder %v684, 0
      %vm1037 = vcmp.lt.bf16.partialorder %v685, 0
      %vm1038 = vcmp.lt.bf16.partialorder %v686, 0
      %vm1039 = vcmp.lt.bf16.partialorder %v687, 0
      %vm1040 = vcmp.lt.bf16.partialorder %v688, 0
      %vm1041 = vcmp.lt.bf16.partialorder %v689, 0
      %vm1042 = vcmp.lt.bf16.partialorder %v690, 0
      %vm1043 = vcmp.lt.bf16.partialorder %v691, 0
      %vm1044 = vcmp.lt.bf16.partialorder %v692, 0
      %vm1045 = vcmp.lt.bf16.partialorder %v693, 0
      %vm1046 = vcmp.lt.bf16.partialorder %v694, 0
      %vm1047 = vcmp.lt.bf16.partialorder %v695, 0
      %vm1048 = vcmp.lt.bf16.partialorder %v696, 0
      %vm1049 = vcmp.lt.bf16.partialorder %v697, 0
      %vm1050 = vcmp.lt.bf16.partialorder %v698, 0
      %vm1051 = vcmp.lt.bf16.partialorder %v699, 0
      %v1052 = vsub.bf16 0, %v1020
      %v1053 = vsub.bf16 0, %v1021
      %v1054 = vsub.bf16 0, %v1022
      %v1055 = vsub.bf16 0, %v1023
      %v1056 = vsub.bf16 0, %v1024
      %v1057 = vsub.bf16 0, %v1025
      %v1058 = vsub.bf16 0, %v1026
      %v1059 = vsub.bf16 0, %v1027
      %v1060 = vsub.bf16 0, %v1028
      %v1061 = vsub.bf16 0, %v1029
      %v1062 = vsub.bf16 0, %v1030
      %v1063 = vsub.bf16 0, %v1031
      %v1064 = vsub.bf16 0, %v1032
      %v1065 = vsub.bf16 0, %v1033
      %v1066 = vsub.bf16 0, %v1034
      %v1067 = vsub.bf16 0, %v1035
      %v1068 = vsel %vm1036, %v1052, %v1020
      %v1069 = vsel %vm1037, %v1053, %v1021
      %v1070 = vsel %vm1038, %v1054, %v1022
      %v1071 = vsel %vm1039, %v1055, %v1023
      %v1072 = vsel %vm1040, %v1056, %v1024
      %v1073 = vsel %vm1041, %v1057, %v1025
      %v1074 = vsel %vm1042, %v1058, %v1026
      %v1075 = vsel %vm1043, %v1059, %v1027
      %v1076 = vsel %vm1044, %v1060, %v1028
      %v1077 = vsel %vm1045, %v1061, %v1029
      %v1078 = vsel %vm1046, %v1062, %v1030
      %v1079 = vsel %vm1047, %v1063, %v1031
      %v1080 = vsel %vm1048, %v1064, %v1032
      %v1081 = vsel %vm1049, %v1065, %v1033
      %v1082 = vsel %vm1050, %v1066, %v1034
      %v1083 = vsel %vm1051, %v1067, %v1035
      %v1084 = vadd.bf16 %v1068, 1065369472
      %v1085 = vadd.bf16 %v1069, 1065369472
      %v1086 = vadd.bf16 %v1070, 1065369472
      %v1087 = vadd.bf16 %v1071, 1065369472
      %v1088 = vadd.bf16 %v1072, 1065369472
      %v1089 = vadd.bf16 %v1073, 1065369472
      %v1090 = vadd.bf16 %v1074, 1065369472
      %v1091 = vadd.bf16 %v1075, 1065369472
      %v1092 = vadd.bf16 %v1076, 1065369472
      %v1093 = vadd.bf16 %v1077, 1065369472
      %v1094 = vadd.bf16 %v1078, 1065369472
      %v1095 = vadd.bf16 %v1079, 1065369472
      %v1096 = vadd.bf16 %v1080, 1065369472
      %v1097 = vadd.bf16 %v1081, 1065369472
      %v1098 = vadd.bf16 %v1082, 1065369472
      %v1099 = vadd.bf16 %v1083, 1065369472
      %v1100 = vmul.bf16 %v668, %v1084
      %v1101 = vmul.bf16 %v669, %v1085
      %v1102 = vmul.bf16 %v670, %v1086
      %v1103 = vmul.bf16 %v671, %v1087
      %v1104 = vmul.bf16 %v672, %v1088
      %v1105 = vmul.bf16 %v673, %v1089
      %v1106 = vmul.bf16 %v674, %v1090
      %v1107 = vmul.bf16 %v675, %v1091
      %v1108 = vmul.bf16 %v676, %v1092
      %v1109 = vmul.bf16 %v677, %v1093
      %v1110 = vmul.bf16 %v678, %v1094
      %v1111 = vmul.bf16 %v679, %v1095
      %v1112 = vmul.bf16 %v680, %v1096
      %v1113 = vmul.bf16 %v681, %v1097
      %v1114 = vmul.bf16 %v682, %v1098
      %v1115 = vmul.bf16 %v683, %v1099
      %v1116 = vld [vmem:[%s3] sm:$0xf]
      %v1117 = vld [vmem:[%s3 + $0x4] sm:$0xf]
      %v1118 = vld [vmem:[%s3 + $0x8] sm:$0xf]
      %v1119 = vld [vmem:[%s3 + $0xc] sm:$0xf]
      %v1120 = vld [vmem:[%s3 + $0x10] sm:$0xf]
      %v1121 = vld [vmem:[%s3 + $0x14] sm:$0xf]
      %v1122 = vld [vmem:[%s3 + $0x18] sm:$0xf]
      %v1123 = vld [vmem:[%s3 + $0x1c] sm:$0xf]
      %v1124 = vld [vmem:[%s3 + $0x20] sm:$0xf]
      %v1125 = vld [vmem:[%s3 + $0x24] sm:$0xf]
      %v1126 = vld [vmem:[%s3 + $0x28] sm:$0xf]
      %v1127 = vld [vmem:[%s3 + $0x2c] sm:$0xf]
      %v1128 = vld [vmem:[%s3 + $0x30] sm:$0xf]
      %v1129 = vld [vmem:[%s3 + $0x34] sm:$0xf]
      %v1130 = vld [vmem:[%s3 + $0x38] sm:$0xf]
      %v1131 = vld [vmem:[%s3 + $0x3c] sm:$0xf]
      %v1132 = vld [vmem:[%s4] sm:$0x1]
      %v1134 = vlaneseq
      %v1135 = vshrl.u32 %v1134, 7
      %v1136 = vsub.s32 0, %v1135
      %v1137 = vrot.slane %v1132, %v1136
      %v1155 = vunpack.c.l.b16 %v1116
      %v1156 = vunpack.c.l.b16 %v1117
      %v1157 = vunpack.c.l.b16 %v1118
      %v1158 = vunpack.c.l.b16 %v1119
      %v1159 = vunpack.c.l.b16 %v1120
      %v1160 = vunpack.c.l.b16 %v1121
      %v1161 = vunpack.c.l.b16 %v1122
      %v1162 = vunpack.c.l.b16 %v1123
      %v1163 = vunpack.c.l.b16 %v1124
      %v1164 = vunpack.c.l.b16 %v1125
      %v1165 = vunpack.c.l.b16 %v1126
      %v1166 = vunpack.c.l.b16 %v1127
      %v1167 = vunpack.c.l.b16 %v1128
      %v1168 = vunpack.c.l.b16 %v1129
      %v1169 = vunpack.c.l.b16 %v1130
      %v1170 = vunpack.c.l.b16 %v1131
      %v1171 = vpack.c.b16 %v1156, %v1155
      %v1172 = vpack.c.b16 %v1158, %v1157
      %v1173 = vpack.c.b16 %v1160, %v1159
      %v1174 = vpack.c.b16 %v1162, %v1161
      %v1175 = vpack.c.b16 %v1164, %v1163
      %v1176 = vpack.c.b16 %v1166, %v1165
      %v1177 = vpack.c.b16 %v1168, %v1167
      %v1178 = vpack.c.b16 %v1170, %v1169
      %1187 = vmatprep.subr.bf16.mxu0 0
      %1188 = vmatpush1.bf16.msra.mxu0 %v1171
      %1189 = vmatprep.subr.bf16.mxu0 0
      %1190 = vmatpush1.bf16.msra.mxu0 %v1172
      %1191 = vmatprep.subr.bf16.mxu0 0
      %1192 = vmatpush1.bf16.msra.mxu0 %v1173
      %1193 = vmatprep.subr.bf16.mxu0 0
      %1194 = vmatpush1.bf16.msra.mxu0 %v1174
      %1195 = vmatprep.subr.bf16.mxu0 0
      %1196 = vmatpush1.bf16.msra.mxu0 %v1175
      %1197 = vmatprep.subr.bf16.mxu0 0
      %1198 = vmatpush1.bf16.msra.mxu0 %v1176
      %1199 = vmatprep.subr.bf16.mxu0 0
      %1200 = vmatpush1.bf16.msra.mxu0 %v1177
      %1201 = vmatprep.subr.bf16.mxu0 0
      %1202 = vmatpush1.bf16.msra.mxu0 %v1178
      %1203 = vmatprep.subr.bf16.mxu0 0
      %1204 = vmatpush1.bf16.msra.mxu0 0
      %1205 = vmatprep.subr.bf16.mxu0 0
      %1206 = vmatpush1.bf16.msra.mxu0 0
      %1207 = vmatprep.subr.bf16.mxu0 0
      %1208 = vmatpush1.bf16.msra.mxu0 0
      %1209 = vmatprep.subr.bf16.mxu0 0
      %1210 = vmatpush1.bf16.msra.mxu0 0
      %1211 = vmatprep.subr.bf16.mxu0 0
      %1212 = vmatpush1.bf16.msra.mxu0 0
      %1213 = vmatprep.subr.bf16.mxu0 0
      %1214 = vmatpush1.bf16.msra.mxu0 0
      %1215 = vmatprep.subr.bf16.mxu0 0
      %1216 = vmatpush1.bf16.msra.mxu0 0
      %1217 = vmatprep.subr.bf16.mxu0 0
      %1218 = vmatpush1.bf16.msra.mxu0 0
      %1219 = vmatprep.mubr.bf16.mxu0 0
      %1220 = vmatmul.mubr.bf16.gmra.mrb[0].mxu0 %v1100
      %v1221 = vpop.f32.mrb[0].mxu0
      %v1222 = vadd.f32 %v1137, %v1221
      %v1223 = vpop.f32.mrb[0].mxu0
      %v1224 = vpop.f32.mrb[0].mxu0
      %v1225 = vadd.f32 %v1137, %v1224
      %v1226 = vpop.f32.mrb[0].mxu0
      %1227 = vmatprep.mubr.bf16.mxu0 0
      %1228 = vmatmul.mubr.bf16.gmra.mrb[0].mxu0 %v1101
      %v1229 = vpop.f32.mrb[0].mxu0
      %v1230 = vadd.f32 %v1137, %v1229
      %v1231 = vpop.f32.mrb[0].mxu0
      %v1232 = vpop.f32.mrb[0].mxu0
      %v1233 = vadd.f32 %v1137, %v1232
      %v1234 = vpop.f32.mrb[0].mxu0
      %1235 = vmatprep.mubr.bf16.mxu0 0
      %1236 = vmatmul.mubr.bf16.gmra.mrb[0].mxu0 %v1102
      %v1237 = vpop.f32.mrb[0].mxu0
      %v1238 = vadd.f32 %v1137, %v1237
      %v1239 = vpop.f32.mrb[0].mxu0
      %v1240 = vpop.f32.mrb[0].mxu0
      %v1241 = vadd.f32 %v1137, %v1240
      %v1242 = vpop.f32.mrb[0].mxu0
      %1243 = vmatprep.mubr.bf16.mxu0 0
      %1244 = vmatmul.mubr.bf16.gmra.mrb[0].mxu0 %v1103
      %v1245 = vpop.f32.mrb[0].mxu0
      %v1246 = vadd.f32 %v1137, %v1245
      %v1247 = vpop.f32.mrb[0].mxu0
      %v1248 = vpop.f32.mrb[0].mxu0
      %v1249 = vadd.f32 %v1137, %v1248
      %v1250 = vpop.f32.mrb[0].mxu0
      %1251 = vmatprep.mubr.bf16.mxu0 0
      %1252 = vmatmul.mubr.bf16.gmra.mrb[0].mxu0 %v1104
      %v1253 = vpop.f32.mrb[0].mxu0
      %v1254 = vadd.f32 %v1137, %v1253
      %v1255 = vpop.f32.mrb[0].mxu0
      %v1256 = vpop.f32.mrb[0].mxu0
      %v1257 = vadd.f32 %v1137, %v1256
      %v1258 = vpop.f32.mrb[0].mxu0
      %1259 = vmatprep.mubr.bf16.mxu0 0
      %1260 = vmatmul.mubr.bf16.gmra.mrb[0].mxu0 %v1105
      %v1261 = vpop.f32.mrb[0].mxu0
      %v1262 = vadd.f32 %v1137, %v1261
      %v1263 = vpop.f32.mrb[0].mxu0
      %v1264 = vpop.f32.mrb[0].mxu0
      %v1265 = vadd.f32 %v1137, %v1264
      %v1266 = vpop.f32.mrb[0].mxu0
      %1267 = vmatprep.mubr.bf16.mxu0 0
      %1268 = vmatmul.mubr.bf16.gmra.mrb[0].mxu0 %v1106
      %v1269 = vpop.f32.mrb[0].mxu0
      %v1270 = vadd.f32 %v1137, %v1269
      %v1271 = vpop.f32.mrb[0].mxu0
      %v1272 = vpop.f32.mrb[0].mxu0
      %v1273 = vadd.f32 %v1137, %v1272
      %v1274 = vpop.f32.mrb[0].mxu0
      %1275 = vmatprep.mubr.bf16.mxu0 0
      %1276 = vmatmul.mubr.bf16.gmra.mrb[0].mxu0 %v1107
      %v1277 = vpop.f32.mrb[0].mxu0
      %v1278 = vadd.f32 %v1137, %v1277
      %v1279 = vpop.f32.mrb[0].mxu0
      %v1280 = vpop.f32.mrb[0].mxu0
      %v1281 = vadd.f32 %v1137, %v1280
      %v1282 = vpop.f32.mrb[0].mxu0
      %1283 = vmatprep.mubr.bf16.mxu0 0
      %1284 = vmatmul.mubr.bf16.gmra.mrb[0].mxu0 %v1108
      %v1285 = vpop.f32.mrb[0].mxu0
      %v1286 = vadd.f32 %v1137, %v1285
      %v1287 = vpop.f32.mrb[0].mxu0
      %v1288 = vpop.f32.mrb[0].mxu0
      %v1289 = vadd.f32 %v1137, %v1288
      %v1290 = vpop.f32.mrb[0].mxu0
      %1291 = vmatprep.mubr.bf16.mxu0 0
      %1292 = vmatmul.mubr.bf16.gmra.mrb[0].mxu0 %v1109
      %v1293 = vpop.f32.mrb[0].mxu0
      %v1294 = vadd.f32 %v1137, %v1293
      %v1295 = vpop.f32.mrb[0].mxu0
      %v1296 = vpop.f32.mrb[0].mxu0
      %v1297 = vadd.f32 %v1137, %v1296
      %v1298 = vpop.f32.mrb[0].mxu0
      %1299 = vmatprep.mubr.bf16.mxu0 0
      %1300 = vmatmul.mubr.bf16.gmra.mrb[0].mxu0 %v1110
      %v1301 = vpop.f32.mrb[0].mxu0
      %v1302 = vadd.f32 %v1137, %v1301
      %v1303 = vpop.f32.mrb[0].mxu0
      %v1304 = vpop.f32.mrb[0].mxu0
      %v1305 = vadd.f32 %v1137, %v1304
      %v1306 = vpop.f32.mrb[0].mxu0
      %1307 = vmatprep.mubr.bf16.mxu0 0
      %1308 = vmatmul.mubr.bf16.gmra.mrb[0].mxu0 %v1111
      %v1309 = vpop.f32.mrb[0].mxu0
      %v1310 = vadd.f32 %v1137, %v1309
      %v1311 = vpop.f32.mrb[0].mxu0
      %v1312 = vpop.f32.mrb[0].mxu0
      %v1313 = vadd.f32 %v1137, %v1312
      %v1314 = vpop.f32.mrb[0].mxu0
      %1315 = vmatprep.mubr.bf16.mxu0 0
      %1316 = vmatmul.mubr.bf16.gmra.mrb[0].mxu0 %v1112
      %v1317 = vpop.f32.mrb[0].mxu0
      %v1318 = vadd.f32 %v1137, %v1317
      %v1319 = vpop.f32.mrb[0].mxu0
      %v1320 = vpop.f32.mrb[0].mxu0
      %v1321 = vadd.f32 %v1137, %v1320
      %v1322 = vpop.f32.mrb[0].mxu0
      %1323 = vmatprep.mubr.bf16.mxu0 0
      %1324 = vmatmul.mubr.bf16.gmra.mrb[0].mxu0 %v1113
      %v1325 = vpop.f32.mrb[0].mxu0
      %v1326 = vadd.f32 %v1137, %v1325
      %v1327 = vpop.f32.mrb[0].mxu0
      %v1328 = vpop.f32.mrb[0].mxu0
      %v1329 = vadd.f32 %v1137, %v1328
      %v1330 = vpop.f32.mrb[0].mxu0
      %1331 = vmatprep.mubr.bf16.mxu0 0
      %1332 = vmatmul.mubr.bf16.gmra.mrb[0].mxu0 %v1114
      %v1333 = vpop.f32.mrb[0].mxu0
      %v1334 = vadd.f32 %v1137, %v1333
      %v1335 = vpop.f32.mrb[0].mxu0
      %v1336 = vpop.f32.mrb[0].mxu0
      %v1337 = vadd.f32 %v1137, %v1336
      %v1338 = vpop.f32.mrb[0].mxu0
      %1339 = vmatprep.mubr.bf16.mxu0 0
      %1340 = vmatmul.mubr.bf16.gmra.mrb[0].mxu0 %v1115
      %v1341 = vpop.f32.mrb[0].mxu0
      %v1342 = vadd.f32 %v1137, %v1341
      %v1343 = vpop.f32.mrb[0].mxu0
      %v1344 = vpop.f32.mrb[0].mxu0
      %v1345 = vadd.f32 %v1137, %v1344
      %v1346 = vpop.f32.mrb[0].mxu0
      %1347 = vdwg.mxu0
      %v1348 = vpack.c.bf16 %v1225, %v1222
      %v1349 = vpack.c.bf16 %v1233, %v1230
      %v1350 = vpack.c.bf16 %v1241, %v1238
      %v1351 = vpack.c.bf16 %v1249, %v1246
      %v1352 = vpack.c.bf16 %v1257, %v1254
      %v1353 = vpack.c.bf16 %v1265, %v1262
      %v1354 = vpack.c.bf16 %v1273, %v1270
      %v1355 = vpack.c.bf16 %v1281, %v1278
      %v1356 = vpack.c.bf16 %v1289, %v1286
      %v1357 = vpack.c.bf16 %v1297, %v1294
      %v1358 = vpack.c.bf16 %v1305, %v1302
      %v1359 = vpack.c.bf16 %v1313, %v1310
      %v1360 = vpack.c.bf16 %v1321, %v1318
      %v1361 = vpack.c.bf16 %v1329, %v1326
      %v1362 = vpack.c.bf16 %v1337, %v1334
      %v1363 = vpack.c.bf16 %v1345, %v1342
      %v1364 = vmul.bf16 %v1348, 1056980736
      %v1365 = vmul.bf16 %v1349, 1056980736
      %v1366 = vmul.bf16 %v1350, 1056980736
      %v1367 = vmul.bf16 %v1351, 1056980736
      %v1368 = vmul.bf16 %v1352, 1056980736
      %v1369 = vmul.bf16 %v1353, 1056980736
      %v1370 = vmul.bf16 %v1354, 1056980736
      %v1371 = vmul.bf16 %v1355, 1056980736
      %v1372 = vmul.bf16 %v1356, 1056980736
      %v1373 = vmul.bf16 %v1357, 1056980736
      %v1374 = vmul.bf16 %v1358, 1056980736
      %v1375 = vmul.bf16 %v1359, 1056980736
      %v1376 = vmul.bf16 %v1360, 1056980736
      %v1377 = vmul.bf16 %v1361, 1056980736
      %v1378 = vmul.bf16 %v1362, 1056980736
      %v1379 = vmul.bf16 %v1363, 1056980736
      %v1380 = vmul.bf16 %v1348, 1060454197
      %v1381 = vmul.bf16 %v1349, 1060454197
      %v1382 = vmul.bf16 %v1350, 1060454197
      %v1383 = vmul.bf16 %v1351, 1060454197
      %v1384 = vmul.bf16 %v1352, 1060454197
      %v1385 = vmul.bf16 %v1353, 1060454197
      %v1386 = vmul.bf16 %v1354, 1060454197
      %v1387 = vmul.bf16 %v1355, 1060454197
      %v1388 = vmul.bf16 %v1356, 1060454197
      %v1389 = vmul.bf16 %v1357, 1060454197
      %v1390 = vmul.bf16 %v1358, 1060454197
      %v1391 = vmul.bf16 %v1359, 1060454197
      %v1392 = vmul.bf16 %v1360, 1060454197
      %v1393 = vmul.bf16 %v1361, 1060454197
      %v1394 = vmul.bf16 %v1362, 1060454197
      %v1395 = vmul.bf16 %v1363, 1060454197
      %v1396 = vand.u32 2147450879, %v1380
      %v1397 = vand.u32 2147450879, %v1381
      %v1398 = vand.u32 2147450879, %v1382
      %v1399 = vand.u32 2147450879, %v1383
      %v1400 = vand.u32 2147450879, %v1384
      %v1401 = vand.u32 2147450879, %v1385
      %v1402 = vand.u32 2147450879, %v1386
      %v1403 = vand.u32 2147450879, %v1387
      %v1404 = vand.u32 2147450879, %v1388
      %v1405 = vand.u32 2147450879, %v1389
      %v1406 = vand.u32 2147450879, %v1390
      %v1407 = vand.u32 2147450879, %v1391
      %v1408 = vand.u32 2147450879, %v1392
      %v1409 = vand.u32 2147450879, %v1393
      %v1410 = vand.u32 2147450879, %v1394
      %v1411 = vand.u32 2147450879, %v1395
      %v1412 = vmul.bf16 %v1396, 1051213480
      %v1413 = vmul.bf16 %v1397, 1051213480
      %v1414 = vmul.bf16 %v1398, 1051213480
      %v1415 = vmul.bf16 %v1399, 1051213480
      %v1416 = vmul.bf16 %v1400, 1051213480
      %v1417 = vmul.bf16 %v1401, 1051213480
      %v1418 = vmul.bf16 %v1402, 1051213480
      %v1419 = vmul.bf16 %v1403, 1051213480
      %v1420 = vmul.bf16 %v1404, 1051213480
      %v1421 = vmul.bf16 %v1405, 1051213480
      %v1422 = vmul.bf16 %v1406, 1051213480
      %v1423 = vmul.bf16 %v1407, 1051213480
      %v1424 = vmul.bf16 %v1408, 1051213480
      %v1425 = vmul.bf16 %v1409, 1051213480
      %v1426 = vmul.bf16 %v1410, 1051213480
      %v1427 = vmul.bf16 %v1411, 1051213480
      %v1428 = vadd.bf16 %v1412, 1065369472
      %v1429 = vadd.bf16 %v1413, 1065369472
      %v1430 = vadd.bf16 %v1414, 1065369472
      %v1431 = vadd.bf16 %v1415, 1065369472
      %v1432 = vadd.bf16 %v1416, 1065369472
      %v1433 = vadd.bf16 %v1417, 1065369472
      %v1434 = vadd.bf16 %v1418, 1065369472
      %v1435 = vadd.bf16 %v1419, 1065369472
      %v1436 = vadd.bf16 %v1420, 1065369472
      %v1437 = vadd.bf16 %v1421, 1065369472
      %v1438 = vadd.bf16 %v1422, 1065369472
      %v1439 = vadd.bf16 %v1423, 1065369472
      %v1440 = vadd.bf16 %v1424, 1065369472
      %v1441 = vadd.bf16 %v1425, 1065369472
      %v1442 = vadd.bf16 %v1426, 1065369472
      %v1443 = vadd.bf16 %v1427, 1065369472
      %v1444 = vrcp.bf16.pop %v1428
      %v1445 = vmul.bf16 1065369472, %v1444
      %v1446 = vrcp.bf16.pop %v1429
      %v1447 = vmul.bf16 1065369472, %v1446
      %v1448 = vrcp.bf16.pop %v1430
      %v1449 = vmul.bf16 1065369472, %v1448
      %v1450 = vrcp.bf16.pop %v1431
      %v1451 = vmul.bf16 1065369472, %v1450
      %v1452 = vrcp.bf16.pop %v1432
      %v1453 = vmul.bf16 1065369472, %v1452
      %v1454 = vrcp.bf16.pop %v1433
      %v1455 = vmul.bf16 1065369472, %v1454
      %v1456 = vrcp.bf16.pop %v1434
      %v1457 = vmul.bf16 1065369472, %v1456
      %v1458 = vrcp.bf16.pop %v1435
      %v1459 = vmul.bf16 1065369472, %v1458
      %v1460 = vrcp.bf16.pop %v1436
      %v1461 = vmul.bf16 1065369472, %v1460
      %v1462 = vrcp.bf16.pop %v1437
      %v1463 = vmul.bf16 1065369472, %v1462
      %v1464 = vrcp.bf16.pop %v1438
      %v1465 = vmul.bf16 1065369472, %v1464
      %v1466 = vrcp.bf16.pop %v1439
      %v1467 = vmul.bf16 1065369472, %v1466
      %v1468 = vrcp.bf16.pop %v1440
      %v1469 = vmul.bf16 1065369472, %v1468
      %v1470 = vrcp.bf16.pop %v1441
      %v1471 = vmul.bf16 1065369472, %v1470
      %v1472 = vrcp.bf16.pop %v1442
      %v1473 = vmul.bf16 1065369472, %v1472
      %v1474 = vrcp.bf16.pop %v1443
      %v1475 = vmul.bf16 1065369472, %v1474
      %v1476 = vmul.bf16 %v1445, 1065893768
      %v1477 = vmul.bf16 %v1447, 1065893768
      %v1478 = vmul.bf16 %v1449, 1065893768
      %v1479 = vmul.bf16 %v1451, 1065893768
      %v1480 = vmul.bf16 %v1453, 1065893768
      %v1481 = vmul.bf16 %v1455, 1065893768
      %v1482 = vmul.bf16 %v1457, 1065893768
      %v1483 = vmul.bf16 %v1459, 1065893768
      %v1484 = vmul.bf16 %v1461, 1065893768
      %v1485 = vmul.bf16 %v1463, 1065893768
      %v1486 = vmul.bf16 %v1465, 1065893768
      %v1487 = vmul.bf16 %v1467, 1065893768
      %v1488 = vmul.bf16 %v1469, 1065893768
      %v1489 = vmul.bf16 %v1471, 1065893768
      %v1490 = vmul.bf16 %v1473, 1065893768
      %v1491 = vmul.bf16 %v1475, 1065893768
      %v1492 = vadd.bf16 %v1476, 3216687034
      %v1493 = vadd.bf16 %v1477, 3216687034
      %v1494 = vadd.bf16 %v1478, 3216687034
      %v1495 = vadd.bf16 %v1479, 3216687034
      %v1496 = vadd.bf16 %v1480, 3216687034
      %v1497 = vadd.bf16 %v1481, 3216687034
      %v1498 = vadd.bf16 %v1482, 3216687034
      %v1499 = vadd.bf16 %v1483, 3216687034
      %v1500 = vadd.bf16 %v1484, 3216687034
      %v1501 = vadd.bf16 %v1485, 3216687034
      %v1502 = vadd.bf16 %v1486, 3216687034
      %v1503 = vadd.bf16 %v1487, 3216687034
      %v1504 = vadd.bf16 %v1488, 3216687034
      %v1505 = vadd.bf16 %v1489, 3216687034
      %v1506 = vadd.bf16 %v1490, 3216687034
      %v1507 = vadd.bf16 %v1491, 3216687034
      %v1508 = vmul.bf16 %v1445, %v1492
      %v1509 = vmul.bf16 %v1447, %v1493
      %v1510 = vmul.bf16 %v1449, %v1494
      %v1511 = vmul.bf16 %v1451, %v1495
      %v1512 = vmul.bf16 %v1453, %v1496
      %v1513 = vmul.bf16 %v1455, %v1497
      %v1514 = vmul.bf16 %v1457, %v1498
      %v1515 = vmul.bf16 %v1459, %v1499
      %v1516 = vmul.bf16 %v1461, %v1500
      %v1517 = vmul.bf16 %v1463, %v1501
      %v1518 = vmul.bf16 %v1465, %v1502
      %v1519 = vmul.bf16 %v1467, %v1503
      %v1520 = vmul.bf16 %v1469, %v1504
      %v1521 = vmul.bf16 %v1471, %v1505
      %v1522 = vmul.bf16 %v1473, %v1506
      %v1523 = vmul.bf16 %v1475, %v1507
      %v1524 = vadd.bf16 %v1508, 1068908470
      %v1525 = vadd.bf16 %v1509, 1068908470
      %v1526 = vadd.bf16 %v1510, 1068908470
      %v1527 = vadd.bf16 %v1511, 1068908470
      %v1528 = vadd.bf16 %v1512, 1068908470
      %v1529 = vadd.bf16 %v1513, 1068908470
      %v1530 = vadd.bf16 %v1514, 1068908470
      %v1531 = vadd.bf16 %v1515, 1068908470
      %v1532 = vadd.bf16 %v1516, 1068908470
      %v1533 = vadd.bf16 %v1517, 1068908470
      %v1534 = vadd.bf16 %v1518, 1068908470
      %v1535 = vadd.bf16 %v1519, 1068908470
      %v1536 = vadd.bf16 %v1520, 1068908470
      %v1537 = vadd.bf16 %v1521, 1068908470
      %v1538 = vadd.bf16 %v1522, 1068908470
      %v1539 = vadd.bf16 %v1523, 1068908470
      %v1540 = vmul.bf16 %v1445, %v1524
      %v1541 = vmul.bf16 %v1447, %v1525
      %v1542 = vmul.bf16 %v1449, %v1526
      %v1543 = vmul.bf16 %v1451, %v1527
      %v1544 = vmul.bf16 %v1453, %v1528
      %v1545 = vmul.bf16 %v1455, %v1529
      %v1546 = vmul.bf16 %v1457, %v1530
      %v1547 = vmul.bf16 %v1459, %v1531
      %v1548 = vmul.bf16 %v1461, %v1532
      %v1549 = vmul.bf16 %v1463, %v1533
      %v1550 = vmul.bf16 %v1465, %v1534
      %v1551 = vmul.bf16 %v1467, %v1535
      %v1552 = vmul.bf16 %v1469, %v1536
      %v1553 = vmul.bf16 %v1471, %v1537
      %v1554 = vmul.bf16 %v1473, %v1538
      %v1555 = vmul.bf16 %v1475, %v1539
      %v1556 = vadd.bf16 %v1540, 3197288082
      %v1557 = vadd.bf16 %v1541, 3197288082
      %v1558 = vadd.bf16 %v1542, 3197288082
      %v1559 = vadd.bf16 %v1543, 3197288082
      %v1560 = vadd.bf16 %v1544, 3197288082
      %v1561 = vadd.bf16 %v1545, 3197288082
      %v1562 = vadd.bf16 %v1546, 3197288082
      %v1563 = vadd.bf16 %v1547, 3197288082
      %v1564 = vadd.bf16 %v1548, 3197288082
      %v1565 = vadd.bf16 %v1549, 3197288082
      %v1566 = vadd.bf16 %v1550, 3197288082
      %v1567 = vadd.bf16 %v1551, 3197288082
      %v1568 = vadd.bf16 %v1552, 3197288082
      %v1569 = vadd.bf16 %v1553, 3197288082
      %v1570 = vadd.bf16 %v1554, 3197288082
      %v1571 = vadd.bf16 %v1555, 3197288082
      %v1572 = vmul.bf16 %v1445, %v1556
      %v1573 = vmul.bf16 %v1447, %v1557
      %v1574 = vmul.bf16 %v1449, %v1558
      %v1575 = vmul.bf16 %v1451, %v1559
      %v1576 = vmul.bf16 %v1453, %v1560
      %v1577 = vmul.bf16 %v1455, %v1561
      %v1578 = vmul.bf16 %v1457, %v1562
      %v1579 = vmul.bf16 %v1459, %v1563
      %v1580 = vmul.bf16 %v1461, %v1564
      %v1581 = vmul.bf16 %v1463, %v1565
      %v1582 = vmul.bf16 %v1465, %v1566
      %v1583 = vmul.bf16 %v1467, %v1567
      %v1584 = vmul.bf16 %v1469, %v1568
      %v1585 = vmul.bf16 %v1471, %v1569
      %v1586 = vmul.bf16 %v1473, %v1570
      %v1587 = vmul.bf16 %v1475, %v1571
      %v1588 = vadd.bf16 %v1572, 1048723074
      %v1589 = vadd.bf16 %v1573, 1048723074
      %v1590 = vadd.bf16 %v1574, 1048723074
      %v1591 = vadd.bf16 %v1575, 1048723074
      %v1592 = vadd.bf16 %v1576, 1048723074
      %v1593 = vadd.bf16 %v1577, 1048723074
      %v1594 = vadd.bf16 %v1578, 1048723074
      %v1595 = vadd.bf16 %v1579, 1048723074
      %v1596 = vadd.bf16 %v1580, 1048723074
      %v1597 = vadd.bf16 %v1581, 1048723074
      %v1598 = vadd.bf16 %v1582, 1048723074
      %v1599 = vadd.bf16 %v1583, 1048723074
      %v1600 = vadd.bf16 %v1584, 1048723074
      %v1601 = vadd.bf16 %v1585, 1048723074
      %v1602 = vadd.bf16 %v1586, 1048723074
      %v1603 = vadd.bf16 %v1587, 1048723074
      %v1604 = vmul.bf16 %v1445, %v1588
      %v1605 = vmul.bf16 %v1447, %v1589
      %v1606 = vmul.bf16 %v1449, %v1590
      %v1607 = vmul.bf16 %v1451, %v1591
      %v1608 = vmul.bf16 %v1453, %v1592
      %v1609 = vmul.bf16 %v1455, %v1593
      %v1610 = vmul.bf16 %v1457, %v1594
      %v1611 = vmul.bf16 %v1459, %v1595
      %v1612 = vmul.bf16 %v1461, %v1596
      %v1613 = vmul.bf16 %v1463, %v1597
      %v1614 = vmul.bf16 %v1465, %v1598
      %v1615 = vmul.bf16 %v1467, %v1599
      %v1616 = vmul.bf16 %v1469, %v1600
      %v1617 = vmul.bf16 %v1471, %v1601
      %v1618 = vmul.bf16 %v1473, %v1602
      %v1619 = vmul.bf16 %v1475, %v1603
      %v1620 = vmul.bf16 %v1396, %v1396
      %v1621 = vmul.bf16 %v1397, %v1397
      %v1622 = vmul.bf16 %v1398, %v1398
      %v1623 = vmul.bf16 %v1399, %v1399
      %v1624 = vmul.bf16 %v1400, %v1400
      %v1625 = vmul.bf16 %v1401, %v1401
      %v1626 = vmul.bf16 %v1402, %v1402
      %v1627 = vmul.bf16 %v1403, %v1403
      %v1628 = vmul.bf16 %v1404, %v1404
      %v1629 = vmul.bf16 %v1405, %v1405
      %v1630 = vmul.bf16 %v1406, %v1406
      %v1631 = vmul.bf16 %v1407, %v1407
      %v1632 = vmul.bf16 %v1408, %v1408
      %v1633 = vmul.bf16 %v1409, %v1409
      %v1634 = vmul.bf16 %v1410, %v1410
      %v1635 = vmul.bf16 %v1411, %v1411
      %v1636 = vsub.bf16 0, %v1620
      %v1637 = vsub.bf16 0, %v1621
      %v1638 = vsub.bf16 0, %v1622
      %v1639 = vsub.bf16 0, %v1623
      %v1640 = vsub.bf16 0, %v1624
      %v1641 = vsub.bf16 0, %v1625
      %v1642 = vsub.bf16 0, %v1626
      %v1643 = vsub.bf16 0, %v1627
      %v1644 = vsub.bf16 0, %v1628
      %v1645 = vsub.bf16 0, %v1629
      %v1646 = vsub.bf16 0, %v1630
      %v1647 = vsub.bf16 0, %v1631
      %v1648 = vsub.bf16 0, %v1632
      %v1649 = vsub.bf16 0, %v1633
      %v1650 = vsub.bf16 0, %v1634
      %v1651 = vsub.bf16 0, %v1635
      %v1653 = vmul.bf16 %v1636, 1069105081
      %v1654 = vpow.bf16.pop %v1653
      %v1656 = vmul.bf16 %v1637, 1069105081
      %v1657 = vpow.bf16.pop %v1656
      %v1659 = vmul.bf16 %v1638, 1069105081
      %v1660 = vpow.bf16.pop %v1659
      %v1662 = vmul.bf16 %v1639, 1069105081
      %v1663 = vpow.bf16.pop %v1662
      %v1665 = vmul.bf16 %v1640, 1069105081
      %v1666 = vpow.bf16.pop %v1665
      %v1668 = vmul.bf16 %v1641, 1069105081
      %v1669 = vpow.bf16.pop %v1668
      %v1671 = vmul.bf16 %v1642, 1069105081
      %v1672 = vpow.bf16.pop %v1671
      %v1674 = vmul.bf16 %v1643, 1069105081
      %v1675 = vpow.bf16.pop %v1674
      %v1677 = vmul.bf16 %v1644, 1069105081
      %v1678 = vpow.bf16.pop %v1677
      %v1680 = vmul.bf16 %v1645, 1069105081
      %v1681 = vpow.bf16.pop %v1680
      %v1683 = vmul.bf16 %v1646, 1069105081
      %v1684 = vpow.bf16.pop %v1683
      %v1686 = vmul.bf16 %v1647, 1069105081
      %v1687 = vpow.bf16.pop %v1686
      %v1689 = vmul.bf16 %v1648, 1069105081
      %v1690 = vpow.bf16.pop %v1689
      %v1692 = vmul.bf16 %v1649, 1069105081
      %v1693 = vpow.bf16.pop %v1692
      %v1695 = vmul.bf16 %v1650, 1069105081
      %v1696 = vpow.bf16.pop %v1695
      %v1698 = vmul.bf16 %v1651, 1069105081
      %v1699 = vpow.bf16.pop %v1698
      %v1700 = vmul.bf16 %v1604, %v1654
      %v1701 = vmul.bf16 %v1605, %v1657
      %v1702 = vmul.bf16 %v1606, %v1660
      %v1703 = vmul.bf16 %v1607, %v1663
      %v1704 = vmul.bf16 %v1608, %v1666
      %v1705 = vmul.bf16 %v1609, %v1669
      %v1706 = vmul.bf16 %v1610, %v1672
      %v1707 = vmul.bf16 %v1611, %v1675
      %v1708 = vmul.bf16 %v1612, %v1678
      %v1709 = vmul.bf16 %v1613, %v1681
      %v1710 = vmul.bf16 %v1614, %v1684
      %v1711 = vmul.bf16 %v1615, %v1687
      %v1712 = vmul.bf16 %v1616, %v1690
      %v1713 = vmul.bf16 %v1617, %v1693
      %v1714 = vmul.bf16 %v1618, %v1696
      %v1715 = vmul.bf16 %v1619, %v1699
      %v1716 = vsub.bf16 1065369472, %v1700
      %v1717 = vsub.bf16 1065369472, %v1701
      %v1718 = vsub.bf16 1065369472, %v1702
      %v1719 = vsub.bf16 1065369472, %v1703
      %v1720 = vsub.bf16 1065369472, %v1704
      %v1721 = vsub.bf16 1065369472, %v1705
      %v1722 = vsub.bf16 1065369472, %v1706
      %v1723 = vsub.bf16 1065369472, %v1707
      %v1724 = vsub.bf16 1065369472, %v1708
      %v1725 = vsub.bf16 1065369472, %v1709
      %v1726 = vsub.bf16 1065369472, %v1710
      %v1727 = vsub.bf16 1065369472, %v1711
      %v1728 = vsub.bf16 1065369472, %v1712
      %v1729 = vsub.bf16 1065369472, %v1713
      %v1730 = vsub.bf16 1065369472, %v1714
      %v1731 = vsub.bf16 1065369472, %v1715
      %vm1732 = vcmp.lt.bf16.partialorder %v1380, 0
      %vm1733 = vcmp.lt.bf16.partialorder %v1381, 0
      %vm1734 = vcmp.lt.bf16.partialorder %v1382, 0
      %vm1735 = vcmp.lt.bf16.partialorder %v1383, 0
      %vm1736 = vcmp.lt.bf16.partialorder %v1384, 0
      %vm1737 = vcmp.lt.bf16.partialorder %v1385, 0
      %vm1738 = vcmp.lt.bf16.partialorder %v1386, 0
      %vm1739 = vcmp.lt.bf16.partialorder %v1387, 0
      %vm1740 = vcmp.lt.bf16.partialorder %v1388, 0
      %vm1741 = vcmp.lt.bf16.partialorder %v1389, 0
      %vm1742 = vcmp.lt.bf16.partialorder %v1390, 0
      %vm1743 = vcmp.lt.bf16.partialorder %v1391, 0
      %vm1744 = vcmp.lt.bf16.partialorder %v1392, 0
      %vm1745 = vcmp.lt.bf16.partialorder %v1393, 0
      %vm1746 = vcmp.lt.bf16.partialorder %v1394, 0
      %vm1747 = vcmp.lt.bf16.partialorder %v1395, 0
      %v1748 = vsub.bf16 0, %v1716
      %v1749 = vsub.bf16 0, %v1717
      %v1750 = vsub.bf16 0, %v1718
      %v1751 = vsub.bf16 0, %v1719
      %v1752 = vsub.bf16 0, %v1720
      %v1753 = vsub.bf16 0, %v1721
      %v1754 = vsub.bf16 0, %v1722
      %v1755 = vsub.bf16 0, %v1723
      %v1756 = vsub.bf16 0, %v1724
      %v1757 = vsub.bf16 0, %v1725
      %v1758 = vsub.bf16 0, %v1726
      %v1759 = vsub.bf16 0, %v1727
      %v1760 = vsub.bf16 0, %v1728
      %v1761 = vsub.bf16 0, %v1729
      %v1762 = vsub.bf16 0, %v1730
      %v1763 = vsub.bf16 0, %v1731
      %v1764 = vsel %vm1732, %v1748, %v1716
      %v1765 = vsel %vm1733, %v1749, %v1717
      %v1766 = vsel %vm1734, %v1750, %v1718
      %v1767 = vsel %vm1735, %v1751, %v1719
      %v1768 = vsel %vm1736, %v1752, %v1720
      %v1769 = vsel %vm1737, %v1753, %v1721
      %v1770 = vsel %vm1738, %v1754, %v1722
      %v1771 = vsel %vm1739, %v1755, %v1723
      %v1772 = vsel %vm1740, %v1756, %v1724
      %v1773 = vsel %vm1741, %v1757, %v1725
      %v1774 = vsel %vm1742, %v1758, %v1726
      %v1775 = vsel %vm1743, %v1759, %v1727
      %v1776 = vsel %vm1744, %v1760, %v1728
      %v1777 = vsel %vm1745, %v1761, %v1729
      %v1778 = vsel %vm1746, %v1762, %v1730
      %v1779 = vsel %vm1747, %v1763, %v1731
      %v1780 = vadd.bf16 %v1764, 1065369472
      %v1781 = vadd.bf16 %v1765, 1065369472
      %v1782 = vadd.bf16 %v1766, 1065369472
      %v1783 = vadd.bf16 %v1767, 1065369472
      %v1784 = vadd.bf16 %v1768, 1065369472
      %v1785 = vadd.bf16 %v1769, 1065369472
      %v1786 = vadd.bf16 %v1770, 1065369472
      %v1787 = vadd.bf16 %v1771, 1065369472
      %v1788 = vadd.bf16 %v1772, 1065369472
      %v1789 = vadd.bf16 %v1773, 1065369472
      %v1790 = vadd.bf16 %v1774, 1065369472
      %v1791 = vadd.bf16 %v1775, 1065369472
      %v1792 = vadd.bf16 %v1776, 1065369472
      %v1793 = vadd.bf16 %v1777, 1065369472
      %v1794 = vadd.bf16 %v1778, 1065369472
      %v1795 = vadd.bf16 %v1779, 1065369472
      %v1796 = vmul.bf16 %v1364, %v1780
      %v1797 = vmul.bf16 %v1365, %v1781
      %v1798 = vmul.bf16 %v1366, %v1782
      %v1799 = vmul.bf16 %v1367, %v1783
      %v1800 = vmul.bf16 %v1368, %v1784
      %v1801 = vmul.bf16 %v1369, %v1785
      %v1802 = vmul.bf16 %v1370, %v1786
      %v1803 = vmul.bf16 %v1371, %v1787
      %v1804 = vmul.bf16 %v1372, %v1788
      %v1805 = vmul.bf16 %v1373, %v1789
      %v1806 = vmul.bf16 %v1374, %v1790
      %v1807 = vmul.bf16 %v1375, %v1791
      %v1808 = vmul.bf16 %v1376, %v1792
      %v1809 = vmul.bf16 %v1377, %v1793
      %v1810 = vmul.bf16 %v1378, %v1794
      %v1811 = vmul.bf16 %v1379, %v1795
      %v1812 = vld [vmem:[%s5] sm:$0xf]
      %v1813 = vld [vmem:[%s5 + $0x4] sm:$0xf]
      %v1814 = vld [vmem:[%s5 + $0x8] sm:$0xf]
      %v1815 = vld [vmem:[%s5 + $0xc] sm:$0xf]
      %v1816 = vld [vmem:[%s5 + $0x10] sm:$0xf]
      %v1817 = vld [vmem:[%s5 + $0x14] sm:$0xf]
      %v1818 = vld [vmem:[%s5 + $0x18] sm:$0xf]
      %v1819 = vld [vmem:[%s5 + $0x1c] sm:$0xf]
      %v1820 = vld [vmem:[%s5 + $0x20] sm:$0xf]
      %v1821 = vld [vmem:[%s5 + $0x24] sm:$0xf]
      %v1822 = vld [vmem:[%s5 + $0x28] sm:$0xf]
      %v1823 = vld [vmem:[%s5 + $0x2c] sm:$0xf]
      %v1824 = vld [vmem:[%s5 + $0x30] sm:$0xf]
      %v1825 = vld [vmem:[%s5 + $0x34] sm:$0xf]
      %v1826 = vld [vmem:[%s5 + $0x38] sm:$0xf]
      %v1827 = vld [vmem:[%s5 + $0x3c] sm:$0xf]
      %v1828 = vld [vmem:[%s6] sm:$0x1]
      %v1830 = vlaneseq
      %v1831 = vshrl.u32 %v1830, 7
      %v1832 = vsub.s32 0, %v1831
      %v1833 = vrot.slane %v1828, %v1832
      %v1851 = vunpack.c.l.b16 %v1812
      %v1852 = vunpack.c.l.b16 %v1813
      %v1853 = vunpack.c.l.b16 %v1814
      %v1854 = vunpack.c.l.b16 %v1815
      %v1855 = vunpack.c.l.b16 %v1816
      %v1856 = vunpack.c.l.b16 %v1817
      %v1857 = vunpack.c.l.b16 %v1818
      %v1858 = vunpack.c.l.b16 %v1819
      %v1859 = vunpack.c.l.b16 %v1820
      %v1860 = vunpack.c.l.b16 %v1821
      %v1861 = vunpack.c.l.b16 %v1822
      %v1862 = vunpack.c.l.b16 %v1823
      %v1863 = vunpack.c.l.b16 %v1824
      %v1864 = vunpack.c.l.b16 %v1825
      %v1865 = vunpack.c.l.b16 %v1826
      %v1866 = vunpack.c.l.b16 %v1827
      %v1867 = vpack.c.b16 %v1852, %v1851
      %v1868 = vpack.c.b16 %v1854, %v1853
      %v1869 = vpack.c.b16 %v1856, %v1855
      %v1870 = vpack.c.b16 %v1858, %v1857
      %v1871 = vpack.c.b16 %v1860, %v1859
      %v1872 = vpack.c.b16 %v1862, %v1861
      %v1873 = vpack.c.b16 %v1864, %v1863
      %v1874 = vpack.c.b16 %v1866, %v1865
      %1883 = vmatprep.subr.bf16.mxu0 0
      %1884 = vmatpush1.bf16.msra.mxu0 %v1867
      %1885 = vmatprep.subr.bf16.mxu0 0
      %1886 = vmatpush1.bf16.msra.mxu0 %v1868
      %1887 = vmatprep.subr.bf16.mxu0 0
      %1888 = vmatpush1.bf16.msra.mxu0 %v1869
      %1889 = vmatprep.subr.bf16.mxu0 0
      %1890 = vmatpush1.bf16.msra.mxu0 %v1870
      %1891 = vmatprep.subr.bf16.mxu0 0
      %1892 = vmatpush1.bf16.msra.mxu0 %v1871
      %1893 = vmatprep.subr.bf16.mxu0 0
      %1894 = vmatpush1.bf16.msra.mxu0 %v1872
      %1895 = vmatprep.subr.bf16.mxu0 0
      %1896 = vmatpush1.bf16.msra.mxu0 %v1873
      %1897 = vmatprep.subr.bf16.mxu0 0
      %1898 = vmatpush1.bf16.msra.mxu0 %v1874
      %1899 = vmatprep.subr.bf16.mxu0 0
      %1900 = vmatpush1.bf16.msra.mxu0 0
      %1901 = vmatprep.subr.bf16.mxu0 0
      %1902 = vmatpush1.bf16.msra.mxu0 0
      %1903 = vmatprep.subr.bf16.mxu0 0
      %1904 = vmatpush1.bf16.msra.mxu0 0
      %1905 = vmatprep.subr.bf16.mxu0 0
      %1906 = vmatpush1.bf16.msra.mxu0 0
      %1907 = vmatprep.subr.bf16.mxu0 0
      %1908 = vmatpush1.bf16.msra.mxu0 0
      %1909 = vmatprep.subr.bf16.mxu0 0
      %1910 = vmatpush1.bf16.msra.mxu0 0
      %1911 = vmatprep.subr.bf16.mxu0 0
      %1912 = vmatpush1.bf16.msra.mxu0 0
      %1913 = vmatprep.subr.bf16.mxu0 0
      %1914 = vmatpush1.bf16.msra.mxu0 0
      %1915 = vmatprep.mubr.bf16.mxu0 0
      %1916 = vmatmul.mubr.bf16.gmra.mrb[0].mxu0 %v1796
      %v1917 = vpop.f32.mrb[0].mxu0
      %v1918 = vadd.f32 %v1833, %v1917
      %v1919 = vpop.f32.mrb[0].mxu0
      %v1920 = vpop.f32.mrb[0].mxu0
      %v1921 = vadd.f32 %v1833, %v1920
      %v1922 = vpop.f32.mrb[0].mxu0
      %1923 = vmatprep.mubr.bf16.mxu0 0
      %1924 = vmatmul.mubr.bf16.gmra.mrb[0].mxu0 %v1797
      %v1925 = vpop.f32.mrb[0].mxu0
      %v1926 = vadd.f32 %v1833, %v1925
      %v1927 = vpop.f32.mrb[0].mxu0
      %v1928 = vpop.f32.mrb[0].mxu0
      %v1929 = vadd.f32 %v1833, %v1928
      %v1930 = vpop.f32.mrb[0].mxu0
      %1931 = vmatprep.mubr.bf16.mxu0 0
      %1932 = vmatmul.mubr.bf16.gmra.mrb[0].mxu0 %v1798
      %v1933 = vpop.f32.mrb[0].mxu0
      %v1934 = vadd.f32 %v1833, %v1933
      %v1935 = vpop.f32.mrb[0].mxu0
      %v1936 = vpop.f32.mrb[0].mxu0
      %v1937 = vadd.f32 %v1833, %v1936
      %v1938 = vpop.f32.mrb[0].mxu0
      %1939 = vmatprep.mubr.bf16.mxu0 0
      %1940 = vmatmul.mubr.bf16.gmra.mrb[0].mxu0 %v1799
      %v1941 = vpop.f32.mrb[0].mxu0
      %v1942 = vadd.f32 %v1833, %v1941
      %v1943 = vpop.f32.mrb[0].mxu0
      %v1944 = vpop.f32.mrb[0].mxu0
      %v1945 = vadd.f32 %v1833, %v1944
      %v1946 = vpop.f32.mrb[0].mxu0
      %1947 = vmatprep.mubr.bf16.mxu0 0
      %1948 = vmatmul.mubr.bf16.gmra.mrb[0].mxu0 %v1800
      %v1949 = vpop.f32.mrb[0].mxu0
      %v1950 = vadd.f32 %v1833, %v1949
      %v1951 = vpop.f32.mrb[0].mxu0
      %v1952 = vpop.f32.mrb[0].mxu0
      %v1953 = vadd.f32 %v1833, %v1952
      %v1954 = vpop.f32.mrb[0].mxu0
      %1955 = vmatprep.mubr.bf16.mxu0 0
      %1956 = vmatmul.mubr.bf16.gmra.mrb[0].mxu0 %v1801
      %v1957 = vpop.f32.mrb[0].mxu0
      %v1958 = vadd.f32 %v1833, %v1957
      %v1959 = vpop.f32.mrb[0].mxu0
      %v1960 = vpop.f32.mrb[0].mxu0
      %v1961 = vadd.f32 %v1833, %v1960
      %v1962 = vpop.f32.mrb[0].mxu0
      %1963 = vmatprep.mubr.bf16.mxu0 0
      %1964 = vmatmul.mubr.bf16.gmra.mrb[0].mxu0 %v1802
      %v1965 = vpop.f32.mrb[0].mxu0
      %v1966 = vadd.f32 %v1833, %v1965
      %v1967 = vpop.f32.mrb[0].mxu0
      %v1968 = vpop.f32.mrb[0].mxu0
      %v1969 = vadd.f32 %v1833, %v1968
      %v1970 = vpop.f32.mrb[0].mxu0
      %1971 = vmatprep.mubr.bf16.mxu0 0
      %1972 = vmatmul.mubr.bf16.gmra.mrb[0].mxu0 %v1803
      %v1973 = vpop.f32.mrb[0].mxu0
      %v1974 = vadd.f32 %v1833, %v1973
      %v1975 = vpop.f32.mrb[0].mxu0
      %v1976 = vpop.f32.mrb[0].mxu0
      %v1977 = vadd.f32 %v1833, %v1976
      %v1978 = vpop.f32.mrb[0].mxu0
      %1979 = vmatprep.mubr.bf16.mxu0 0
      %1980 = vmatmul.mubr.bf16.gmra.mrb[0].mxu0 %v1804
      %v1981 = vpop.f32.mrb[0].mxu0
      %v1982 = vadd.f32 %v1833, %v1981
      %v1983 = vpop.f32.mrb[0].mxu0
      %v1984 = vpop.f32.mrb[0].mxu0
      %v1985 = vadd.f32 %v1833, %v1984
      %v1986 = vpop.f32.mrb[0].mxu0
      %1987 = vmatprep.mubr.bf16.mxu0 0
      %1988 = vmatmul.mubr.bf16.gmra.mrb[0].mxu0 %v1805
      %v1989 = vpop.f32.mrb[0].mxu0
      %v1990 = vadd.f32 %v1833, %v1989
      %v1991 = vpop.f32.mrb[0].mxu0
      %v1992 = vpop.f32.mrb[0].mxu0
      %v1993 = vadd.f32 %v1833, %v1992
      %v1994 = vpop.f32.mrb[0].mxu0
      %1995 = vmatprep.mubr.bf16.mxu0 0
      %1996 = vmatmul.mubr.bf16.gmra.mrb[0].mxu0 %v1806
      %v1997 = vpop.f32.mrb[0].mxu0
      %v1998 = vadd.f32 %v1833, %v1997
      %v1999 = vpop.f32.mrb[0].mxu0
      %v2000 = vpop.f32.mrb[0].mxu0
      %v2001 = vadd.f32 %v1833, %v2000
      %v2002 = vpop.f32.mrb[0].mxu0
      %2003 = vmatprep.mubr.bf16.mxu0 0
      %2004 = vmatmul.mubr.bf16.gmra.mrb[0].mxu0 %v1807
      %v2005 = vpop.f32.mrb[0].mxu0
      %v2006 = vadd.f32 %v1833, %v2005
      %v2007 = vpop.f32.mrb[0].mxu0
      %v2008 = vpop.f32.mrb[0].mxu0
      %v2009 = vadd.f32 %v1833, %v2008
      %v2010 = vpop.f32.mrb[0].mxu0
      %2011 = vmatprep.mubr.bf16.mxu0 0
      %2012 = vmatmul.mubr.bf16.gmra.mrb[0].mxu0 %v1808
      %v2013 = vpop.f32.mrb[0].mxu0
      %v2014 = vadd.f32 %v1833, %v2013
      %v2015 = vpop.f32.mrb[0].mxu0
      %v2016 = vpop.f32.mrb[0].mxu0
      %v2017 = vadd.f32 %v1833, %v2016
      %v2018 = vpop.f32.mrb[0].mxu0
      %2019 = vmatprep.mubr.bf16.mxu0 0
      %2020 = vmatmul.mubr.bf16.gmra.mrb[0].mxu0 %v1809
      %v2021 = vpop.f32.mrb[0].mxu0
      %v2022 = vadd.f32 %v1833, %v2021
      %v2023 = vpop.f32.mrb[0].mxu0
      %v2024 = vpop.f32.mrb[0].mxu0
      %v2025 = vadd.f32 %v1833, %v2024
      %v2026 = vpop.f32.mrb[0].mxu0
      %2027 = vmatprep.mubr.bf16.mxu0 0
      %2028 = vmatmul.mubr.bf16.gmra.mrb[0].mxu0 %v1810
      %v2029 = vpop.f32.mrb[0].mxu0
      %v2030 = vadd.f32 %v1833, %v2029
      %v2031 = vpop.f32.mrb[0].mxu0
      %v2032 = vpop.f32.mrb[0].mxu0
      %v2033 = vadd.f32 %v1833, %v2032
      %v2034 = vpop.f32.mrb[0].mxu0
      %2035 = vmatprep.mubr.bf16.mxu0 0
      %2036 = vmatmul.mubr.bf16.gmra.mrb[0].mxu0 %v1811
      %v2037 = vpop.f32.mrb[0].mxu0
      %v2038 = vadd.f32 %v1833, %v2037
      %v2039 = vpop.f32.mrb[0].mxu0
      %v2040 = vpop.f32.mrb[0].mxu0
      %v2041 = vadd.f32 %v1833, %v2040
      %v2042 = vpop.f32.mrb[0].mxu0
      %2043 = vdwg.mxu0
      %2044 = vst [vmem:[%s280] sm:$0xff] %v1918
      %2045 = vst [vmem:[%s280 + $0x8] sm:$0xff] %v1921
      %2046 = vst [vmem:[%s280 + $0x10] sm:$0xff] %v1926
      %2047 = vst [vmem:[%s280 + $0x18] sm:$0xff] %v1929
      %2048 = vst [vmem:[%s280 + $0x20] sm:$0xff] %v1934
      %2049 = vst [vmem:[%s280 + $0x28] sm:$0xff] %v1937
      %2050 = vst [vmem:[%s280 + $0x30] sm:$0xff] %v1942
      %2051 = vst [vmem:[%s280 + $0x38] sm:$0xff] %v1945
      %2052 = vst [vmem:[%s280 + $0x40] sm:$0xff] %v1950
      %2053 = vst [vmem:[%s280 + $0x48] sm:$0xff] %v1953
      %2054 = vst [vmem:[%s280 + $0x50] sm:$0xff] %v1958
      %2055 = vst [vmem:[%s280 + $0x58] sm:$0xff] %v1961
      %2056 = vst [vmem:[%s280 + $0x60] sm:$0xff] %v1966
      %2057 = vst [vmem:[%s280 + $0x68] sm:$0xff] %v1969
      %2058 = vst [vmem:[%s280 + $0x70] sm:$0xff] %v1974
      %2059 = vst [vmem:[%s280 + $0x78] sm:$0xff] %v1977
      %2060 = vst [vmem:[%s280 + $0x80] sm:$0xff] %v1982
      %2061 = vst [vmem:[%s280 + $0x88] sm:$0xff] %v1985
      %2062 = vst [vmem:[%s280 + $0x90] sm:$0xff] %v1990
      %2063 = vst [vmem:[%s280 + $0x98] sm:$0xff] %v1993
      %2064 = vst [vmem:[%s280 + $0xa0] sm:$0xff] %v1998
      %2065 = vst [vmem:[%s280 + $0xa8] sm:$0xff] %v2001
      %2066 = vst [vmem:[%s280 + $0xb0] sm:$0xff] %v2006
      %2067 = vst [vmem:[%s280 + $0xb8] sm:$0xff] %v2009
      %2068 = vst [vmem:[%s280 + $0xc0] sm:$0xff] %v2014
      %2069 = vst [vmem:[%s280 + $0xc8] sm:$0xff] %v2017
      %2070 = vst [vmem:[%s280 + $0xd0] sm:$0xff] %v2022
      %2071 = vst [vmem:[%s280 + $0xd8] sm:$0xff] %v2025
      %2072 = vst [vmem:[%s280 + $0xe0] sm:$0xff] %v2030
      %2073 = vst [vmem:[%s280 + $0xe8] sm:$0xff] %v2033
      %2074 = vst [vmem:[%s280 + $0xf0] sm:$0xff] %v2038
      %2075 = vst [vmem:[%s280 + $0xf8] sm:$0xff] %v2041
      %s2076 = smul.u32 32, %s18
      %p2077 = scmp.lt.s32.totalorder %s2076, 63
      %s2078 = scalar_select %p2077, %s2076, 63
      %s2079 = smul.addr %s2078, 8
      %s2080 = scalar_lea.vmem %s7, %s2079
      // Predicated region
      $region49: #{model_forward.1} parent=47 // pred_check
        %p2081 = pneg %p188
      $region50: #{model_forward.1} parent=47 // pred_check_branch
        %2083 = sbr.rel (%p2081) target = $region52
      $region51: #{model_forward.1} parent=47 // pred_region
        %s2084 = smul.u32 32, %s18
      $region52: #{model_forward.1} parent=47 // pred_fallthru
        _
    $region48: #{model_forward.1} parent=5 // pred_fallthru
      _
    %p2085 = scmp.le.s32.totalorder 2, %s13
    // Predicated region
    $region53: #{model_forward.1} parent=5 // pred_check
      %p2086 = pneg %p2085
    $region54: #{model_forward.1} parent=5 // pred_check_branch
      %2088 = sbr.rel (%p2086) target = $region56
    $region55: #{model_forward.1} parent=5 // pred_region
      %s2089 = ssub.s32 %s13, 2
      // Predicated region
      $region57: #{model_forward.1} parent=55 // pred_check
        %p2090 = pneg %p194
      $region58: #{model_forward.1} parent=55 // pred_check_branch
        %2092 = sbr.rel (%p2090) target = $region60
      $region59: #{model_forward.1} parent=55 // pred_region
        %s2093 = smul.u32 32, %s19
        %p2094 = scmp.lt.s32.totalorder %s2093, 63
        %s2095 = scalar_select %p2094, %s2093, 63
        %s2096 = smul.addr %s2095, 8
        %s2097 = scalar_lea.vmem %s7, %s2096
      $region60: #{model_forward.1} parent=55 // pred_fallthru
        _
    $region56: #{model_forward.1} parent=5 // pred_fallthru
      _
  $region6: #{model_forward.1} parent=0 // loop_footer
    %s17 = sadd.s32 1, %s13
  $region7: #{model_forward.1} parent=0 // loop_footer_branch
    %12 = sbr.rel target = $region3
  $region8: #{model_forward.1} parent=0 // loop_exit
    _

// kernel: model_forward.1
$region0: #{model_forward.1}
  #allocation0 [shape = 'u32[]', space=smem, size = 0x4, offset = 0x4, fixed_abs, tag = 'smem constant byte address 0x4 - core index']
  #allocation1 [shape = 'u32[144,128]{1,0:T(1,128)}', space=vmem, size = 0x12000, scoped, tag = 'internal scratch']
  %s0 = inlined_call_operand.vmem [shape: bf16[512,128], index: 0, kind: input, shape index: {}]
  %s1 = inlined_call_operand.vmem [shape: bf16[128,128], index: 1, kind: input, shape index: {}]
  %s2 = inlined_call_operand.vmem [shape: f32[1,128], index: 2, kind: input, shape index: {}]
  %s3 = inlined_call_operand.vmem [shape: bf16[128,128], index: 3, kind: input, shape index: {}]
  %s4 = inlined_call_operand.vmem [shape: f32[1,128], index: 4, kind: input, shape index: {}]
  %s5 = inlined_call_operand.vmem [shape: bf16[128,128], index: 5, kind: input, shape index: {}]
  %s6 = inlined_call_operand.vmem [shape: f32[1,128], index: 6, kind: input, shape index: {}]
  %s7 = inlined_call_operand.vmem [shape: f32[512,128], index: 7, kind: output, shape index: {}]
  %s8 = sld [smem:[#allocation0]]
  $region61: #{model_forward.1} parent=0
    _
  %s10 = ssub.s32 1, %s8
  %s11 = scalar_select 0, %s10, %s8
  loop: start=0, step=1, limit=4
  $region2: #{model_forward.1} parent=0 // loop_pre_header
    _
  $region3: #{model_forward.1} parent=0 // loop_header
    %s13 = sphi 0, %s17
    %p14 = scmp.ge.s32.totalorder %s13, 4
    %s23 = sphi 0, %s25
    %s26 = sphi 0, %s23
    %s27 = sphi 0, %s26
    %s43 = sphi 0, %s27
    %s47 = sphi 0, %s47
    %s49 = sphi 0, %s47
    %s50 = sphi 0, %s49
    %s64 = sphi 0, %s50
    %s68 = sphi 0, %s68
    %s70 = sphi 0, %s68
    %s71 = sphi 0, %s70
    %s85 = sphi 0, %s71
    %s89 = sphi 0, %s89
    %s91 = sphi 0, %s89
    %s92 = sphi 0, %s91
    %s106 = sphi 0, %s92
    %s110 = sphi 0, %s110
    %s112 = sphi 0, %s110
    %s113 = sphi 0, %s112
    %s127 = sphi 0, %s113
    %s131 = sphi 0, %s131
    %s133 = sphi 0, %s131
    %s134 = sphi 0, %s133
    %s148 = sphi 0, %s134
    %s152 = sphi 0, %s152
    %s154 = sphi 0, %s152
    %s155 = sphi 0, %s154
    %s169 = sphi 0, %s155
    %s175 = sphi 0, %s177
    %s178 = sphi 0, %s175
    %s179 = sphi 0, %s178
    %s195 = sphi 0, %s179
  $region4: #{model_forward.1} parent=0 // loop_header_branch
    %16 = sbr.rel (%p14) target = $region8
  $region5: #{model_forward.1} parent=0 // loop_body
    %s18 = ssub.s32 %s13, 1
    %s19 = ssub.s32 %s13, 2
    %s20 = sadd.s32 %s13, 1
    %s21 = ssub.s32 %s13, %s20
    %p22 = scmp.eq.s32.totalorder %s21, 0
    %s24 = sadd.s32 %s23, 1
    %s25 = scalar_select %p22, %s23, %s24
    %p28 = pneg %p22
    %p29 = scmp.eq.s32.totalorder %s13, 1
    %p30 = por %p28, %p29
    %p31 = scmp.ne.s32.totalorder %s23, %s26
    %p32 = scmp.eq.s32.totalorder %s13, 0
    %p33 = por %p31, %p32
    %p34 = scmp.ne.s32.totalorder %s23, %s26
    %p35 = scmp.eq.s32.totalorder %s18, 1
    %p36 = por %p34, %p35
    %p37 = scmp.ne.s32.totalorder %s26, %s27
    %p38 = scmp.eq.s32.totalorder %s18, 0
    %p39 = por %p37, %p38
    %p40 = scmp.ne.s32.totalorder %s26, %s27
    %p41 = scmp.eq.s32.totalorder %s19, 1
    %p42 = por %p40, %p41
    %p44 = scmp.ne.s32.totalorder %s27, %s43
    %p45 = scmp.eq.s32.totalorder %s19, 0
    %p46 = por %p44, %p45
    %s48 = sadd.s32 %s47, 1
    %p51 = scmp.eq.s32.totalorder %s13, 1
    %p52 = scmp.ne.s32.totalorder %s47, %s49
    %p53 = scmp.eq.s32.totalorder %s13, 0
    %p54 = por %p52, %p53
    %p55 = scmp.ne.s32.totalorder %s47, %s49
    %p56 = scmp.eq.s32.totalorder %s18, 1
    %p57 = por %p55, %p56
    %p58 = scmp.ne.s32.totalorder %s49, %s50
    %p59 = scmp.eq.s32.totalorder %s18, 0
    %p60 = por %p58, %p59
    %p61 = scmp.ne.s32.totalorder %s49, %s50
    %p62 = scmp.eq.s32.totalorder %s19, 1
    %p63 = por %p61, %p62
    %p65 = scmp.ne.s32.totalorder %s50, %s64
    %p66 = scmp.eq.s32.totalorder %s19, 0
    %p67 = por %p65, %p66
    %s69 = sadd.s32 %s68, 1
    %p72 = scmp.eq.s32.totalorder %s13, 1
    %p73 = scmp.ne.s32.totalorder %s68, %s70
    %p74 = scmp.eq.s32.totalorder %s13, 0
    %p75 = por %p73, %p74
    %p76 = scmp.ne.s32.totalorder %s68, %s70
    %p77 = scmp.eq.s32.totalorder %s18, 1
    %p78 = por %p76, %p77
    %p79 = scmp.ne.s32.totalorder %s70, %s71
    %p80 = scmp.eq.s32.totalorder %s18, 0
    %p81 = por %p79, %p80
    %p82 = scmp.ne.s32.totalorder %s70, %s71
    %p83 = scmp.eq.s32.totalorder %s19, 1
    %p84 = por %p82, %p83
    %p86 = scmp.ne.s32.totalorder %s71, %s85
    %p87 = scmp.eq.s32.totalorder %s19, 0
    %p88 = por %p86, %p87
    %s90 = sadd.s32 %s89, 1
    %p93 = scmp.eq.s32.totalorder %s13, 1
    %p94 = scmp.ne.s32.totalorder %s89, %s91
    %p95 = scmp.eq.s32.totalorder %s13, 0
    %p96 = por %p94, %p95
    %p97 = scmp.ne.s32.totalorder %s89, %s91
    %p98 = scmp.eq.s32.totalorder %s18, 1
    %p99 = por %p97, %p98
    %p100 = scmp.ne.s32.totalorder %s91, %s92
    %p101 = scmp.eq.s32.totalorder %s18, 0
    %p102 = por %p100, %p101
    %p103 = scmp.ne.s32.totalorder %s91, %s92
    %p104 = scmp.eq.s32.totalorder %s19, 1
    %p105 = por %p103, %p104
    %p107 = scmp.ne.s32.totalorder %s92, %s106
    %p108 = scmp.eq.s32.totalorder %s19, 0
    %p109 = por %p107, %p108
    %s111 = sadd.s32 %s110, 1
    %p114 = scmp.eq.s32.totalorder %s13, 1
    %p115 = scmp.ne.s32.totalorder %s110, %s112
    %p116 = scmp.eq.s32.totalorder %s13, 0
    %p117 = por %p115, %p116
    %p118 = scmp.ne.s32.totalorder %s110, %s112
    %p119 = scmp.eq.s32.totalorder %s18, 1
    %p120 = por %p118, %p119
    %p121 = scmp.ne.s32.totalorder %s112, %s113
    %p122 = scmp.eq.s32.totalorder %s18, 0
    %p123 = por %p121, %p122
    %p124 = scmp.ne.s32.totalorder %s112, %s113
    %p125 = scmp.eq.s32.totalorder %s19, 1
    %p126 = por %p124, %p125
    %p128 = scmp.ne.s32.totalorder %s113, %s127
    %p129 = scmp.eq.s32.totalorder %s19, 0
    %p130 = por %p128, %p129
    %s132 = sadd.s32 %s131, 1
    %p135 = scmp.eq.s32.totalorder %s13, 1
    %p136 = scmp.ne.s32.totalorder %s131, %s133
    %p137 = scmp.eq.s32.totalorder %s13, 0
    %p138 = por %p136, %p137
    %p139 = scmp.ne.s32.totalorder %s131, %s133
    %p140 = scmp.eq.s32.totalorder %s18, 1
    %p141 = por %p139, %p140
    %p142 = scmp.ne.s32.totalorder %s133, %s134
    %p143 = scmp.eq.s32.totalorder %s18, 0
    %p144 = por %p142, %p143
    %p145 = scmp.ne.s32.totalorder %s133, %s134
    %p146 = scmp.eq.s32.totalorder %s19, 1
    %p147 = por %p145, %p146
    %p149 = scmp.ne.s32.totalorder %s134, %s148
    %p150 = scmp.eq.s32.totalorder %s19, 0
    %p151 = por %p149, %p150
    %s153 = sadd.s32 %s152, 1
    %p156 = scmp.eq.s32.totalorder %s13, 1
    %p157 = scmp.ne.s32.totalorder %s152, %s154
    %p158 = scmp.eq.s32.totalorder %s13, 0
    %p159 = por %p157, %p158
    %p160 = scmp.ne.s32.totalorder %s152, %s154
    %p161 = scmp.eq.s32.totalorder %s18, 1
    %p162 = por %p160, %p161
    %p163 = scmp.ne.s32.totalorder %s154, %s155
    %p164 = scmp.eq.s32.totalorder %s18, 0
    %p165 = por %p163, %p164
    %p166 = scmp.ne.s32.totalorder %s154, %s155
    %p167 = scmp.eq.s32.totalorder %s19, 1
    %p168 = por %p166, %p167
    %p170 = scmp.ne.s32.totalorder %s155, %s169
    %p171 = scmp.eq.s32.totalorder %s19, 0
    %p172 = por %p170, %p171
    %s173 = ssub.s32 %s13, %s20
    %p174 = scmp.eq.s32.totalorder %s173, 0
    %s176 = sadd.s32 %s175, 1
    %s177 = scalar_select %p174, %s175, %s176
    %p180 = pneg %p174
    %p181 = scmp.eq.s32.totalorder %s13, 1
    %p182 = por %p180, %p181
    %p183 = scmp.ne.s32.totalorder %s175, %s178
    %p184 = scmp.eq.s32.totalorder %s13, 0
    %p185 = por %p183, %p184
    %p186 = scmp.ne.s32.totalorder %s175, %s178
    %p187 = scmp.eq.s32.totalorder %s18, 1
    %p188 = por %p186, %p187
    %p189 = scmp.ne.s32.totalorder %s178, %s179
    %p190 = scmp.eq.s32.totalorder %s18, 0
    %p191 = por %p189, %p190
    %p192 = scmp.ne.s32.totalorder %s178, %s179
    %p193 = scmp.eq.s32.totalorder %s19, 1
    %p194 = por %p192, %p193
    %p196 = scmp.ne.s32.totalorder %s179, %s195
    %p197 = scmp.eq.s32.totalorder %s19, 0
    %p198 = por %p196, %p197
    %p199 = scmp.le.s32.totalorder 1, %s13
    %p200 = scmp.lt.s32.totalorder %s13, 3
    %p201 = pnand %p199, %p200
    %p202 = pneg %p201
    // Predicated region
    $region9: #{model_forward.1} parent=5 // pred_check
      _
    $region10: #{model_forward.1} parent=5 // pred_check_branch
      %204 = sbr.rel (%p201) target = $region12
    $region11: #{model_forward.1} parent=5 // pred_region
      %s205 = ssub.s32 %s13, 1
      // Predicated region
      $region13: #{model_forward.1} parent=11 // pred_check
        %p206 = pneg %p60
      $region14: #{model_forward.1} parent=11 // pred_check_branch
        %208 = sbr.rel (%p206) target = $region16
      $region15: #{model_forward.1} parent=11 // pred_region
        _
      $region16: #{model_forward.1} parent=11 // pred_fallthru
        _
      // Predicated region
      $region17: #{model_forward.1} parent=11 // pred_check
        %p209 = pneg %p81
      $region18: #{model_forward.1} parent=11 // pred_check_branch
        %211 = sbr.rel (%p209) target = $region20
      $region19: #{model_forward.1} parent=11 // pred_region
        _
      $region20: #{model_forward.1} parent=11 // pred_fallthru
        _
      // Predicated region
      $region21: #{model_forward.1} parent=11 // pred_check
        %p212 = pneg %p102
      $region22: #{model_forward.1} parent=11 // pred_check_branch
        %214 = sbr.rel (%p212) target = $region24
      $region23: #{model_forward.1} parent=11 // pred_region
        _
      $region24: #{model_forward.1} parent=11 // pred_fallthru
        _
      // Predicated region
      $region25: #{model_forward.1} parent=11 // pred_check
        %p215 = pneg %p123
      $region26: #{model_forward.1} parent=11 // pred_check_branch
        %217 = sbr.rel (%p215) target = $region28
      $region27: #{model_forward.1} parent=11 // pred_region
        _
      $region28: #{model_forward.1} parent=11 // pred_fallthru
        _
      // Predicated region
      $region29: #{model_forward.1} parent=11 // pred_check
        %p218 = pneg %p144
      $region30: #{model_forward.1} parent=11 // pred_check_branch
        %220 = sbr.rel (%p218) target = $region32
      $region31: #{model_forward.1} parent=11 // pred_region
        _
      $region32: #{model_forward.1} parent=11 // pred_fallthru
        _
      // Predicated region
      $region33: #{model_forward.1} parent=11 // pred_check
        %p221 = pneg %p165
      $region34: #{model_forward.1} parent=11 // pred_check_branch
        %223 = sbr.rel (%p221) target = $region36
      $region35: #{model_forward.1} parent=11 // pred_region
        _
      $region36: #{model_forward.1} parent=11 // pred_fallthru
        _
    $region12: #{model_forward.1} parent=5 // pred_fallthru
      _
    %p224 = scmp.lt.s32.totalorder %s13, 2
    // Predicated region
    $region37: #{model_forward.1} parent=5 // pred_check
      %p225 = pneg %p224
    $region38: #{model_forward.1} parent=5 // pred_check_branch
      %227 = sbr.rel (%p225) target = $region40
    $region39: #{model_forward.1} parent=5 // pred_region
      // Predicated region
      $region41: #{model_forward.1} parent=39 // pred_check
        %p228 = pneg %p33
      $region42: #{model_forward.1} parent=39 // pred_check_branch
        %230 = sbr.rel (%p228) target = $region44
      $region43: #{model_forward.1} parent=39 // pred_region
        %s231 = smul.u32 32, %s13
        %p232 = scmp.lt.s32.totalorder %s231, 63
        %s233 = scalar_select %p232, %s231, 63
        %s234 = smul.addr %s233, 4
        %s235 = scalar_lea.vmem %s0, %s234
        %s236 = smul.u32 32, %s13
      $region44: #{model_forward.1} parent=39 // pred_fallthru
        _
    $region40: #{model_forward.1} parent=5 // pred_fallthru
      _
    %p237 = scmp.le.s32.totalorder 1, %s13
    %p238 = scmp.lt.s32.totalorder %s13, 3
    %p239 = pnand %p237, %p238
    %p240 = pneg %p239
    // Predicated region
    $region45: #{model_forward.1} parent=5 // pred_check
      _
    $region46: #{model_forward.1} parent=5 // pred_check_branch
      %242 = sbr.rel (%p239) target = $region48
    $region47: #{model_forward.1} parent=5 // pred_region
      %s243 = ssub.s32 %s13, 1
      %s244 = smul.u32 32, %s18
      %p245 = scmp.lt.s32.totalorder %s244, 63
      %s246 = scalar_select %p245, %s244, 63
      %s247 = smul.addr %s246, 4
      %s248 = scalar_lea.vmem %s0, %s247
      %p249 = pneg %p39
      %p250 = pneg %p36
      %p251 = pneg %p60
      %p252 = pneg %p57
      %p253 = pneg %p81
      %p254 = pneg %p78
      %p255 = pneg %p102
      %p256 = pneg %p99
      %p257 = pneg %p123
      %p258 = pneg %p120
      %p259 = pneg %p144
      %p260 = pneg %p141
      %p261 = pneg %p165
      %p262 = pneg %p162
      %p263 = pneg %p191
      %p264 = pneg %p188
      %s265 = smul.u32 32, %s18
      %p266 = scmp.lt.s32.totalorder %s265, 63
      %s267 = scalar_select %p266, %s265, 63
      %s268 = smul.addr %s267, 8
      %s269 = scalar_lea.vmem %s7, %s268
      %s270 = smul.u32 32, %s18
      %p271 = scmp.lt.s32.totalorder %s270, 63
      %s272 = scalar_select %p271, %s270, 63
      %s273 = smul.addr %s272, 4
      %s274 = scalar_lea.vmem %s0, %s273
      %s275 = smul.u32 32, %s18
      %s276 = smul.u32 32, %s18
      %p277 = scmp.lt.s32.totalorder %s276, 63
      %s278 = scalar_select %p277, %s276, 63
      %s279 = smul.addr %s278, 8
      %s280 = scalar_lea.vmem %s7, %s279
      %s281 = smul.u32 32, %s18
      %v283 = vld [vmem:[%s274] sm:$0xf]
      %v284 = vld [vmem:[%s274 + $0x4] sm:$0xf]
      %v285 = vld [vmem:[%s274 + $0x8] sm:$0xf]
      %v286 = vld [vmem:[%s274 + $0xc] sm:$0xf]
      %v287 = vld [vmem:[%s274 + $0x10] sm:$0xf]
      %v288 = vld [vmem:[%s274 + $0x14] sm:$0xf]
      %v289 = vld [vmem:[%s274 + $0x18] sm:$0xf]
      %v290 = vld [vmem:[%s274 + $0x1c] sm:$0xf]
      %v291 = vld [vmem:[%s274 + $0x20] sm:$0xf]
      %v292 = vld [vmem:[%s274 + $0x24] sm:$0xf]
      %v293 = vld [vmem:[%s274 + $0x28] sm:$0xf]
      %v294 = vld [vmem:[%s274 + $0x2c] sm:$0xf]
      %v295 = vld [vmem:[%s274 + $0x30] sm:$0xf]
      %v296 = vld [vmem:[%s274 + $0x34] sm:$0xf]
      %v297 = vld [vmem:[%s274 + $0x38] sm:$0xf]
      %v298 = vld [vmem:[%s274 + $0x3c] sm:$0xf]
      %v299 = vld [vmem:[%s274 + $0x40] sm:$0xf]
      %v300 = vld [vmem:[%s274 + $0x44] sm:$0xf]
      %v301 = vld [vmem:[%s274 + $0x48] sm:$0xf]
      %v302 = vld [vmem:[%s274 + $0x4c] sm:$0xf]
      %v303 = vld [vmem:[%s274 + $0x50] sm:$0xf]
      %v304 = vld [vmem:[%s274 + $0x54] sm:$0xf]
      %v305 = vld [vmem:[%s274 + $0x58] sm:$0xf]
      %v306 = vld [vmem:[%s274 + $0x5c] sm:$0xf]
      %v307 = vld [vmem:[%s274 + $0x60] sm:$0xf]
      %v308 = vld [vmem:[%s274 + $0x64] sm:$0xf]
      %v309 = vld [vmem:[%s274 + $0x68] sm:$0xf]
      %v310 = vld [vmem:[%s274 + $0x6c] sm:$0xf]
      %v311 = vld [vmem:[%s274 + $0x70] sm:$0xf]
      %v312 = vld [vmem:[%s274 + $0x74] sm:$0xf]
      %v313 = vld [vmem:[%s274 + $0x78] sm:$0xf]
      %v314 = vld [vmem:[%s274 + $0x7c] sm:$0xf]
      %v315 = vld [vmem:[%s1] sm:$0xf]
      %v316 = vld [vmem:[%s1 + $0x4] sm:$0xf]
      %v317 = vld [vmem:[%s1 + $0x8] sm:$0xf]
      %v318 = vld [vmem:[%s1 + $0xc] sm:$0xf]
      %v319 = vld [vmem:[%s1 + $0x10] sm:$0xf]
      %v320 = vld [vmem:[%s1 + $0x14] sm:$0xf]
      %v321 = vld [vmem:[%s1 + $0x18] sm:$0xf]
      %v322 = vld [vmem:[%s1 + $0x1c] sm:$0xf]
      %v323 = vld [vmem:[%s1 + $0x20] sm:$0xf]
      %v324 = vld [vmem:[%s1 + $0x24] sm:$0xf]
      %v325 = vld [vmem:[%s1 + $0x28] sm:$0xf]
      %v326 = vld [vmem:[%s1 + $0x2c] sm:$0xf]
      %v327 = vld [vmem:[%s1 + $0x30] sm:$0xf]
      %v328 = vld [vmem:[%s1 + $0x34] sm:$0xf]
      %v329 = vld [vmem:[%s1 + $0x38] sm:$0xf]
      %v330 = vld [vmem:[%s1 + $0x3c] sm:$0xf]
      %v331 = vld [vmem:[%s2] sm:$0x1]
      %v333 = vlaneseq
      %v334 = vshrl.u32 %v333, 7
      %v335 = vsub.s32 0, %v334
      %v336 = vrot.slane %v331, %v335
      %v370 = vunpack.c.l.b16 %v283
      %v371 = vunpack.c.l.b16 %v284
      %v372 = vunpack.c.l.b16 %v285
      %v373 = vunpack.c.l.b16 %v286
      %v374 = vunpack.c.l.b16 %v287
      %v375 = vunpack.c.l.b16 %v288
      %v376 = vunpack.c.l.b16 %v289
      %v377 = vunpack.c.l.b16 %v290
      %v378 = vunpack.c.l.b16 %v291
      %v379 = vunpack.c.l.b16 %v292
      %v380 = vunpack.c.l.b16 %v293
      %v381 = vunpack.c.l.b16 %v294
      %v382 = vunpack.c.l.b16 %v295
      %v383 = vunpack.c.l.b16 %v296
      %v384 = vunpack.c.l.b16 %v297
      %v385 = vunpack.c.l.b16 %v298
      %v386 = vunpack.c.l.b16 %v299
      %v387 = vunpack.c.l.b16 %v300
      %v388 = vunpack.c.l.b16 %v301
      %v389 = vunpack.c.l.b16 %v302
      %v390 = vunpack.c.l.b16 %v303
      %v391 = vunpack.c.l.b16 %v304
      %v392 = vunpack.c.l.b16 %v305
      %v393 = vunpack.c.l.b16 %v306
      %v394 = vunpack.c.l.b16 %v307
      %v395 = vunpack.c.l.b16 %v308
      %v396 = vunpack.c.l.b16 %v309
      %v397 = vunpack.c.l.b16 %v310
      %v398 = vunpack.c.l.b16 %v311
      %v399 = vunpack.c.l.b16 %v312
      %v400 = vunpack.c.l.b16 %v313
      %v401 = vunpack.c.l.b16 %v314
      %v402 = vpack.c.b16 %v371, %v370
      %v403 = vpack.c.b16 %v373, %v372
      %v404 = vpack.c.b16 %v375, %v374
      %v405 = vpack.c.b16 %v377, %v376
      %v406 = vpack.c.b16 %v379, %v378
      %v407 = vpack.c.b16 %v381, %v380
      %v408 = vpack.c.b16 %v383, %v382
      %v409 = vpack.c.b16 %v385, %v384
      %v410 = vpack.c.b16 %v387, %v386
      %v411 = vpack.c.b16 %v389, %v388
      %v412 = vpack.c.b16 %v391, %v390
      %v413 = vpack.c.b16 %v393, %v392
      %v414 = vpack.c.b16 %v395, %v394
      %v415 = vpack.c.b16 %v397, %v396
      %v416 = vpack.c.b16 %v399, %v398
      %v417 = vpack.c.b16 %v401, %v400
      %v450 = vunpack.c.l.b16 %v315
      %v451 = vunpack.c.l.b16 %v316
      %v452 = vunpack.c.l.b16 %v317
      %v453 = vunpack.c.l.b16 %v318
      %v454 = vunpack.c.l.b16 %v319
      %v455 = vunpack.c.l.b16 %v320
      %v456 = vunpack.c.l.b16 %v321
      %v457 = vunpack.c.l.b16 %v322
      %v458 = vunpack.c.l.b16 %v323
      %v459 = vunpack.c.l.b16 %v324
      %v460 = vunpack.c.l.b16 %v325
      %v461 = vunpack.c.l.b16 %v326
      %v462 = vunpack.c.l.b16 %v327
      %v463 = vunpack.c.l.b16 %v328
      %v464 = vunpack.c.l.b16 %v329
      %v465 = vunpack.c.l.b16 %v330
      %v466 = vpack.c.b16 %v451, %v450
      %v467 = vpack.c.b16 %v453, %v452
      %v468 = vpack.c.b16 %v455, %v454
      %v469 = vpack.c.b16 %v457, %v456
      %v470 = vpack.c.b16 %v459, %v458
      %v471 = vpack.c.b16 %v461, %v460
      %v472 = vpack.c.b16 %v463, %v462
      %v473 = vpack.c.b16 %v465, %v464
      %482 = vmatprep.subr.bf16.mxu0 0
      %483 = vmatpush1.bf16.msra.mxu0 %v466
      %484 = vmatprep.subr.bf16.mxu0 0
      %485 = vmatpush1.bf16.msra.mxu0 %v467
      %486 = vmatprep.subr.bf16.mxu0 0
      %487 = vmatpush1.bf16.msra.mxu0 %v468
      %488 = vmatprep.subr.bf16.mxu0 0
      %489 = vmatpush1.bf16.msra.mxu0 %v469
      %490 = vmatprep.subr.bf16.mxu0 0
      %491 = vmatpush1.bf16.msra.mxu0 %v470
      %492 = vmatprep.subr.bf16.mxu0 0
      %493 = vmatpush1.bf16.msra.mxu0 %v471
      %494 = vmatprep.subr.bf16.mxu0 0
      %495 = vmatpush1.bf16.msra.mxu0 %v472
      %496 = vmatprep.subr.bf16.mxu0 0
      %497 = vmatpush1.bf16.msra.mxu0 %v473
      %498 = vmatprep.subr.bf16.mxu0 0
      %499 = vmatpush1.bf16.msra.mxu0 0
      %500 = vmatprep.subr.bf16.mxu0 0
      %501 = vmatpush1.bf16.msra.mxu0 0
      %502 = vmatprep.subr.bf16.mxu0 0
      %503 = vmatpush1.bf16.msra.mxu0 0
      %504 = vmatprep.subr.bf16.mxu0 0
      %505 = vmatpush1.bf16.msra.mxu0 0
      %506 = vmatprep.subr.bf16.mxu0 0
      %507 = vmatpush1.bf16.msra.mxu0 0
      %508 = vmatprep.subr.bf16.mxu0 0
      %509 = vmatpush1.bf16.msra.mxu0 0
      %510 = vmatprep.subr.bf16.mxu0 0
      %511 = vmatpush1.bf16.msra.mxu0 0
      %512 = vmatprep.subr.bf16.mxu0 0
      %513 = vmatpush1.bf16.msra.mxu0 0
      %514 = vmatprep.mubr.bf16.mxu0 0
      %515 = vmatmul.mubr.bf16.gmra.mrb[0].mxu0 %v402
      %v516 = vpop.f32.mrb[0].mxu0
      %v517 = vadd.f32 %v336, %v516
      %v518 = vpop.f32.mrb[0].mxu0
      %v519 = vpop.f32.mrb[0].mxu0
      %v520 = vadd.f32 %v336, %v519
      %v521 = vpop.f32.mrb[0].mxu0
      %522 = vmatprep.mubr.bf16.mxu0 0
      %523 = vmatmul.mubr.bf16.gmra.mrb[0].mxu0 %v403
      %v524 = vpop.f32.mrb[0].mxu0
      %v525 = vadd.f32 %v336, %v524
      %v526 = vpop.f32.mrb[0].mxu0
      %v527 = vpop.f32.mrb[0].mxu0
      %v528 = vadd.f32 %v336, %v527
      %v529 = vpop.f32.mrb[0].mxu0
      %530 = vmatprep.mubr.bf16.mxu0 0
      %531 = vmatmul.mubr.bf16.gmra.mrb[0].mxu0 %v404
      %v532 = vpop.f32.mrb[0].mxu0
      %v533 = vadd.f32 %v336, %v532
      %v534 = vpop.f32.mrb[0].mxu0
      %v535 = vpop.f32.mrb[0].mxu0
      %v536 = vadd.f32 %v336, %v535
      %v537 = vpop.f32.mrb[0].mxu0
      %538 = vmatprep.mubr.bf16.mxu0 0
      %539 = vmatmul.mubr.bf16.gmra.mrb[0].mxu0 %v405
      %v540 = vpop.f32.mrb[0].mxu0
      %v541 = vadd.f32 %v336, %v540
      %v542 = vpop.f32.mrb[0].mxu0
      %v543 = vpop.f32.mrb[0].mxu0
      %v544 = vadd.f32 %v336, %v543
      %v545 = vpop.f32.mrb[0].mxu0
      %546 = vmatprep.mubr.bf16.mxu0 0
      %547 = vmatmul.mubr.bf16.gmra.mrb[0].mxu0 %v406
      %v548 = vpop.f32.mrb[0].mxu0
      %v549 = vadd.f32 %v336, %v548
      %v550 = vpop.f32.mrb[0].mxu0
      %v551 = vpop.f32.mrb[0].mxu0
      %v552 = vadd.f32 %v336, %v551
      %v553 = vpop.f32.mrb[0].mxu0
      %554 = vmatprep.mubr.bf16.mxu0 0
      %555 = vmatmul.mubr.bf16.gmra.mrb[0].mxu0 %v407
      %v556 = vpop.f32.mrb[0].mxu0
      %v557 = vadd.f32 %v336, %v556
      %v558 = vpop.f32.mrb[0].mxu0
      %v559 = vpop.f32.mrb[0].mxu0
      %v560 = vadd.f32 %v336, %v559
      %v561 = vpop.f32.mrb[0].mxu0
      %562 = vmatprep.mubr.bf16.mxu0 0
      %563 = vmatmul.mubr.bf16.gmra.mrb[0].mxu0 %v408
      %v564 = vpop.f32.mrb[0].mxu0
      %v565 = vadd.f32 %v336, %v564
      %v566 = vpop.f32.mrb[0].mxu0
      %v567 = vpop.f32.mrb[0].mxu0
      %v568 = vadd.f32 %v336, %v567
      %v569 = vpop.f32.mrb[0].mxu0
      %570 = vmatprep.mubr.bf16.mxu0 0
      %571 = vmatmul.mubr.bf16.gmra.mrb[0].mxu0 %v409
      %v572 = vpop.f32.mrb[0].mxu0
      %v573 = vadd.f32 %v336, %v572
      %v574 = vpop.f32.mrb[0].mxu0
      %v575 = vpop.f32.mrb[0].mxu0
      %v576 = vadd.f32 %v336, %v575
      %v577 = vpop.f32.mrb[0].mxu0
      %578 = vmatprep.mubr.bf16.mxu0 0
      %579 = vmatmul.mubr.bf16.gmra.mrb[0].mxu0 %v410
      %v580 = vpop.f32.mrb[0].mxu0
      %v581 = vadd.f32 %v336, %v580
      %v582 = vpop.f32.mrb[0].mxu0
      %v583 = vpop.f32.mrb[0].mxu0
      %v584 = vadd.f32 %v336, %v583
      %v585 = vpop.f32.mrb[0].mxu0
      %586 = vmatprep.mubr.bf16.mxu0 0
      %587 = vmatmul.mubr.bf16.gmra.mrb[0].mxu0 %v411
      %v588 = vpop.f32.mrb[0].mxu0
      %v589 = vadd.f32 %v336, %v588
      %v590 = vpop.f32.mrb[0].mxu0
      %v591 = vpop.f32.mrb[0].mxu0
      %v592 = vadd.f32 %v336, %v591
      %v593 = vpop.f32.mrb[0].mxu0
      %594 = vmatprep.mubr.bf16.mxu0 0
      %595 = vmatmul.mubr.bf16.gmra.mrb[0].mxu0 %v412
      %v596 = vpop.f32.mrb[0].mxu0
      %v597 = vadd.f32 %v336, %v596
      %v598 = vpop.f32.mrb[0].mxu0
      %v599 = vpop.f32.mrb[0].mxu0
      %v600 = vadd.f32 %v336, %v599
      %v601 = vpop.f32.mrb[0].mxu0
      %602 = vmatprep.mubr.bf16.mxu0 0
      %603 = vmatmul.mubr.bf16.gmra.mrb[0].mxu0 %v413
      %v604 = vpop.f32.mrb[0].mxu0
      %v605 = vadd.f32 %v336, %v604
      %v606 = vpop.f32.mrb[0].mxu0
      %v607 = vpop.f32.mrb[0].mxu0
      %v608 = vadd.f32 %v336, %v607
      %v609 = vpop.f32.mrb[0].mxu0
      %610 = vmatprep.mubr.bf16.mxu0 0
      %611 = vmatmul.mubr.bf16.gmra.mrb[0].mxu0 %v414
      %v612 = vpop.f32.mrb[0].mxu0
      %v613 = vadd.f32 %v336, %v612
      %v614 = vpop.f32.mrb[0].mxu0
      %v615 = vpop.f32.mrb[0].mxu0
      %v616 = vadd.f32 %v336, %v615
      %v617 = vpop.f32.mrb[0].mxu0
      %618 = vmatprep.mubr.bf16.mxu0 0
      %619 = vmatmul.mubr.bf16.gmra.mrb[0].mxu0 %v415
      %v620 = vpop.f32.mrb[0].mxu0
      %v621 = vadd.f32 %v336, %v620
      %v622 = vpop.f32.mrb[0].mxu0
      %v623 = vpop.f32.mrb[0].mxu0
      %v624 = vadd.f32 %v336, %v623
      %v625 = vpop.f32.mrb[0].mxu0
      %626 = vmatprep.mubr.bf16.mxu0 0
      %627 = vmatmul.mubr.bf16.gmra.mrb[0].mxu0 %v416
      %v628 = vpop.f32.mrb[0].mxu0
      %v629 = vadd.f32 %v336, %v628
      %v630 = vpop.f32.mrb[0].mxu0
      %v631 = vpop.f32.mrb[0].mxu0
      %v632 = vadd.f32 %v336, %v631
      %v633 = vpop.f32.mrb[0].mxu0
      %634 = vmatprep.mubr.bf16.mxu0 0
      %635 = vmatmul.mubr.bf16.gmra.mrb[0].mxu0 %v417
      %v636 = vpop.f32.mrb[0].mxu0
      %v637 = vadd.f32 %v336, %v636
      %v638 = vpop.f32.mrb[0].mxu0
      %v639 = vpop.f32.mrb[0].mxu0
      %v640 = vadd.f32 %v336, %v639
      %v641 = vpop.f32.mrb[0].mxu0
      %642 = vdwg.mxu0
      %v643 = vmul.f32 %v517, 0.5
      %v644 = vmul.f32 %v520, 0.5
      %v645 = vmul.f32 %v525, 0.5
      %v646 = vmul.f32 %v528, 0.5
      %v647 = vmul.f32 %v533, 0.5
      %v648 = vmul.f32 %v536, 0.5
      %v649 = vmul.f32 %v541, 0.5
      %v650 = vmul.f32 %v544, 0.5
      %v651 = vmul.f32 %v549, 0.5
      %v652 = vmul.f32 %v552, 0.5
      %v653 = vmul.f32 %v557, 0.5
      %v654 = vmul.f32 %v560, 0.5
      %v655 = vmul.f32 %v565, 0.5
      %v656 = vmul.f32 %v568, 0.5
      %v657 = vmul.f32 %v573, 0.5
      %v658 = vmul.f32 %v576, 0.5
      %v659 = vmul.f32 %v581, 0.5
      %v660 = vmul.f32 %v584, 0.5
      %v661 = vmul.f32 %v589, 0.5
      %v662 = vmul.f32 %v592, 0.5
      %v663 = vmul.f32 %v597, 0.5
      %v664 = vmul.f32 %v600, 0.5
      %v665 = vmul.f32 %v605, 0.5
      %v666 = vmul.f32 %v608, 0.5
      %v667 = vmul.f32 %v613, 0.5
      %v668 = vmul.f32 %v616, 0.5
      %v669 = vmul.f32 %v621, 0.5
      %v670 = vmul.f32 %v624, 0.5
      %v671 = vmul.f32 %v629, 0.5
      %v672 = vmul.f32 %v632, 0.5
      %v673 = vmul.f32 %v637, 0.5
      %v674 = vmul.f32 %v640, 0.5
      %v675 = vmul.f32 %v517, 0.70710677
      %v676 = vmul.f32 %v520, 0.70710677
      %v677 = vmul.f32 %v525, 0.70710677
      %v678 = vmul.f32 %v528, 0.70710677
      %v679 = vmul.f32 %v533, 0.70710677
      %v680 = vmul.f32 %v536, 0.70710677
      %v681 = vmul.f32 %v541, 0.70710677
      %v682 = vmul.f32 %v544, 0.70710677
      %v683 = vmul.f32 %v549, 0.70710677
      %v684 = vmul.f32 %v552, 0.70710677
      %v685 = vmul.f32 %v557, 0.70710677
      %v686 = vmul.f32 %v560, 0.70710677
      %v687 = vmul.f32 %v565, 0.70710677
      %v688 = vmul.f32 %v568, 0.70710677
      %v689 = vmul.f32 %v573, 0.70710677
      %v690 = vmul.f32 %v576, 0.70710677
      %v691 = vmul.f32 %v581, 0.70710677
      %v692 = vmul.f32 %v584, 0.70710677
      %v693 = vmul.f32 %v589, 0.70710677
      %v694 = vmul.f32 %v592, 0.70710677
      %v695 = vmul.f32 %v597, 0.70710677
      %v696 = vmul.f32 %v600, 0.70710677
      %v697 = vmul.f32 %v605, 0.70710677
      %v698 = vmul.f32 %v608, 0.70710677
      %v699 = vmul.f32 %v613, 0.70710677
      %v700 = vmul.f32 %v616, 0.70710677
      %v701 = vmul.f32 %v621, 0.70710677
      %v702 = vmul.f32 %v624, 0.70710677
      %v703 = vmul.f32 %v629, 0.70710677
      %v704 = vmul.f32 %v632, 0.70710677
      %v705 = vmul.f32 %v637, 0.70710677
      %v706 = vmul.f32 %v640, 0.70710677
      %v707 = vand.u32 2147483647, %v675
      %v708 = vand.u32 2147483647, %v676
      %v709 = vand.u32 2147483647, %v677
      %v710 = vand.u32 2147483647, %v678
      %v711 = vand.u32 2147483647, %v679
      %v712 = vand.u32 2147483647, %v680
      %v713 = vand.u32 2147483647, %v681
      %v714 = vand.u32 2147483647, %v682
      %v715 = vand.u32 2147483647, %v683
      %v716 = vand.u32 2147483647, %v684
      %v717 = vand.u32 2147483647, %v685
      %v718 = vand.u32 2147483647, %v686
      %v719 = vand.u32 2147483647, %v687
      %v720 = vand.u32 2147483647, %v688
      %v721 = vand.u32 2147483647, %v689
      %v722 = vand.u32 2147483647, %v690
      %v723 = vand.u32 2147483647, %v691
      %v724 = vand.u32 2147483647, %v692
      %v725 = vand.u32 2147483647, %v693
      %v726 = vand.u32 2147483647, %v694
      %v727 = vand.u32 2147483647, %v695
      %v728 = vand.u32 2147483647, %v696
      %v729 = vand.u32 2147483647, %v697
      %v730 = vand.u32 2147483647, %v698
      %v731 = vand.u32 2147483647, %v699
      %v732 = vand.u32 2147483647, %v700
      %v733 = vand.u32 2147483647, %v701
      %v734 = vand.u32 2147483647, %v702
      %v735 = vand.u32 2147483647, %v703
      %v736 = vand.u32 2147483647, %v704
      %v737 = vand.u32 2147483647, %v705
      %v738 = vand.u32 2147483647, %v706
      %v739 = vmul.f32 %v707, 0.3275911
      %v740 = vmul.f32 %v708, 0.3275911
      %v741 = vmul.f32 %v709, 0.3275911
      %v742 = vmul.f32 %v710, 0.3275911
      %v743 = vmul.f32 %v711, 0.3275911
      %v744 = vmul.f32 %v712, 0.3275911
      %v745 = vmul.f32 %v713, 0.3275911
      %v746 = vmul.f32 %v714, 0.3275911
      %v747 = vmul.f32 %v715, 0.3275911
      %v748 = vmul.f32 %v716, 0.3275911
      %v749 = vmul.f32 %v717, 0.3275911
      %v750 = vmul.f32 %v718, 0.3275911
      %v751 = vmul.f32 %v719, 0.3275911
      %v752 = vmul.f32 %v720, 0.3275911
      %v753 = vmul.f32 %v721, 0.3275911
      %v754 = vmul.f32 %v722, 0.3275911
      %v755 = vmul.f32 %v723, 0.3275911
      %v756 = vmul.f32 %v724, 0.3275911
      %v757 = vmul.f32 %v725, 0.3275911
      %v758 = vmul.f32 %v726, 0.3275911
      %v759 = vmul.f32 %v727, 0.3275911
      %v760 = vmul.f32 %v728, 0.3275911
      %v761 = vmul.f32 %v729, 0.3275911
      %v762 = vmul.f32 %v730, 0.3275911
      %v763 = vmul.f32 %v731, 0.3275911
      %v764 = vmul.f32 %v732, 0.3275911
      %v765 = vmul.f32 %v733, 0.3275911
      %v766 = vmul.f32 %v734, 0.3275911
      %v767 = vmul.f32 %v735, 0.3275911
      %v768 = vmul.f32 %v736, 0.3275911
      %v769 = vmul.f32 %v737, 0.3275911
      %v770 = vmul.f32 %v738, 0.3275911
      %v771 = vadd.f32 %v739, 1.0
      %v772 = vadd.f32 %v740, 1.0
      %v773 = vadd.f32 %v741, 1.0
      %v774 = vadd.f32 %v742, 1.0
      %v775 = vadd.f32 %v743, 1.0
      %v776 = vadd.f32 %v744, 1.0
      %v777 = vadd.f32 %v745, 1.0
      %v778 = vadd.f32 %v746, 1.0
      %v779 = vadd.f32 %v747, 1.0
      %v780 = vadd.f32 %v748, 1.0
      %v781 = vadd.f32 %v749, 1.0
      %v782 = vadd.f32 %v750, 1.0
      %v783 = vadd.f32 %v751, 1.0
      %v784 = vadd.f32 %v752, 1.0
      %v785 = vadd.f32 %v753, 1.0
      %v786 = vadd.f32 %v754, 1.0
      %v787 = vadd.f32 %v755, 1.0
      %v788 = vadd.f32 %v756, 1.0
      %v789 = vadd.f32 %v757, 1.0
      %v790 = vadd.f32 %v758, 1.0
      %v791 = vadd.f32 %v759, 1.0
      %v792 = vadd.f32 %v760, 1.0
      %v793 = vadd.f32 %v761, 1.0
      %v794 = vadd.f32 %v762, 1.0
      %v795 = vadd.f32 %v763, 1.0
      %v796 = vadd.f32 %v764, 1.0
      %v797 = vadd.f32 %v765, 1.0
      %v798 = vadd.f32 %v766, 1.0
      %v799 = vadd.f32 %v767, 1.0
      %v800 = vadd.f32 %v768, 1.0
      %v801 = vadd.f32 %v769, 1.0
      %v802 = vadd.f32 %v770, 1.0
      %v803 = vrcp.pop %v771
      %v804 = vmul.f32 1.0, %v803
      %v805 = vrcp.pop %v772
      %v806 = vmul.f32 1.0, %v805
      %v807 = vrcp.pop %v773
      %v808 = vmul.f32 1.0, %v807
      %v809 = vrcp.pop %v774
      %v810 = vmul.f32 1.0, %v809
      %v811 = vrcp.pop %v775
      %v812 = vmul.f32 1.0, %v811
      %v813 = vrcp.pop %v776
      %v814 = vmul.f32 1.0, %v813
      %v815 = vrcp.pop %v777
      %v816 = vmul.f32 1.0, %v815
      %v817 = vrcp.pop %v778
      %v818 = vmul.f32 1.0, %v817
      %v819 = vrcp.pop %v779
      %v820 = vmul.f32 1.0, %v819
      %v821 = vrcp.pop %v780
      %v822 = vmul.f32 1.0, %v821
      %v823 = vrcp.pop %v781
      %v824 = vmul.f32 1.0, %v823
      %v825 = vrcp.pop %v782
      %v826 = vmul.f32 1.0, %v825
      %v827 = vrcp.pop %v783
      %v828 = vmul.f32 1.0, %v827
      %v829 = vrcp.pop %v784
      %v830 = vmul.f32 1.0, %v829
      %v831 = vrcp.pop %v785
      %v832 = vmul.f32 1.0, %v831
      %v833 = vrcp.pop %v786
      %v834 = vmul.f32 1.0, %v833
      %v835 = vrcp.pop %v787
      %v836 = vmul.f32 1.0, %v835
      %v837 = vrcp.pop %v788
      %v838 = vmul.f32 1.0, %v837
      %v839 = vrcp.pop %v789
      %v840 = vmul.f32 1.0, %v839
      %v841 = vrcp.pop %v790
      %v842 = vmul.f32 1.0, %v841
      %v843 = vrcp.pop %v791
      %v844 = vmul.f32 1.0, %v843
      %v845 = vrcp.pop %v792
      %v846 = vmul.f32 1.0, %v845
      %v847 = vrcp.pop %v793
      %v848 = vmul.f32 1.0, %v847
      %v849 = vrcp.pop %v794
      %v850 = vmul.f32 1.0, %v849
      %v851 = vrcp.pop %v795
      %v852 = vmul.f32 1.0, %v851
      %v853 = vrcp.pop %v796
      %v854 = vmul.f32 1.0, %v853
      %v855 = vrcp.pop %v797
      %v856 = vmul.f32 1.0, %v855
      %v857 = vrcp.pop %v798
      %v858 = vmul.f32 1.0, %v857
      %v859 = vrcp.pop %v799
      %v860 = vmul.f32 1.0, %v859
      %v861 = vrcp.pop %v800
      %v862 = vmul.f32 1.0, %v861
      %v863 = vrcp.pop %v801
      %v864 = vmul.f32 1.0, %v863
      %v865 = vrcp.pop %v802
      %v866 = vmul.f32 1.0, %v865
      %v867 = vmul.f32 %v804, 1.0614054
      %v868 = vmul.f32 %v806, 1.0614054
      %v869 = vmul.f32 %v808, 1.0614054
      %v870 = vmul.f32 %v810, 1.0614054
      %v871 = vmul.f32 %v812, 1.0614054
      %v872 = vmul.f32 %v814, 1.0614054
      %v873 = vmul.f32 %v816, 1.0614054
      %v874 = vmul.f32 %v818, 1.0614054
      %v875 = vmul.f32 %v820, 1.0614054
      %v876 = vmul.f32 %v822, 1.0614054
      %v877 = vmul.f32 %v824, 1.0614054
      %v878 = vmul.f32 %v826, 1.0614054
      %v879 = vmul.f32 %v828, 1.0614054
      %v880 = vmul.f32 %v830, 1.0614054
      %v881 = vmul.f32 %v832, 1.0614054
      %v882 = vmul.f32 %v834, 1.0614054
      %v883 = vmul.f32 %v836, 1.0614054
      %v884 = vmul.f32 %v838, 1.0614054
      %v885 = vmul.f32 %v840, 1.0614054
      %v886 = vmul.f32 %v842, 1.0614054
      %v887 = vmul.f32 %v844, 1.0614054
      %v888 = vmul.f32 %v846, 1.0614054
      %v889 = vmul.f32 %v848, 1.0614054
      %v890 = vmul.f32 %v850, 1.0614054
      %v891 = vmul.f32 %v852, 1.0614054
      %v892 = vmul.f32 %v854, 1.0614054
      %v893 = vmul.f32 %v856, 1.0614054
      %v894 = vmul.f32 %v858, 1.0614054
      %v895 = vmul.f32 %v860, 1.0614054
      %v896 = vmul.f32 %v862, 1.0614054
      %v897 = vmul.f32 %v864, 1.0614054
      %v898 = vmul.f32 %v866, 1.0614054
      %v899 = vadd.f32 %v867, -1.4531521
      %v900 = vadd.f32 %v868, -1.4531521
      %v901 = vadd.f32 %v869, -1.4531521
      %v902 = vadd.f32 %v870, -1.4531521
      %v903 = vadd.f32 %v871, -1.4531521
      %v904 = vadd.f32 %v872, -1.4531521
      %v905 = vadd.f32 %v873, -1.4531521
      %v906 = vadd.f32 %v874, -1.4531521
      %v907 = vadd.f32 %v875, -1.4531521
      %v908 = vadd.f32 %v876, -1.4531521
      %v909 = vadd.f32 %v877, -1.4531521
      %v910 = vadd.f32 %v878, -1.4531521
      %v911 = vadd.f32 %v879, -1.4531521
      %v912 = vadd.f32 %v880, -1.4531521
      %v913 = vadd.f32 %v881, -1.4531521
      %v914 = vadd.f32 %v882, -1.4531521
      %v915 = vadd.f32 %v883, -1.4531521
      %v916 = vadd.f32 %v884, -1.4531521
      %v917 = vadd.f32 %v885, -1.4531521
      %v918 = vadd.f32 %v886, -1.4531521
      %v919 = vadd.f32 %v887, -1.4531521
      %v920 = vadd.f32 %v888, -1.4531521
      %v921 = vadd.f32 %v889, -1.4531521
      %v922 = vadd.f32 %v890, -1.4531521
      %v923 = vadd.f32 %v891, -1.4531521
      %v924 = vadd.f32 %v892, -1.4531521
      %v925 = vadd.f32 %v893, -1.4531521
      %v926 = vadd.f32 %v894, -1.4531521
      %v927 = vadd.f32 %v895, -1.4531521
      %v928 = vadd.f32 %v896, -1.4531521
      %v929 = vadd.f32 %v897, -1.4531521
      %v930 = vadd.f32 %v898, -1.4531521
      %v931 = vmul.f32 %v804, %v899
      %v932 = vmul.f32 %v806, %v900
      %v933 = vmul.f32 %v808, %v901
      %v934 = vmul.f32 %v810, %v902
      %v935 = vmul.f32 %v812, %v903
      %v936 = vmul.f32 %v814, %v904
      %v937 = vmul.f32 %v816, %v905
      %v938 = vmul.f32 %v818, %v906
      %v939 = vmul.f32 %v820, %v907
      %v940 = vmul.f32 %v822, %v908
      %v941 = vmul.f32 %v824, %v909
      %v942 = vmul.f32 %v826, %v910
      %v943 = vmul.f32 %v828, %v911
      %v944 = vmul.f32 %v830, %v912
      %v945 = vmul.f32 %v832, %v913
      %v946 = vmul.f32 %v834, %v914
      %v947 = vmul.f32 %v836, %v915
      %v948 = vmul.f32 %v838, %v916
      %v949 = vmul.f32 %v840, %v917
      %v950 = vmul.f32 %v842, %v918
      %v951 = vmul.f32 %v844, %v919
      %v952 = vmul.f32 %v846, %v920
      %v953 = vmul.f32 %v848, %v921
      %v954 = vmul.f32 %v850, %v922
      %v955 = vmul.f32 %v852, %v923
      %v956 = vmul.f32 %v854, %v924
      %v957 = vmul.f32 %v856, %v925
      %v958 = vmul.f32 %v858, %v926
      %v959 = vmul.f32 %v860, %v927
      %v960 = vmul.f32 %v862, %v928
      %v961 = vmul.f32 %v864, %v929
      %v962 = vmul.f32 %v866, %v930
      %v963 = vadd.f32 %v931, 1.4214138
      %v964 = vadd.f32 %v932, 1.4214138
      %v965 = vadd.f32 %v933, 1.4214138
      %v966 = vadd.f32 %v934, 1.4214138
      %v967 = vadd.f32 %v935, 1.4214138
      %v968 = vadd.f32 %v936, 1.4214138
      %v969 = vadd.f32 %v937, 1.4214138
      %v970 = vadd.f32 %v938, 1.4214138
      %v971 = vadd.f32 %v939, 1.4214138
      %v972 = vadd.f32 %v940, 1.4214138
      %v973 = vadd.f32 %v941, 1.4214138
      %v974 = vadd.f32 %v942, 1.4214138
      %v975 = vadd.f32 %v943, 1.4214138
      %v976 = vadd.f32 %v944, 1.4214138
      %v977 = vadd.f32 %v945, 1.4214138
      %v978 = vadd.f32 %v946, 1.4214138
      %v979 = vadd.f32 %v947, 1.4214138
      %v980 = vadd.f32 %v948, 1.4214138
      %v981 = vadd.f32 %v949, 1.4214138
      %v982 = vadd.f32 %v950, 1.4214138
      %v983 = vadd.f32 %v951, 1.4214138
      %v984 = vadd.f32 %v952, 1.4214138
      %v985 = vadd.f32 %v953, 1.4214138
      %v986 = vadd.f32 %v954, 1.4214138
      %v987 = vadd.f32 %v955, 1.4214138
      %v988 = vadd.f32 %v956, 1.4214138
      %v989 = vadd.f32 %v957, 1.4214138
      %v990 = vadd.f32 %v958, 1.4214138
      %v991 = vadd.f32 %v959, 1.4214138
      %v992 = vadd.f32 %v960, 1.4214138
      %v993 = vadd.f32 %v961, 1.4214138
      %v994 = vadd.f32 %v962, 1.4214138
      %v995 = vmul.f32 %v804, %v963
      %v996 = vmul.f32 %v806, %v964
      %v997 = vmul.f32 %v808, %v965
      %v998 = vmul.f32 %v810, %v966
      %v999 = vmul.f32 %v812, %v967
      %v1000 = vmul.f32 %v814, %v968
      %v1001 = vmul.f32 %v816, %v969
      %v1002 = vmul.f32 %v818, %v970
      %v1003 = vmul.f32 %v820, %v971
      %v1004 = vmul.f32 %v822, %v972
      %v1005 = vmul.f32 %v824, %v973
      %v1006 = vmul.f32 %v826, %v974
      %v1007 = vmul.f32 %v828, %v975
      %v1008 = vmul.f32 %v830, %v976
      %v1009 = vmul.f32 %v832, %v977
      %v1010 = vmul.f32 %v834, %v978
      %v1011 = vmul.f32 %v836, %v979
      %v1012 = vmul.f32 %v838, %v980
      %v1013 = vmul.f32 %v840, %v981
      %v1014 = vmul.f32 %v842, %v982
      %v1015 = vmul.f32 %v844, %v983
      %v1016 = vmul.f32 %v846, %v984
      %v1017 = vmul.f32 %v848, %v985
      %v1018 = vmul.f32 %v850, %v986
      %v1019 = vmul.f32 %v852, %v987
      %v1020 = vmul.f32 %v854, %v988
      %v1021 = vmul.f32 %v856, %v989
      %v1022 = vmul.f32 %v858, %v990
      %v1023 = vmul.f32 %v860, %v991
      %v1024 = vmul.f32 %v862, %v992
      %v1025 = vmul.f32 %v864, %v993
      %v1026 = vmul.f32 %v866, %v994
      %v1027 = vadd.f32 %v995, -0.28449672
      %v1028 = vadd.f32 %v996, -0.28449672
      %v1029 = vadd.f32 %v997, -0.28449672
      %v1030 = vadd.f32 %v998, -0.28449672
      %v1031 = vadd.f32 %v999, -0.28449672
      %v1032 = vadd.f32 %v1000, -0.28449672
      %v1033 = vadd.f32 %v1001, -0.28449672
      %v1034 = vadd.f32 %v1002, -0.28449672
      %v1035 = vadd.f32 %v1003, -0.28449672
      %v1036 = vadd.f32 %v1004, -0.28449672
      %v1037 = vadd.f32 %v1005, -0.28449672
      %v1038 = vadd.f32 %v1006, -0.28449672
      %v1039 = vadd.f32 %v1007, -0.28449672
      %v1040 = vadd.f32 %v1008, -0.28449672
      %v1041 = vadd.f32 %v1009, -0.28449672
      %v1042 = vadd.f32 %v1010, -0.28449672
      %v1043 = vadd.f32 %v1011, -0.28449672
      %v1044 = vadd.f32 %v1012, -0.28449672
      %v1045 = vadd.f32 %v1013, -0.28449672
      %v1046 = vadd.f32 %v1014, -0.28449672
      %v1047 = vadd.f32 %v1015, -0.28449672
      %v1048 = vadd.f32 %v1016, -0.28449672
      %v1049 = vadd.f32 %v1017, -0.28449672
      %v1050 = vadd.f32 %v1018, -0.28449672
      %v1051 = vadd.f32 %v1019, -0.28449672
      %v1052 = vadd.f32 %v1020, -0.28449672
      %v1053 = vadd.f32 %v1021, -0.28449672
      %v1054 = vadd.f32 %v1022, -0.28449672
      %v1055 = vadd.f32 %v1023, -0.28449672
      %v1056 = vadd.f32 %v1024, -0.28449672
      %v1057 = vadd.f32 %v1025, -0.28449672
      %v1058 = vadd.f32 %v1026, -0.28449672
      %v1059 = vmul.f32 %v804, %v1027
      %v1060 = vmul.f32 %v806, %v1028
      %v1061 = vmul.f32 %v808, %v1029
      %v1062 = vmul.f32 %v810, %v1030
      %v1063 = vmul.f32 %v812, %v1031
      %v1064 = vmul.f32 %v814, %v1032
      %v1065 = vmul.f32 %v816, %v1033
      %v1066 = vmul.f32 %v818, %v1034
      %v1067 = vmul.f32 %v820, %v1035
      %v1068 = vmul.f32 %v822, %v1036
      %v1069 = vmul.f32 %v824, %v1037
      %v1070 = vmul.f32 %v826, %v1038
      %v1071 = vmul.f32 %v828, %v1039
      %v1072 = vmul.f32 %v830, %v1040
      %v1073 = vmul.f32 %v832, %v1041
      %v1074 = vmul.f32 %v834, %v1042
      %v1075 = vmul.f32 %v836, %v1043
      %v1076 = vmul.f32 %v838, %v1044
      %v1077 = vmul.f32 %v840, %v1045
      %v1078 = vmul.f32 %v842, %v1046
      %v1079 = vmul.f32 %v844, %v1047
      %v1080 = vmul.f32 %v846, %v1048
      %v1081 = vmul.f32 %v848, %v1049
      %v1082 = vmul.f32 %v850, %v1050
      %v1083 = vmul.f32 %v852, %v1051
      %v1084 = vmul.f32 %v854, %v1052
      %v1085 = vmul.f32 %v856, %v1053
      %v1086 = vmul.f32 %v858, %v1054
      %v1087 = vmul.f32 %v860, %v1055
      %v1088 = vmul.f32 %v862, %v1056
      %v1089 = vmul.f32 %v864, %v1057
      %v1090 = vmul.f32 %v866, %v1058
      %v1091 = vadd.f32 %v1059, 0.2548296
      %v1092 = vadd.f32 %v1060, 0.2548296
      %v1093 = vadd.f32 %v1061, 0.2548296
      %v1094 = vadd.f32 %v1062, 0.2548296
      %v1095 = vadd.f32 %v1063, 0.2548296
      %v1096 = vadd.f32 %v1064, 0.2548296
      %v1097 = vadd.f32 %v1065, 0.2548296
      %v1098 = vadd.f32 %v1066, 0.2548296
      %v1099 = vadd.f32 %v1067, 0.2548296
      %v1100 = vadd.f32 %v1068, 0.2548296
      %v1101 = vadd.f32 %v1069, 0.2548296
      %v1102 = vadd.f32 %v1070, 0.2548296
      %v1103 = vadd.f32 %v1071, 0.2548296
      %v1104 = vadd.f32 %v1072, 0.2548296
      %v1105 = vadd.f32 %v1073, 0.2548296
      %v1106 = vadd.f32 %v1074, 0.2548296
      %v1107 = vadd.f32 %v1075, 0.2548296
      %v1108 = vadd.f32 %v1076, 0.2548296
      %v1109 = vadd.f32 %v1077, 0.2548296
      %v1110 = vadd.f32 %v1078, 0.2548296
      %v1111 = vadd.f32 %v1079, 0.2548296
      %v1112 = vadd.f32 %v1080, 0.2548296
      %v1113 = vadd.f32 %v1081, 0.2548296
      %v1114 = vadd.f32 %v1082, 0.2548296
      %v1115 = vadd.f32 %v1083, 0.2548296
      %v1116 = vadd.f32 %v1084, 0.2548296
      %v1117 = vadd.f32 %v1085, 0.2548296
      %v1118 = vadd.f32 %v1086, 0.2548296
      %v1119 = vadd.f32 %v1087, 0.2548296
      %v1120 = vadd.f32 %v1088, 0.2548296
      %v1121 = vadd.f32 %v1089, 0.2548296
      %v1122 = vadd.f32 %v1090, 0.2548296
      %v1123 = vmul.f32 %v804, %v1091
      %v1124 = vmul.f32 %v806, %v1092
      %v1125 = vmul.f32 %v808, %v1093
      %v1126 = vmul.f32 %v810, %v1094
      %v1127 = vmul.f32 %v812, %v1095
      %v1128 = vmul.f32 %v814, %v1096
      %v1129 = vmul.f32 %v816, %v1097
      %v1130 = vmul.f32 %v818, %v1098
      %v1131 = vmul.f32 %v820, %v1099
      %v1132 = vmul.f32 %v822, %v1100
      %v1133 = vmul.f32 %v824, %v1101
      %v1134 = vmul.f32 %v826, %v1102
      %v1135 = vmul.f32 %v828, %v1103
      %v1136 = vmul.f32 %v830, %v1104
      %v1137 = vmul.f32 %v832, %v1105
      %v1138 = vmul.f32 %v834, %v1106
      %v1139 = vmul.f32 %v836, %v1107
      %v1140 = vmul.f32 %v838, %v1108
      %v1141 = vmul.f32 %v840, %v1109
      %v1142 = vmul.f32 %v842, %v1110
      %v1143 = vmul.f32 %v844, %v1111
      %v1144 = vmul.f32 %v846, %v1112
      %v1145 = vmul.f32 %v848, %v1113
      %v1146 = vmul.f32 %v850, %v1114
      %v1147 = vmul.f32 %v852, %v1115
      %v1148 = vmul.f32 %v854, %v1116
      %v1149 = vmul.f32 %v856, %v1117
      %v1150 = vmul.f32 %v858, %v1118
      %v1151 = vmul.f32 %v860, %v1119
      %v1152 = vmul.f32 %v862, %v1120
      %v1153 = vmul.f32 %v864, %v1121
      %v1154 = vmul.f32 %v866, %v1122
      %v1155 = vmul.f32 %v707, %v707
      %v1156 = vmul.f32 %v708, %v708
      %v1157 = vmul.f32 %v709, %v709
      %v1158 = vmul.f32 %v710, %v710
      %v1159 = vmul.f32 %v711, %v711
      %v1160 = vmul.f32 %v712, %v712
      %v1161 = vmul.f32 %v713, %v713
      %v1162 = vmul.f32 %v714, %v714
      %v1163 = vmul.f32 %v715, %v715
      %v1164 = vmul.f32 %v716, %v716
      %v1165 = vmul.f32 %v717, %v717
      %v1166 = vmul.f32 %v718, %v718
      %v1167 = vmul.f32 %v719, %v719
      %v1168 = vmul.f32 %v720, %v720
      %v1169 = vmul.f32 %v721, %v721
      %v1170 = vmul.f32 %v722, %v722
      %v1171 = vmul.f32 %v723, %v723
      %v1172 = vmul.f32 %v724, %v724
      %v1173 = vmul.f32 %v725, %v725
      %v1174 = vmul.f32 %v726, %v726
      %v1175 = vmul.f32 %v727, %v727
      %v1176 = vmul.f32 %v728, %v728
      %v1177 = vmul.f32 %v729, %v729
      %v1178 = vmul.f32 %v730, %v730
      %v1179 = vmul.f32 %v731, %v731
      %v1180 = vmul.f32 %v732, %v732
      %v1181 = vmul.f32 %v733, %v733
      %v1182 = vmul.f32 %v734, %v734
      %v1183 = vmul.f32 %v735, %v735
      %v1184 = vmul.f32 %v736, %v736
      %v1185 = vmul.f32 %v737, %v737
      %v1186 = vmul.f32 %v738, %v738
      %v1187 = vsub.f32 0.0, %v1155
      %v1188 = vsub.f32 0.0, %v1156
      %v1189 = vsub.f32 0.0, %v1157
      %v1190 = vsub.f32 0.0, %v1158
      %v1191 = vsub.f32 0.0, %v1159
      %v1192 = vsub.f32 0.0, %v1160
      %v1193 = vsub.f32 0.0, %v1161
      %v1194 = vsub.f32 0.0, %v1162
      %v1195 = vsub.f32 0.0, %v1163
      %v1196 = vsub.f32 0.0, %v1164
      %v1197 = vsub.f32 0.0, %v1165
      %v1198 = vsub.f32 0.0, %v1166
      %v1199 = vsub.f32 0.0, %v1167
      %v1200 = vsub.f32 0.0, %v1168
      %v1201 = vsub.f32 0.0, %v1169
      %v1202 = vsub.f32 0.0, %v1170
      %v1203 = vsub.f32 0.0, %v1171
      %v1204 = vsub.f32 0.0, %v1172
      %v1205 = vsub.f32 0.0, %v1173
      %v1206 = vsub.f32 0.0, %v1174
      %v1207 = vsub.f32 0.0, %v1175
      %v1208 = vsub.f32 0.0, %v1176
      %v1209 = vsub.f32 0.0, %v1177
      %v1210 = vsub.f32 0.0, %v1178
      %v1211 = vsub.f32 0.0, %v1179
      %v1212 = vsub.f32 0.0, %v1180
      %v1213 = vsub.f32 0.0, %v1181
      %v1214 = vsub.f32 0.0, %v1182
      %v1215 = vsub.f32 0.0, %v1183
      %v1216 = vsub.f32 0.0, %v1184
      %v1217 = vsub.f32 0.0, %v1185
      %v1218 = vsub.f32 0.0, %v1186
      %v1219 = vmul.f32 %v1187, 1.442695
      %v1220 = vpow.pop %v1219
      %v1221 = vmul.f32 %v1188, 1.442695
      %v1222 = vpow.pop %v1221
      %v1223 = vmul.f32 %v1189, 1.442695
      %v1224 = vpow.pop %v1223
      %v1225 = vmul.f32 %v1190, 1.442695
      %v1226 = vpow.pop %v1225
      %v1227 = vmul.f32 %v1191, 1.442695
      %v1228 = vpow.pop %v1227
      %v1229 = vmul.f32 %v1192, 1.442695
      %v1230 = vpow.pop %v1229
      %v1231 = vmul.f32 %v1193, 1.442695
      %v1232 = vpow.pop %v1231
      %v1233 = vmul.f32 %v1194, 1.442695
      %v1234 = vpow.pop %v1233
      %v1235 = vmul.f32 %v1195, 1.442695
      %v1236 = vpow.pop %v1235
      %v1237 = vmul.f32 %v1196, 1.442695
      %v1238 = vpow.pop %v1237
      %v1239 = vmul.f32 %v1197, 1.442695
      %v1240 = vpow.pop %v1239
      %v1241 = vmul.f32 %v1198, 1.442695
      %v1242 = vpow.pop %v1241
      %v1243 = vmul.f32 %v1199, 1.442695
      %v1244 = vpow.pop %v1243
      %v1245 = vmul.f32 %v1200, 1.442695
      %v1246 = vpow.pop %v1245
      %v1247 = vmul.f32 %v1201, 1.442695
      %v1248 = vpow.pop %v1247
      %v1249 = vmul.f32 %v1202, 1.442695
      %v1250 = vpow.pop %v1249
      %v1251 = vmul.f32 %v1203, 1.442695
      %v1252 = vpow.pop %v1251
      %v1253 = vmul.f32 %v1204, 1.442695
      %v1254 = vpow.pop %v1253
      %v1255 = vmul.f32 %v1205, 1.442695
      %v1256 = vpow.pop %v1255
      %v1257 = vmul.f32 %v1206, 1.442695
      %v1258 = vpow.pop %v1257
      %v1259 = vmul.f32 %v1207, 1.442695
      %v1260 = vpow.pop %v1259
      %v1261 = vmul.f32 %v1208, 1.442695
      %v1262 = vpow.pop %v1261
      %v1263 = vmul.f32 %v1209, 1.442695
      %v1264 = vpow.pop %v1263
      %v1265 = vmul.f32 %v1210, 1.442695
      %v1266 = vpow.pop %v1265
      %v1267 = vmul.f32 %v1211, 1.442695
      %v1268 = vpow.pop %v1267
      %v1269 = vmul.f32 %v1212, 1.442695
      %v1270 = vpow.pop %v1269
      %v1271 = vmul.f32 %v1213, 1.442695
      %v1272 = vpow.pop %v1271
      %v1273 = vmul.f32 %v1214, 1.442695
      %v1274 = vpow.pop %v1273
      %v1275 = vmul.f32 %v1215, 1.442695
      %v1276 = vpow.pop %v1275
      %v1277 = vmul.f32 %v1216, 1.442695
      %v1278 = vpow.pop %v1277
      %v1279 = vmul.f32 %v1217, 1.442695
      %v1280 = vpow.pop %v1279
      %v1281 = vmul.f32 %v1218, 1.442695
      %v1282 = vpow.pop %v1281
      %v1283 = vmul.f32 %v1123, %v1220
      %v1284 = vmul.f32 %v1124, %v1222
      %v1285 = vmul.f32 %v1125, %v1224
      %v1286 = vmul.f32 %v1126, %v1226
      %v1287 = vmul.f32 %v1127, %v1228
      %v1288 = vmul.f32 %v1128, %v1230
      %v1289 = vmul.f32 %v1129, %v1232
      %v1290 = vmul.f32 %v1130, %v1234
      %v1291 = vmul.f32 %v1131, %v1236
      %v1292 = vmul.f32 %v1132, %v1238
      %v1293 = vmul.f32 %v1133, %v1240
      %v1294 = vmul.f32 %v1134, %v1242
      %v1295 = vmul.f32 %v1135, %v1244
      %v1296 = vmul.f32 %v1136, %v1246
      %v1297 = vmul.f32 %v1137, %v1248
      %v1298 = vmul.f32 %v1138, %v1250
      %v1299 = vmul.f32 %v1139, %v1252
      %v1300 = vmul.f32 %v1140, %v1254
      %v1301 = vmul.f32 %v1141, %v1256
      %v1302 = vmul.f32 %v1142, %v1258
      %v1303 = vmul.f32 %v1143, %v1260
      %v1304 = vmul.f32 %v1144, %v1262
      %v1305 = vmul.f32 %v1145, %v1264
      %v1306 = vmul.f32 %v1146, %v1266
      %v1307 = vmul.f32 %v1147, %v1268
      %v1308 = vmul.f32 %v1148, %v1270
      %v1309 = vmul.f32 %v1149, %v1272
      %v1310 = vmul.f32 %v1150, %v1274
      %v1311 = vmul.f32 %v1151, %v1276
      %v1312 = vmul.f32 %v1152, %v1278
      %v1313 = vmul.f32 %v1153, %v1280
      %v1314 = vmul.f32 %v1154, %v1282
      %v1315 = vsub.f32 1.0, %v1283
      %v1316 = vsub.f32 1.0, %v1284
      %v1317 = vsub.f32 1.0, %v1285
      %v1318 = vsub.f32 1.0, %v1286
      %v1319 = vsub.f32 1.0, %v1287
      %v1320 = vsub.f32 1.0, %v1288
      %v1321 = vsub.f32 1.0, %v1289
      %v1322 = vsub.f32 1.0, %v1290
      %v1323 = vsub.f32 1.0, %v1291
      %v1324 = vsub.f32 1.0, %v1292
      %v1325 = vsub.f32 1.0, %v1293
      %v1326 = vsub.f32 1.0, %v1294
      %v1327 = vsub.f32 1.0, %v1295
      %v1328 = vsub.f32 1.0, %v1296
      %v1329 = vsub.f32 1.0, %v1297
      %v1330 = vsub.f32 1.0, %v1298
      %v1331 = vsub.f32 1.0, %v1299
      %v1332 = vsub.f32 1.0, %v1300
      %v1333 = vsub.f32 1.0, %v1301
      %v1334 = vsub.f32 1.0, %v1302
      %v1335 = vsub.f32 1.0, %v1303
      %v1336 = vsub.f32 1.0, %v1304
      %v1337 = vsub.f32 1.0, %v1305
      %v1338 = vsub.f32 1.0, %v1306
      %v1339 = vsub.f32 1.0, %v1307
      %v1340 = vsub.f32 1.0, %v1308
      %v1341 = vsub.f32 1.0, %v1309
      %v1342 = vsub.f32 1.0, %v1310
      %v1343 = vsub.f32 1.0, %v1311
      %v1344 = vsub.f32 1.0, %v1312
      %v1345 = vsub.f32 1.0, %v1313
      %v1346 = vsub.f32 1.0, %v1314
      %vm1347 = vcmp.lt.f32.partialorder %v675, 0.0
      %vm1348 = vcmp.lt.f32.partialorder %v676, 0.0
      %vm1349 = vcmp.lt.f32.partialorder %v677, 0.0
      %vm1350 = vcmp.lt.f32.partialorder %v678, 0.0
      %vm1351 = vcmp.lt.f32.partialorder %v679, 0.0
      %vm1352 = vcmp.lt.f32.partialorder %v680, 0.0
      %vm1353 = vcmp.lt.f32.partialorder %v681, 0.0
      %vm1354 = vcmp.lt.f32.partialorder %v682, 0.0
      %vm1355 = vcmp.lt.f32.partialorder %v683, 0.0
      %vm1356 = vcmp.lt.f32.partialorder %v684, 0.0
      %vm1357 = vcmp.lt.f32.partialorder %v685, 0.0
      %vm1358 = vcmp.lt.f32.partialorder %v686, 0.0
      %vm1359 = vcmp.lt.f32.partialorder %v687, 0.0
      %vm1360 = vcmp.lt.f32.partialorder %v688, 0.0
      %vm1361 = vcmp.lt.f32.partialorder %v689, 0.0
      %vm1362 = vcmp.lt.f32.partialorder %v690, 0.0
      %vm1363 = vcmp.lt.f32.partialorder %v691, 0.0
      %vm1364 = vcmp.lt.f32.partialorder %v692, 0.0
      %vm1365 = vcmp.lt.f32.partialorder %v693, 0.0
      %vm1366 = vcmp.lt.f32.partialorder %v694, 0.0
      %vm1367 = vcmp.lt.f32.partialorder %v695, 0.0
      %vm1368 = vcmp.lt.f32.partialorder %v696, 0.0
      %vm1369 = vcmp.lt.f32.partialorder %v697, 0.0
      %vm1370 = vcmp.lt.f32.partialorder %v698, 0.0
      %vm1371 = vcmp.lt.f32.partialorder %v699, 0.0
      %vm1372 = vcmp.lt.f32.partialorder %v700, 0.0
      %vm1373 = vcmp.lt.f32.partialorder %v701, 0.0
      %vm1374 = vcmp.lt.f32.partialorder %v702, 0.0
      %vm1375 = vcmp.lt.f32.partialorder %v703, 0.0
      %vm1376 = vcmp.lt.f32.partialorder %v704, 0.0
      %vm1377 = vcmp.lt.f32.partialorder %v705, 0.0
      %vm1378 = vcmp.lt.f32.partialorder %v706, 0.0
      %v1379 = vsub.f32 0.0, %v1315
      %v1380 = vsub.f32 0.0, %v1316
      %v1381 = vsub.f32 0.0, %v1317
      %v1382 = vsub.f32 0.0, %v1318
      %v1383 = vsub.f32 0.0, %v1319
      %v1384 = vsub.f32 0.0, %v1320
      %v1385 = vsub.f32 0.0, %v1321
      %v1386 = vsub.f32 0.0, %v1322
      %v1387 = vsub.f32 0.0, %v1323
      %v1388 = vsub.f32 0.0, %v1324
      %v1389 = vsub.f32 0.0, %v1325
      %v1390 = vsub.f32 0.0, %v1326
      %v1391 = vsub.f32 0.0, %v1327
      %v1392 = vsub.f32 0.0, %v1328
      %v1393 = vsub.f32 0.0, %v1329
      %v1394 = vsub.f32 0.0, %v1330
      %v1395 = vsub.f32 0.0, %v1331
      %v1396 = vsub.f32 0.0, %v1332
      %v1397 = vsub.f32 0.0, %v1333
      %v1398 = vsub.f32 0.0, %v1334
      %v1399 = vsub.f32 0.0, %v1335
      %v1400 = vsub.f32 0.0, %v1336
      %v1401 = vsub.f32 0.0, %v1337
      %v1402 = vsub.f32 0.0, %v1338
      %v1403 = vsub.f32 0.0, %v1339
      %v1404 = vsub.f32 0.0, %v1340
      %v1405 = vsub.f32 0.0, %v1341
      %v1406 = vsub.f32 0.0, %v1342
      %v1407 = vsub.f32 0.0, %v1343
      %v1408 = vsub.f32 0.0, %v1344
      %v1409 = vsub.f32 0.0, %v1345
      %v1410 = vsub.f32 0.0, %v1346
      %v1411 = vsel %vm1347, %v1379, %v1315
      %v1412 = vsel %vm1348, %v1380, %v1316
      %v1413 = vsel %vm1349, %v1381, %v1317
      %v1414 = vsel %vm1350, %v1382, %v1318
      %v1415 = vsel %vm1351, %v1383, %v1319
      %v1416 = vsel %vm1352, %v1384, %v1320
      %v1417 = vsel %vm1353, %v1385, %v1321
      %v1418 = vsel %vm1354, %v1386, %v1322
      %v1419 = vsel %vm1355, %v1387, %v1323
      %v1420 = vsel %vm1356, %v1388, %v1324
      %v1421 = vsel %vm1357, %v1389, %v1325
      %v1422 = vsel %vm1358, %v1390, %v1326
      %v1423 = vsel %vm1359, %v1391, %v1327
      %v1424 = vsel %vm1360, %v1392, %v1328
      %v1425 = vsel %vm1361, %v1393, %v1329
      %v1426 = vsel %vm1362, %v1394, %v1330
      %v1427 = vsel %vm1363, %v1395, %v1331
      %v1428 = vsel %vm1364, %v1396, %v1332
      %v1429 = vsel %vm1365, %v1397, %v1333
      %v1430 = vsel %vm1366, %v1398, %v1334
      %v1431 = vsel %vm1367, %v1399, %v1335
      %v1432 = vsel %vm1368, %v1400, %v1336
      %v1433 = vsel %vm1369, %v1401, %v1337
      %v1434 = vsel %vm1370, %v1402, %v1338
      %v1435 = vsel %vm1371, %v1403, %v1339
      %v1436 = vsel %vm1372, %v1404, %v1340
      %v1437 = vsel %vm1373, %v1405, %v1341
      %v1438 = vsel %vm1374, %v1406, %v1342
      %v1439 = vsel %vm1375, %v1407, %v1343
      %v1440 = vsel %vm1376, %v1408, %v1344
      %v1441 = vsel %vm1377, %v1409, %v1345
      %v1442 = vsel %vm1378, %v1410, %v1346
      %v1443 = vadd.f32 %v1411, 1.0
      %v1444 = vadd.f32 %v1412, 1.0
      %v1445 = vadd.f32 %v1413, 1.0
      %v1446 = vadd.f32 %v1414, 1.0
      %v1447 = vadd.f32 %v1415, 1.0
      %v1448 = vadd.f32 %v1416, 1.0
      %v1449 = vadd.f32 %v1417, 1.0
      %v1450 = vadd.f32 %v1418, 1.0
      %v1451 = vadd.f32 %v1419, 1.0
      %v1452 = vadd.f32 %v1420, 1.0
      %v1453 = vadd.f32 %v1421, 1.0
      %v1454 = vadd.f32 %v1422, 1.0
      %v1455 = vadd.f32 %v1423, 1.0
      %v1456 = vadd.f32 %v1424, 1.0
      %v1457 = vadd.f32 %v1425, 1.0
      %v1458 = vadd.f32 %v1426, 1.0
      %v1459 = vadd.f32 %v1427, 1.0
      %v1460 = vadd.f32 %v1428, 1.0
      %v1461 = vadd.f32 %v1429, 1.0
      %v1462 = vadd.f32 %v1430, 1.0
      %v1463 = vadd.f32 %v1431, 1.0
      %v1464 = vadd.f32 %v1432, 1.0
      %v1465 = vadd.f32 %v1433, 1.0
      %v1466 = vadd.f32 %v1434, 1.0
      %v1467 = vadd.f32 %v1435, 1.0
      %v1468 = vadd.f32 %v1436, 1.0
      %v1469 = vadd.f32 %v1437, 1.0
      %v1470 = vadd.f32 %v1438, 1.0
      %v1471 = vadd.f32 %v1439, 1.0
      %v1472 = vadd.f32 %v1440, 1.0
      %v1473 = vadd.f32 %v1441, 1.0
      %v1474 = vadd.f32 %v1442, 1.0
      %v1475 = vmul.f32 %v643, %v1443
      %v1476 = vmul.f32 %v644, %v1444
      %v1477 = vmul.f32 %v645, %v1445
      %v1478 = vmul.f32 %v646, %v1446
      %v1479 = vmul.f32 %v647, %v1447
      %v1480 = vmul.f32 %v648, %v1448
      %v1481 = vmul.f32 %v649, %v1449
      %v1482 = vmul.f32 %v650, %v1450
      %v1483 = vmul.f32 %v651, %v1451
      %v1484 = vmul.f32 %v652, %v1452
      %v1485 = vmul.f32 %v653, %v1453
      %v1486 = vmul.f32 %v654, %v1454
      %v1487 = vmul.f32 %v655, %v1455
      %v1488 = vmul.f32 %v656, %v1456
      %v1489 = vmul.f32 %v657, %v1457
      %v1490 = vmul.f32 %v658, %v1458
      %v1491 = vmul.f32 %v659, %v1459
      %v1492 = vmul.f32 %v660, %v1460
      %v1493 = vmul.f32 %v661, %v1461
      %v1494 = vmul.f32 %v662, %v1462
      %v1495 = vmul.f32 %v663, %v1463
      %v1496 = vmul.f32 %v664, %v1464
      %v1497 = vmul.f32 %v665, %v1465
      %v1498 = vmul.f32 %v666, %v1466
      %v1499 = vmul.f32 %v667, %v1467
      %v1500 = vmul.f32 %v668, %v1468
      %v1501 = vmul.f32 %v669, %v1469
      %v1502 = vmul.f32 %v670, %v1470
      %v1503 = vmul.f32 %v671, %v1471
      %v1504 = vmul.f32 %v672, %v1472
      %v1505 = vmul.f32 %v673, %v1473
      %v1506 = vmul.f32 %v674, %v1474
      %v1507 = vpack.c.bf16 %v1476, %v1475
      %v1508 = vpack.c.bf16 %v1478, %v1477
      %v1509 = vpack.c.bf16 %v1480, %v1479
      %v1510 = vpack.c.bf16 %v1482, %v1481
      %v1511 = vpack.c.bf16 %v1484, %v1483
      %v1512 = vpack.c.bf16 %v1486, %v1485
      %v1513 = vpack.c.bf16 %v1488, %v1487
      %v1514 = vpack.c.bf16 %v1490, %v1489
      %v1515 = vpack.c.bf16 %v1492, %v1491
      %v1516 = vpack.c.bf16 %v1494, %v1493
      %v1517 = vpack.c.bf16 %v1496, %v1495
      %v1518 = vpack.c.bf16 %v1498, %v1497
      %v1519 = vpack.c.bf16 %v1500, %v1499
      %v1520 = vpack.c.bf16 %v1502, %v1501
      %v1521 = vpack.c.bf16 %v1504, %v1503
      %v1522 = vpack.c.bf16 %v1506, %v1505
      %v1523 = vld [vmem:[%s3] sm:$0xf]
      %v1524 = vld [vmem:[%s3 + $0x4] sm:$0xf]
      %v1525 = vld [vmem:[%s3 + $0x8] sm:$0xf]
      %v1526 = vld [vmem:[%s3 + $0xc] sm:$0xf]
      %v1527 = vld [vmem:[%s3 + $0x10] sm:$0xf]
      %v1528 = vld [vmem:[%s3 + $0x14] sm:$0xf]
      %v1529 = vld [vmem:[%s3 + $0x18] sm:$0xf]
      %v1530 = vld [vmem:[%s3 + $0x1c] sm:$0xf]
      %v1531 = vld [vmem:[%s3 + $0x20] sm:$0xf]
      %v1532 = vld [vmem:[%s3 + $0x24] sm:$0xf]
      %v1533 = vld [vmem:[%s3 + $0x28] sm:$0xf]
      %v1534 = vld [vmem:[%s3 + $0x2c] sm:$0xf]
      %v1535 = vld [vmem:[%s3 + $0x30] sm:$0xf]
      %v1536 = vld [vmem:[%s3 + $0x34] sm:$0xf]
      %v1537 = vld [vmem:[%s3 + $0x38] sm:$0xf]
      %v1538 = vld [vmem:[%s3 + $0x3c] sm:$0xf]
      %v1539 = vld [vmem:[%s4] sm:$0x1]
      %v1541 = vlaneseq
      %v1542 = vshrl.u32 %v1541, 7
      %v1543 = vsub.s32 0, %v1542
      %v1544 = vrot.slane %v1539, %v1543
      %v1562 = vunpack.c.l.b16 %v1523
      %v1563 = vunpack.c.l.b16 %v1524
      %v1564 = vunpack.c.l.b16 %v1525
      %v1565 = vunpack.c.l.b16 %v1526
      %v1566 = vunpack.c.l.b16 %v1527
      %v1567 = vunpack.c.l.b16 %v1528
      %v1568 = vunpack.c.l.b16 %v1529
      %v1569 = vunpack.c.l.b16 %v1530
      %v1570 = vunpack.c.l.b16 %v1531
      %v1571 = vunpack.c.l.b16 %v1532
      %v1572 = vunpack.c.l.b16 %v1533
      %v1573 = vunpack.c.l.b16 %v1534
      %v1574 = vunpack.c.l.b16 %v1535
      %v1575 = vunpack.c.l.b16 %v1536
      %v1576 = vunpack.c.l.b16 %v1537
      %v1577 = vunpack.c.l.b16 %v1538
      %v1578 = vpack.c.b16 %v1563, %v1562
      %v1579 = vpack.c.b16 %v1565, %v1564
      %v1580 = vpack.c.b16 %v1567, %v1566
      %v1581 = vpack.c.b16 %v1569, %v1568
      %v1582 = vpack.c.b16 %v1571, %v1570
      %v1583 = vpack.c.b16 %v1573, %v1572
      %v1584 = vpack.c.b16 %v1575, %v1574
      %v1585 = vpack.c.b16 %v1577, %v1576
      %1594 = vmatprep.subr.bf16.mxu0 0
      %1595 = vmatpush1.bf16.msra.mxu0 %v1578
      %1596 = vmatprep.subr.bf16.mxu0 0
      %1597 = vmatpush1.bf16.msra.mxu0 %v1579
      %1598 = vmatprep.subr.bf16.mxu0 0
      %1599 = vmatpush1.bf16.msra.mxu0 %v1580
      %1600 = vmatprep.subr.bf16.mxu0 0
      %1601 = vmatpush1.bf16.msra.mxu0 %v1581
      %1602 = vmatprep.subr.bf16.mxu0 0
      %1603 = vmatpush1.bf16.msra.mxu0 %v1582
      %1604 = vmatprep.subr.bf16.mxu0 0
      %1605 = vmatpush1.bf16.msra.mxu0 %v1583
      %1606 = vmatprep.subr.bf16.mxu0 0
      %1607 = vmatpush1.bf16.msra.mxu0 %v1584
      %1608 = vmatprep.subr.bf16.mxu0 0
      %1609 = vmatpush1.bf16.msra.mxu0 %v1585
      %1610 = vmatprep.subr.bf16.mxu0 0
      %1611 = vmatpush1.bf16.msra.mxu0 0
      %1612 = vmatprep.subr.bf16.mxu0 0
      %1613 = vmatpush1.bf16.msra.mxu0 0
      %1614 = vmatprep.subr.bf16.mxu0 0
      %1615 = vmatpush1.bf16.msra.mxu0 0
      %1616 = vmatprep.subr.bf16.mxu0 0
      %1617 = vmatpush1.bf16.msra.mxu0 0
      %1618 = vmatprep.subr.bf16.mxu0 0
      %1619 = vmatpush1.bf16.msra.mxu0 0
      %1620 = vmatprep.subr.bf16.mxu0 0
      %1621 = vmatpush1.bf16.msra.mxu0 0
      %1622 = vmatprep.subr.bf16.mxu0 0
      %1623 = vmatpush1.bf16.msra.mxu0 0
      %1624 = vmatprep.subr.bf16.mxu0 0
      %1625 = vmatpush1.bf16.msra.mxu0 0
      %1626 = vmatprep.mubr.bf16.mxu0 0
      %1627 = vmatmul.mubr.bf16.gmra.mrb[0].mxu0 %v1507
      %v1628 = vpop.f32.mrb[0].mxu0
      %v1629 = vadd.f32 %v1544, %v1628
      %v1630 = vpop.f32.mrb[0].mxu0
      %v1631 = vpop.f32.mrb[0].mxu0
      %v1632 = vadd.f32 %v1544, %v1631
      %v1633 = vpop.f32.mrb[0].mxu0
      %1634 = vmatprep.mubr.bf16.mxu0 0
      %1635 = vmatmul.mubr.bf16.gmra.mrb[0].mxu0 %v1508
      %v1636 = vpop.f32.mrb[0].mxu0
      %v1637 = vadd.f32 %v1544, %v1636
      %v1638 = vpop.f32.mrb[0].mxu0
      %v1639 = vpop.f32.mrb[0].mxu0
      %v1640 = vadd.f32 %v1544, %v1639
      %v1641 = vpop.f32.mrb[0].mxu0
      %1642 = vmatprep.mubr.bf16.mxu0 0
      %1643 = vmatmul.mubr.bf16.gmra.mrb[0].mxu0 %v1509
      %v1644 = vpop.f32.mrb[0].mxu0
      %v1645 = vadd.f32 %v1544, %v1644
      %v1646 = vpop.f32.mrb[0].mxu0
      %v1647 = vpop.f32.mrb[0].mxu0
      %v1648 = vadd.f32 %v1544, %v1647
      %v1649 = vpop.f32.mrb[0].mxu0
      %1650 = vmatprep.mubr.bf16.mxu0 0
      %1651 = vmatmul.mubr.bf16.gmra.mrb[0].mxu0 %v1510
      %v1652 = vpop.f32.mrb[0].mxu0
      %v1653 = vadd.f32 %v1544, %v1652
      %v1654 = vpop.f32.mrb[0].mxu0
      %v1655 = vpop.f32.mrb[0].mxu0
      %v1656 = vadd.f32 %v1544, %v1655
      %v1657 = vpop.f32.mrb[0].mxu0
      %1658 = vmatprep.mubr.bf16.mxu0 0
      %1659 = vmatmul.mubr.bf16.gmra.mrb[0].mxu0 %v1511
      %v1660 = vpop.f32.mrb[0].mxu0
      %v1661 = vadd.f32 %v1544, %v1660
      %v1662 = vpop.f32.mrb[0].mxu0
      %v1663 = vpop.f32.mrb[0].mxu0
      %v1664 = vadd.f32 %v1544, %v1663
      %v1665 = vpop.f32.mrb[0].mxu0
      %1666 = vmatprep.mubr.bf16.mxu0 0
      %1667 = vmatmul.mubr.bf16.gmra.mrb[0].mxu0 %v1512
      %v1668 = vpop.f32.mrb[0].mxu0
      %v1669 = vadd.f32 %v1544, %v1668
      %v1670 = vpop.f32.mrb[0].mxu0
      %v1671 = vpop.f32.mrb[0].mxu0
      %v1672 = vadd.f32 %v1544, %v1671
      %v1673 = vpop.f32.mrb[0].mxu0
      %1674 = vmatprep.mubr.bf16.mxu0 0
      %1675 = vmatmul.mubr.bf16.gmra.mrb[0].mxu0 %v1513
      %v1676 = vpop.f32.mrb[0].mxu0
      %v1677 = vadd.f32 %v1544, %v1676
      %v1678 = vpop.f32.mrb[0].mxu0
      %v1679 = vpop.f32.mrb[0].mxu0
      %v1680 = vadd.f32 %v1544, %v1679
      %v1681 = vpop.f32.mrb[0].mxu0
      %1682 = vmatprep.mubr.bf16.mxu0 0
      %1683 = vmatmul.mubr.bf16.gmra.mrb[0].mxu0 %v1514
      %v1684 = vpop.f32.mrb[0].mxu0
      %v1685 = vadd.f32 %v1544, %v1684
      %v1686 = vpop.f32.mrb[0].mxu0
      %v1687 = vpop.f32.mrb[0].mxu0
      %v1688 = vadd.f32 %v1544, %v1687
      %v1689 = vpop.f32.mrb[0].mxu0
      %1690 = vmatprep.mubr.bf16.mxu0 0
      %1691 = vmatmul.mubr.bf16.gmra.mrb[0].mxu0 %v1515
      %v1692 = vpop.f32.mrb[0].mxu0
      %v1693 = vadd.f32 %v1544, %v1692
      %v1694 = vpop.f32.mrb[0].mxu0
      %v1695 = vpop.f32.mrb[0].mxu0
      %v1696 = vadd.f32 %v1544, %v1695
      %v1697 = vpop.f32.mrb[0].mxu0
      %1698 = vmatprep.mubr.bf16.mxu0 0
      %1699 = vmatmul.mubr.bf16.gmra.mrb[0].mxu0 %v1516
      %v1700 = vpop.f32.mrb[0].mxu0
      %v1701 = vadd.f32 %v1544, %v1700
      %v1702 = vpop.f32.mrb[0].mxu0
      %v1703 = vpop.f32.mrb[0].mxu0
      %v1704 = vadd.f32 %v1544, %v1703
      %v1705 = vpop.f32.mrb[0].mxu0
      %1706 = vmatprep.mubr.bf16.mxu0 0
      %1707 = vmatmul.mubr.bf16.gmra.mrb[0].mxu0 %v1517
      %v1708 = vpop.f32.mrb[0].mxu0
      %v1709 = vadd.f32 %v1544, %v1708
      %v1710 = vpop.f32.mrb[0].mxu0
      %v1711 = vpop.f32.mrb[0].mxu0
      %v1712 = vadd.f32 %v1544, %v1711
      %v1713 = vpop.f32.mrb[0].mxu0
      %1714 = vmatprep.mubr.bf16.mxu0 0
      %1715 = vmatmul.mubr.bf16.gmra.mrb[0].mxu0 %v1518
      %v1716 = vpop.f32.mrb[0].mxu0
      %v1717 = vadd.f32 %v1544, %v1716
      %v1718 = vpop.f32.mrb[0].mxu0
      %v1719 = vpop.f32.mrb[0].mxu0
      %v1720 = vadd.f32 %v1544, %v1719
      %v1721 = vpop.f32.mrb[0].mxu0
      %1722 = vmatprep.mubr.bf16.mxu0 0
      %1723 = vmatmul.mubr.bf16.gmra.mrb[0].mxu0 %v1519
      %v1724 = vpop.f32.mrb[0].mxu0
      %v1725 = vadd.f32 %v1544, %v1724
      %v1726 = vpop.f32.mrb[0].mxu0
      %v1727 = vpop.f32.mrb[0].mxu0
      %v1728 = vadd.f32 %v1544, %v1727
      %v1729 = vpop.f32.mrb[0].mxu0
      %1730 = vmatprep.mubr.bf16.mxu0 0
      %1731 = vmatmul.mubr.bf16.gmra.mrb[0].mxu0 %v1520
      %v1732 = vpop.f32.mrb[0].mxu0
      %v1733 = vadd.f32 %v1544, %v1732
      %v1734 = vpop.f32.mrb[0].mxu0
      %v1735 = vpop.f32.mrb[0].mxu0
      %v1736 = vadd.f32 %v1544, %v1735
      %v1737 = vpop.f32.mrb[0].mxu0
      %1738 = vmatprep.mubr.bf16.mxu0 0
      %1739 = vmatmul.mubr.bf16.gmra.mrb[0].mxu0 %v1521
      %v1740 = vpop.f32.mrb[0].mxu0
      %v1741 = vadd.f32 %v1544, %v1740
      %v1742 = vpop.f32.mrb[0].mxu0
      %v1743 = vpop.f32.mrb[0].mxu0
      %v1744 = vadd.f32 %v1544, %v1743
      %v1745 = vpop.f32.mrb[0].mxu0
      %1746 = vmatprep.mubr.bf16.mxu0 0
      %1747 = vmatmul.mubr.bf16.gmra.mrb[0].mxu0 %v1522
      %v1748 = vpop.f32.mrb[0].mxu0
      %v1749 = vadd.f32 %v1544, %v1748
      %v1750 = vpop.f32.mrb[0].mxu0
      %v1751 = vpop.f32.mrb[0].mxu0
      %v1752 = vadd.f32 %v1544, %v1751
      %v1753 = vpop.f32.mrb[0].mxu0
      %1754 = vdwg.mxu0
      %v1755 = vmul.f32 %v1629, 0.5
      %v1756 = vmul.f32 %v1632, 0.5
      %v1757 = vmul.f32 %v1637, 0.5
      %v1758 = vmul.f32 %v1640, 0.5
      %v1759 = vmul.f32 %v1645, 0.5
      %v1760 = vmul.f32 %v1648, 0.5
      %v1761 = vmul.f32 %v1653, 0.5
      %v1762 = vmul.f32 %v1656, 0.5
      %v1763 = vmul.f32 %v1661, 0.5
      %v1764 = vmul.f32 %v1664, 0.5
      %v1765 = vmul.f32 %v1669, 0.5
      %v1766 = vmul.f32 %v1672, 0.5
      %v1767 = vmul.f32 %v1677, 0.5
      %v1768 = vmul.f32 %v1680, 0.5
      %v1769 = vmul.f32 %v1685, 0.5
      %v1770 = vmul.f32 %v1688, 0.5
      %v1771 = vmul.f32 %v1693, 0.5
      %v1772 = vmul.f32 %v1696, 0.5
      %v1773 = vmul.f32 %v1701, 0.5
      %v1774 = vmul.f32 %v1704, 0.5
      %v1775 = vmul.f32 %v1709, 0.5
      %v1776 = vmul.f32 %v1712, 0.5
      %v1777 = vmul.f32 %v1717, 0.5
      %v1778 = vmul.f32 %v1720, 0.5
      %v1779 = vmul.f32 %v1725, 0.5
      %v1780 = vmul.f32 %v1728, 0.5
      %v1781 = vmul.f32 %v1733, 0.5
      %v1782 = vmul.f32 %v1736, 0.5
      %v1783 = vmul.f32 %v1741, 0.5
      %v1784 = vmul.f32 %v1744, 0.5
      %v1785 = vmul.f32 %v1749, 0.5
      %v1786 = vmul.f32 %v1752, 0.5
      %v1787 = vmul.f32 %v1629, 0.70710677
      %v1788 = vmul.f32 %v1632, 0.70710677
      %v1789 = vmul.f32 %v1637, 0.70710677
      %v1790 = vmul.f32 %v1640, 0.70710677
      %v1791 = vmul.f32 %v1645, 0.70710677
      %v1792 = vmul.f32 %v1648, 0.70710677
      %v1793 = vmul.f32 %v1653, 0.70710677
      %v1794 = vmul.f32 %v1656, 0.70710677
      %v1795 = vmul.f32 %v1661, 0.70710677
      %v1796 = vmul.f32 %v1664, 0.70710677
      %v1797 = vmul.f32 %v1669, 0.70710677
      %v1798 = vmul.f32 %v1672, 0.70710677
      %v1799 = vmul.f32 %v1677, 0.70710677
      %v1800 = vmul.f32 %v1680, 0.70710677
      %v1801 = vmul.f32 %v1685, 0.70710677
      %v1802 = vmul.f32 %v1688, 0.70710677
      %v1803 = vmul.f32 %v1693, 0.70710677
      %v1804 = vmul.f32 %v1696, 0.70710677
      %v1805 = vmul.f32 %v1701, 0.70710677
      %v1806 = vmul.f32 %v1704, 0.70710677
      %v1807 = vmul.f32 %v1709, 0.70710677
      %v1808 = vmul.f32 %v1712, 0.70710677
      %v1809 = vmul.f32 %v1717, 0.70710677
      %v1810 = vmul.f32 %v1720, 0.70710677
      %v1811 = vmul.f32 %v1725, 0.70710677
      %v1812 = vmul.f32 %v1728, 0.70710677
      %v1813 = vmul.f32 %v1733, 0.70710677
      %v1814 = vmul.f32 %v1736, 0.70710677
      %v1815 = vmul.f32 %v1741, 0.70710677
      %v1816 = vmul.f32 %v1744, 0.70710677
      %v1817 = vmul.f32 %v1749, 0.70710677
      %v1818 = vmul.f32 %v1752, 0.70710677
      %v1819 = vand.u32 2147483647, %v1787
      %v1820 = vand.u32 2147483647, %v1788
      %v1821 = vand.u32 2147483647, %v1789
      %v1822 = vand.u32 2147483647, %v1790
      %v1823 = vand.u32 2147483647, %v1791
      %v1824 = vand.u32 2147483647, %v1792
      %v1825 = vand.u32 2147483647, %v1793
      %v1826 = vand.u32 2147483647, %v1794
      %v1827 = vand.u32 2147483647, %v1795
      %v1828 = vand.u32 2147483647, %v1796
      %v1829 = vand.u32 2147483647, %v1797
      %v1830 = vand.u32 2147483647, %v1798
      %v1831 = vand.u32 2147483647, %v1799
      %v1832 = vand.u32 2147483647, %v1800
      %v1833 = vand.u32 2147483647, %v1801
      %v1834 = vand.u32 2147483647, %v1802
      %v1835 = vand.u32 2147483647, %v1803
      %v1836 = vand.u32 2147483647, %v1804
      %v1837 = vand.u32 2147483647, %v1805
      %v1838 = vand.u32 2147483647, %v1806
      %v1839 = vand.u32 2147483647, %v1807
      %v1840 = vand.u32 2147483647, %v1808
      %v1841 = vand.u32 2147483647, %v1809
      %v1842 = vand.u32 2147483647, %v1810
      %v1843 = vand.u32 2147483647, %v1811
      %v1844 = vand.u32 2147483647, %v1812
      %v1845 = vand.u32 2147483647, %v1813
      %v1846 = vand.u32 2147483647, %v1814
      %v1847 = vand.u32 2147483647, %v1815
      %v1848 = vand.u32 2147483647, %v1816
      %v1849 = vand.u32 2147483647, %v1817
      %v1850 = vand.u32 2147483647, %v1818
      %v1851 = vmul.f32 %v1819, 0.3275911
      %v1852 = vmul.f32 %v1820, 0.3275911
      %v1853 = vmul.f32 %v1821, 0.3275911
      %v1854 = vmul.f32 %v1822, 0.3275911
      %v1855 = vmul.f32 %v1823, 0.3275911
      %v1856 = vmul.f32 %v1824, 0.3275911
      %v1857 = vmul.f32 %v1825, 0.3275911
      %v1858 = vmul.f32 %v1826, 0.3275911
      %v1859 = vmul.f32 %v1827, 0.3275911
      %v1860 = vmul.f32 %v1828, 0.3275911
      %v1861 = vmul.f32 %v1829, 0.3275911
      %v1862 = vmul.f32 %v1830, 0.3275911
      %v1863 = vmul.f32 %v1831, 0.3275911
      %v1864 = vmul.f32 %v1832, 0.3275911
      %v1865 = vmul.f32 %v1833, 0.3275911
      %v1866 = vmul.f32 %v1834, 0.3275911
      %v1867 = vmul.f32 %v1835, 0.3275911
      %v1868 = vmul.f32 %v1836, 0.3275911
      %v1869 = vmul.f32 %v1837, 0.3275911
      %v1870 = vmul.f32 %v1838, 0.3275911
      %v1871 = vmul.f32 %v1839, 0.3275911
      %v1872 = vmul.f32 %v1840, 0.3275911
      %v1873 = vmul.f32 %v1841, 0.3275911
      %v1874 = vmul.f32 %v1842, 0.3275911
      %v1875 = vmul.f32 %v1843, 0.3275911
      %v1876 = vmul.f32 %v1844, 0.3275911
      %v1877 = vmul.f32 %v1845, 0.3275911
      %v1878 = vmul.f32 %v1846, 0.3275911
      %v1879 = vmul.f32 %v1847, 0.3275911
      %v1880 = vmul.f32 %v1848, 0.3275911
      %v1881 = vmul.f32 %v1849, 0.3275911
      %v1882 = vmul.f32 %v1850, 0.3275911
      %v1883 = vadd.f32 %v1851, 1.0
      %v1884 = vadd.f32 %v1852, 1.0
      %v1885 = vadd.f32 %v1853, 1.0
      %v1886 = vadd.f32 %v1854, 1.0
      %v1887 = vadd.f32 %v1855, 1.0
      %v1888 = vadd.f32 %v1856, 1.0
      %v1889 = vadd.f32 %v1857, 1.0
      %v1890 = vadd.f32 %v1858, 1.0
      %v1891 = vadd.f32 %v1859, 1.0
      %v1892 = vadd.f32 %v1860, 1.0
      %v1893 = vadd.f32 %v1861, 1.0
      %v1894 = vadd.f32 %v1862, 1.0
      %v1895 = vadd.f32 %v1863, 1.0
      %v1896 = vadd.f32 %v1864, 1.0
      %v1897 = vadd.f32 %v1865, 1.0
      %v1898 = vadd.f32 %v1866, 1.0
      %v1899 = vadd.f32 %v1867, 1.0
      %v1900 = vadd.f32 %v1868, 1.0
      %v1901 = vadd.f32 %v1869, 1.0
      %v1902 = vadd.f32 %v1870, 1.0
      %v1903 = vadd.f32 %v1871, 1.0
      %v1904 = vadd.f32 %v1872, 1.0
      %v1905 = vadd.f32 %v1873, 1.0
      %v1906 = vadd.f32 %v1874, 1.0
      %v1907 = vadd.f32 %v1875, 1.0
      %v1908 = vadd.f32 %v1876, 1.0
      %v1909 = vadd.f32 %v1877, 1.0
      %v1910 = vadd.f32 %v1878, 1.0
      %v1911 = vadd.f32 %v1879, 1.0
      %v1912 = vadd.f32 %v1880, 1.0
      %v1913 = vadd.f32 %v1881, 1.0
      %v1914 = vadd.f32 %v1882, 1.0
      %v1915 = vrcp.pop %v1883
      %v1916 = vmul.f32 1.0, %v1915
      %v1917 = vrcp.pop %v1884
      %v1918 = vmul.f32 1.0, %v1917
      %v1919 = vrcp.pop %v1885
      %v1920 = vmul.f32 1.0, %v1919
      %v1921 = vrcp.pop %v1886
      %v1922 = vmul.f32 1.0, %v1921
      %v1923 = vrcp.pop %v1887
      %v1924 = vmul.f32 1.0, %v1923
      %v1925 = vrcp.pop %v1888
      %v1926 = vmul.f32 1.0, %v1925
      %v1927 = vrcp.pop %v1889
      %v1928 = vmul.f32 1.0, %v1927
      %v1929 = vrcp.pop %v1890
      %v1930 = vmul.f32 1.0, %v1929
      %v1931 = vrcp.pop %v1891
      %v1932 = vmul.f32 1.0, %v1931
      %v1933 = vrcp.pop %v1892
      %v1934 = vmul.f32 1.0, %v1933
      %v1935 = vrcp.pop %v1893
      %v1936 = vmul.f32 1.0, %v1935
      %v1937 = vrcp.pop %v1894
      %v1938 = vmul.f32 1.0, %v1937
      %v1939 = vrcp.pop %v1895
      %v1940 = vmul.f32 1.0, %v1939
      %v1941 = vrcp.pop %v1896
      %v1942 = vmul.f32 1.0, %v1941
      %v1943 = vrcp.pop %v1897
      %v1944 = vmul.f32 1.0, %v1943
      %v1945 = vrcp.pop %v1898
      %v1946 = vmul.f32 1.0, %v1945
      %v1947 = vrcp.pop %v1899
      %v1948 = vmul.f32 1.0, %v1947
      %v1949 = vrcp.pop %v1900
      %v1950 = vmul.f32 1.0, %v1949
      %v1951 = vrcp.pop %v1901
      %v1952 = vmul.f32 1.0, %v1951
      %v1953 = vrcp.pop %v1902
      %v1954 = vmul.f32 1.0, %v1953
      %v1955 = vrcp.pop %v1903
      %v1956 = vmul.f32 1.0, %v1955
      %v1957 = vrcp.pop %v1904
      %v1958 = vmul.f32 1.0, %v1957
      %v1959 = vrcp.pop %v1905
      %v1960 = vmul.f32 1.0, %v1959
      %v1961 = vrcp.pop %v1906
      %v1962 = vmul.f32 1.0, %v1961
      %v1963 = vrcp.pop %v1907
      %v1964 = vmul.f32 1.0, %v1963
      %v1965 = vrcp.pop %v1908
      %v1966 = vmul.f32 1.0, %v1965
      %v1967 = vrcp.pop %v1909
      %v1968 = vmul.f32 1.0, %v1967
      %v1969 = vrcp.pop %v1910
      %v1970 = vmul.f32 1.0, %v1969
      %v1971 = vrcp.pop %v1911
      %v1972 = vmul.f32 1.0, %v1971
      %v1973 = vrcp.pop %v1912
      %v1974 = vmul.f32 1.0, %v1973
      %v1975 = vrcp.pop %v1913
      %v1976 = vmul.f32 1.0, %v1975
      %v1977 = vrcp.pop %v1914
      %v1978 = vmul.f32 1.0, %v1977
      %v1979 = vmul.f32 %v1916, 1.0614054
      %v1980 = vmul.f32 %v1918, 1.0614054
      %v1981 = vmul.f32 %v1920, 1.0614054
      %v1982 = vmul.f32 %v1922, 1.0614054
      %v1983 = vmul.f32 %v1924, 1.0614054
      %v1984 = vmul.f32 %v1926, 1.0614054
      %v1985 = vmul.f32 %v1928, 1.0614054
      %v1986 = vmul.f32 %v1930, 1.0614054
      %v1987 = vmul.f32 %v1932, 1.0614054
      %v1988 = vmul.f32 %v1934, 1.0614054
      %v1989 = vmul.f32 %v1936, 1.0614054
      %v1990 = vmul.f32 %v1938, 1.0614054
      %v1991 = vmul.f32 %v1940, 1.0614054
      %v1992 = vmul.f32 %v1942, 1.0614054
      %v1993 = vmul.f32 %v1944, 1.0614054
      %v1994 = vmul.f32 %v1946, 1.0614054
      %v1995 = vmul.f32 %v1948, 1.0614054
      %v1996 = vmul.f32 %v1950, 1.0614054
      %v1997 = vmul.f32 %v1952, 1.0614054
      %v1998 = vmul.f32 %v1954, 1.0614054
      %v1999 = vmul.f32 %v1956, 1.0614054
      %v2000 = vmul.f32 %v1958, 1.0614054
      %v2001 = vmul.f32 %v1960, 1.0614054
      %v2002 = vmul.f32 %v1962, 1.0614054
      %v2003 = vmul.f32 %v1964, 1.0614054
      %v2004 = vmul.f32 %v1966, 1.0614054
      %v2005 = vmul.f32 %v1968, 1.0614054
      %v2006 = vmul.f32 %v1970, 1.0614054
      %v2007 = vmul.f32 %v1972, 1.0614054
      %v2008 = vmul.f32 %v1974, 1.0614054
      %v2009 = vmul.f32 %v1976, 1.0614054
      %v2010 = vmul.f32 %v1978, 1.0614054
      %v2011 = vadd.f32 %v1979, -1.4531521
      %v2012 = vadd.f32 %v1980, -1.4531521
      %v2013 = vadd.f32 %v1981, -1.4531521
      %v2014 = vadd.f32 %v1982, -1.4531521
      %v2015 = vadd.f32 %v1983, -1.4531521
      %v2016 = vadd.f32 %v1984, -1.4531521
      %v2017 = vadd.f32 %v1985, -1.4531521
      %v2018 = vadd.f32 %v1986, -1.4531521
      %v2019 = vadd.f32 %v1987, -1.4531521
      %v2020 = vadd.f32 %v1988, -1.4531521
      %v2021 = vadd.f32 %v1989, -1.4531521
      %v2022 = vadd.f32 %v1990, -1.4531521
      %v2023 = vadd.f32 %v1991, -1.4531521
      %v2024 = vadd.f32 %v1992, -1.4531521
      %v2025 = vadd.f32 %v1993, -1.4531521
      %v2026 = vadd.f32 %v1994, -1.4531521
      %v2027 = vadd.f32 %v1995, -1.4531521
      %v2028 = vadd.f32 %v1996, -1.4531521
      %v2029 = vadd.f32 %v1997, -1.4531521
      %v2030 = vadd.f32 %v1998, -1.4531521
      %v2031 = vadd.f32 %v1999, -1.4531521
      %v2032 = vadd.f32 %v2000, -1.4531521
      %v2033 = vadd.f32 %v2001, -1.4531521
      %v2034 = vadd.f32 %v2002, -1.4531521
      %v2035 = vadd.f32 %v2003, -1.4531521
      %v2036 = vadd.f32 %v2004, -1.4531521
      %v2037 = vadd.f32 %v2005, -1.4531521
      %v2038 = vadd.f32 %v2006, -1.4531521
      %v2039 = vadd.f32 %v2007, -1.4531521
      %v2040 = vadd.f32 %v2008, -1.4531521
      %v2041 = vadd.f32 %v2009, -1.4531521
      %v2042 = vadd.f32 %v2010, -1.4531521
      %v2043 = vmul.f32 %v1916, %v2011
      %v2044 = vmul.f32 %v1918, %v2012
      %v2045 = vmul.f32 %v1920, %v2013
      %v2046 = vmul.f32 %v1922, %v2014
      %v2047 = vmul.f32 %v1924, %v2015
      %v2048 = vmul.f32 %v1926, %v2016
      %v2049 = vmul.f32 %v1928, %v2017
      %v2050 = vmul.f32 %v1930, %v2018
      %v2051 = vmul.f32 %v1932, %v2019
      %v2052 = vmul.f32 %v1934, %v2020
      %v2053 = vmul.f32 %v1936, %v2021
      %v2054 = vmul.f32 %v1938, %v2022
      %v2055 = vmul.f32 %v1940, %v2023
      %v2056 = vmul.f32 %v1942, %v2024
      %v2057 = vmul.f32 %v1944, %v2025
      %v2058 = vmul.f32 %v1946, %v2026
      %v2059 = vmul.f32 %v1948, %v2027
      %v2060 = vmul.f32 %v1950, %v2028
      %v2061 = vmul.f32 %v1952, %v2029
      %v2062 = vmul.f32 %v1954, %v2030
      %v2063 = vmul.f32 %v1956, %v2031
      %v2064 = vmul.f32 %v1958, %v2032
      %v2065 = vmul.f32 %v1960, %v2033
      %v2066 = vmul.f32 %v1962, %v2034
      %v2067 = vmul.f32 %v1964, %v2035
      %v2068 = vmul.f32 %v1966, %v2036
      %v2069 = vmul.f32 %v1968, %v2037
      %v2070 = vmul.f32 %v1970, %v2038
      %v2071 = vmul.f32 %v1972, %v2039
      %v2072 = vmul.f32 %v1974, %v2040
      %v2073 = vmul.f32 %v1976, %v2041
      %v2074 = vmul.f32 %v1978, %v2042
      %v2075 = vadd.f32 %v2043, 1.4214138
      %v2076 = vadd.f32 %v2044, 1.4214138
      %v2077 = vadd.f32 %v2045, 1.4214138
      %v2078 = vadd.f32 %v2046, 1.4214138
      %v2079 = vadd.f32 %v2047, 1.4214138
      %v2080 = vadd.f32 %v2048, 1.4214138
      %v2081 = vadd.f32 %v2049, 1.4214138
      %v2082 = vadd.f32 %v2050, 1.4214138
      %v2083 = vadd.f32 %v2051, 1.4214138
      %v2084 = vadd.f32 %v2052, 1.4214138
      %v2085 = vadd.f32 %v2053, 1.4214138
      %v2086 = vadd.f32 %v2054, 1.4214138
      %v2087 = vadd.f32 %v2055, 1.4214138
      %v2088 = vadd.f32 %v2056, 1.4214138
      %v2089 = vadd.f32 %v2057, 1.4214138
      %v2090 = vadd.f32 %v2058, 1.4214138
      %v2091 = vadd.f32 %v2059, 1.4214138
      %v2092 = vadd.f32 %v2060, 1.4214138
      %v2093 = vadd.f32 %v2061, 1.4214138
      %v2094 = vadd.f32 %v2062, 1.4214138
      %v2095 = vadd.f32 %v2063, 1.4214138
      %v2096 = vadd.f32 %v2064, 1.4214138
      %v2097 = vadd.f32 %v2065, 1.4214138
      %v2098 = vadd.f32 %v2066, 1.4214138
      %v2099 = vadd.f32 %v2067, 1.4214138
      %v2100 = vadd.f32 %v2068, 1.4214138
      %v2101 = vadd.f32 %v2069, 1.4214138
      %v2102 = vadd.f32 %v2070, 1.4214138
      %v2103 = vadd.f32 %v2071, 1.4214138
      %v2104 = vadd.f32 %v2072, 1.4214138
      %v2105 = vadd.f32 %v2073, 1.4214138
      %v2106 = vadd.f32 %v2074, 1.4214138
      %v2107 = vmul.f32 %v1916, %v2075
      %v2108 = vmul.f32 %v1918, %v2076
      %v2109 = vmul.f32 %v1920, %v2077
      %v2110 = vmul.f32 %v1922, %v2078
      %v2111 = vmul.f32 %v1924, %v2079
      %v2112 = vmul.f32 %v1926, %v2080
      %v2113 = vmul.f32 %v1928, %v2081
      %v2114 = vmul.f32 %v1930, %v2082
      %v2115 = vmul.f32 %v1932, %v2083
      %v2116 = vmul.f32 %v1934, %v2084
      %v2117 = vmul.f32 %v1936, %v2085
      %v2118 = vmul.f32 %v1938, %v2086
      %v2119 = vmul.f32 %v1940, %v2087
      %v2120 = vmul.f32 %v1942, %v2088
      %v2121 = vmul.f32 %v1944, %v2089
      %v2122 = vmul.f32 %v1946, %v2090
      %v2123 = vmul.f32 %v1948, %v2091
      %v2124 = vmul.f32 %v1950, %v2092
      %v2125 = vmul.f32 %v1952, %v2093
      %v2126 = vmul.f32 %v1954, %v2094
      %v2127 = vmul.f32 %v1956, %v2095
      %v2128 = vmul.f32 %v1958, %v2096
      %v2129 = vmul.f32 %v1960, %v2097
      %v2130 = vmul.f32 %v1962, %v2098
      %v2131 = vmul.f32 %v1964, %v2099
      %v2132 = vmul.f32 %v1966, %v2100
      %v2133 = vmul.f32 %v1968, %v2101
      %v2134 = vmul.f32 %v1970, %v2102
      %v2135 = vmul.f32 %v1972, %v2103
      %v2136 = vmul.f32 %v1974, %v2104
      %v2137 = vmul.f32 %v1976, %v2105
      %v2138 = vmul.f32 %v1978, %v2106
      %v2139 = vadd.f32 %v2107, -0.28449672
      %v2140 = vadd.f32 %v2108, -0.28449672
      %v2141 = vadd.f32 %v2109, -0.28449672
      %v2142 = vadd.f32 %v2110, -0.28449672
      %v2143 = vadd.f32 %v2111, -0.28449672
      %v2144 = vadd.f32 %v2112, -0.28449672
      %v2145 = vadd.f32 %v2113, -0.28449672
      %v2146 = vadd.f32 %v2114, -0.28449672
      %v2147 = vadd.f32 %v2115, -0.28449672
      %v2148 = vadd.f32 %v2116, -0.28449672
      %v2149 = vadd.f32 %v2117, -0.28449672
      %v2150 = vadd.f32 %v2118, -0.28449672
      %v2151 = vadd.f32 %v2119, -0.28449672
      %v2152 = vadd.f32 %v2120, -0.28449672
      %v2153 = vadd.f32 %v2121, -0.28449672
      %v2154 = vadd.f32 %v2122, -0.28449672
      %v2155 = vadd.f32 %v2123, -0.28449672
      %v2156 = vadd.f32 %v2124, -0.28449672
      %v2157 = vadd.f32 %v2125, -0.28449672
      %v2158 = vadd.f32 %v2126, -0.28449672
      %v2159 = vadd.f32 %v2127, -0.28449672
      %v2160 = vadd.f32 %v2128, -0.28449672
      %v2161 = vadd.f32 %v2129, -0.28449672
      %v2162 = vadd.f32 %v2130, -0.28449672
      %v2163 = vadd.f32 %v2131, -0.28449672
      %v2164 = vadd.f32 %v2132, -0.28449672
      %v2165 = vadd.f32 %v2133, -0.28449672
      %v2166 = vadd.f32 %v2134, -0.28449672
      %v2167 = vadd.f32 %v2135, -0.28449672
      %v2168 = vadd.f32 %v2136, -0.28449672
      %v2169 = vadd.f32 %v2137, -0.28449672
      %v2170 = vadd.f32 %v2138, -0.28449672
      %v2171 = vmul.f32 %v1916, %v2139
      %v2172 = vmul.f32 %v1918, %v2140
      %v2173 = vmul.f32 %v1920, %v2141
      %v2174 = vmul.f32 %v1922, %v2142
      %v2175 = vmul.f32 %v1924, %v2143
      %v2176 = vmul.f32 %v1926, %v2144
      %v2177 = vmul.f32 %v1928, %v2145
      %v2178 = vmul.f32 %v1930, %v2146
      %v2179 = vmul.f32 %v1932, %v2147
      %v2180 = vmul.f32 %v1934, %v2148
      %v2181 = vmul.f32 %v1936, %v2149
      %v2182 = vmul.f32 %v1938, %v2150
      %v2183 = vmul.f32 %v1940, %v2151
      %v2184 = vmul.f32 %v1942, %v2152
      %v2185 = vmul.f32 %v1944, %v2153
      %v2186 = vmul.f32 %v1946, %v2154
      %v2187 = vmul.f32 %v1948, %v2155
      %v2188 = vmul.f32 %v1950, %v2156
      %v2189 = vmul.f32 %v1952, %v2157
      %v2190 = vmul.f32 %v1954, %v2158
      %v2191 = vmul.f32 %v1956, %v2159
      %v2192 = vmul.f32 %v1958, %v2160
      %v2193 = vmul.f32 %v1960, %v2161
      %v2194 = vmul.f32 %v1962, %v2162
      %v2195 = vmul.f32 %v1964, %v2163
      %v2196 = vmul.f32 %v1966, %v2164
      %v2197 = vmul.f32 %v1968, %v2165
      %v2198 = vmul.f32 %v1970, %v2166
      %v2199 = vmul.f32 %v1972, %v2167
      %v2200 = vmul.f32 %v1974, %v2168
      %v2201 = vmul.f32 %v1976, %v2169
      %v2202 = vmul.f32 %v1978, %v2170
      %v2203 = vadd.f32 %v2171, 0.2548296
      %v2204 = vadd.f32 %v2172, 0.2548296
      %v2205 = vadd.f32 %v2173, 0.2548296
      %v2206 = vadd.f32 %v2174, 0.2548296
      %v2207 = vadd.f32 %v2175, 0.2548296
      %v2208 = vadd.f32 %v2176, 0.2548296
      %v2209 = vadd.f32 %v2177, 0.2548296
      %v2210 = vadd.f32 %v2178, 0.2548296
      %v2211 = vadd.f32 %v2179, 0.2548296
      %v2212 = vadd.f32 %v2180, 0.2548296
      %v2213 = vadd.f32 %v2181, 0.2548296
      %v2214 = vadd.f32 %v2182, 0.2548296
      %v2215 = vadd.f32 %v2183, 0.2548296
      %v2216 = vadd.f32 %v2184, 0.2548296
      %v2217 = vadd.f32 %v2185, 0.2548296
      %v2218 = vadd.f32 %v2186, 0.2548296
      %v2219 = vadd.f32 %v2187, 0.2548296
      %v2220 = vadd.f32 %v2188, 0.2548296
      %v2221 = vadd.f32 %v2189, 0.2548296
      %v2222 = vadd.f32 %v2190, 0.2548296
      %v2223 = vadd.f32 %v2191, 0.2548296
      %v2224 = vadd.f32 %v2192, 0.2548296
      %v2225 = vadd.f32 %v2193, 0.2548296
      %v2226 = vadd.f32 %v2194, 0.2548296
      %v2227 = vadd.f32 %v2195, 0.2548296
      %v2228 = vadd.f32 %v2196, 0.2548296
      %v2229 = vadd.f32 %v2197, 0.2548296
      %v2230 = vadd.f32 %v2198, 0.2548296
      %v2231 = vadd.f32 %v2199, 0.2548296
      %v2232 = vadd.f32 %v2200, 0.2548296
      %v2233 = vadd.f32 %v2201, 0.2548296
      %v2234 = vadd.f32 %v2202, 0.2548296
      %v2235 = vmul.f32 %v1916, %v2203
      %v2236 = vmul.f32 %v1918, %v2204
      %v2237 = vmul.f32 %v1920, %v2205
      %v2238 = vmul.f32 %v1922, %v2206
      %v2239 = vmul.f32 %v1924, %v2207
      %v2240 = vmul.f32 %v1926, %v2208
      %v2241 = vmul.f32 %v1928, %v2209
      %v2242 = vmul.f32 %v1930, %v2210
      %v2243 = vmul.f32 %v1932, %v2211
      %v2244 = vmul.f32 %v1934, %v2212
      %v2245 = vmul.f32 %v1936, %v2213
      %v2246 = vmul.f32 %v1938, %v2214
      %v2247 = vmul.f32 %v1940, %v2215
      %v2248 = vmul.f32 %v1942, %v2216
      %v2249 = vmul.f32 %v1944, %v2217
      %v2250 = vmul.f32 %v1946, %v2218
      %v2251 = vmul.f32 %v1948, %v2219
      %v2252 = vmul.f32 %v1950, %v2220
      %v2253 = vmul.f32 %v1952, %v2221
      %v2254 = vmul.f32 %v1954, %v2222
      %v2255 = vmul.f32 %v1956, %v2223
      %v2256 = vmul.f32 %v1958, %v2224
      %v2257 = vmul.f32 %v1960, %v2225
      %v2258 = vmul.f32 %v1962, %v2226
      %v2259 = vmul.f32 %v1964, %v2227
      %v2260 = vmul.f32 %v1966, %v2228
      %v2261 = vmul.f32 %v1968, %v2229
      %v2262 = vmul.f32 %v1970, %v2230
      %v2263 = vmul.f32 %v1972, %v2231
      %v2264 = vmul.f32 %v1974, %v2232
      %v2265 = vmul.f32 %v1976, %v2233
      %v2266 = vmul.f32 %v1978, %v2234
      %v2267 = vmul.f32 %v1819, %v1819
      %v2268 = vmul.f32 %v1820, %v1820
      %v2269 = vmul.f32 %v1821, %v1821
      %v2270 = vmul.f32 %v1822, %v1822
      %v2271 = vmul.f32 %v1823, %v1823
      %v2272 = vmul.f32 %v1824, %v1824
      %v2273 = vmul.f32 %v1825, %v1825
      %v2274 = vmul.f32 %v1826, %v1826
      %v2275 = vmul.f32 %v1827, %v1827
      %v2276 = vmul.f32 %v1828, %v1828
      %v2277 = vmul.f32 %v1829, %v1829
      %v2278 = vmul.f32 %v1830, %v1830
      %v2279 = vmul.f32 %v1831, %v1831
      %v2280 = vmul.f32 %v1832, %v1832
      %v2281 = vmul.f32 %v1833, %v1833
      %v2282 = vmul.f32 %v1834, %v1834
      %v2283 = vmul.f32 %v1835, %v1835
      %v2284 = vmul.f32 %v1836, %v1836
      %v2285 = vmul.f32 %v1837, %v1837
      %v2286 = vmul.f32 %v1838, %v1838
      %v2287 = vmul.f32 %v1839, %v1839
      %v2288 = vmul.f32 %v1840, %v1840
      %v2289 = vmul.f32 %v1841, %v1841
      %v2290 = vmul.f32 %v1842, %v1842
      %v2291 = vmul.f32 %v1843, %v1843
      %v2292 = vmul.f32 %v1844, %v1844
      %v2293 = vmul.f32 %v1845, %v1845
      %v2294 = vmul.f32 %v1846, %v1846
      %v2295 = vmul.f32 %v1847, %v1847
      %v2296 = vmul.f32 %v1848, %v1848
      %v2297 = vmul.f32 %v1849, %v1849
      %v2298 = vmul.f32 %v1850, %v1850
      %v2299 = vsub.f32 0.0, %v2267
      %v2300 = vsub.f32 0.0, %v2268
      %v2301 = vsub.f32 0.0, %v2269
      %v2302 = vsub.f32 0.0, %v2270
      %v2303 = vsub.f32 0.0, %v2271
      %v2304 = vsub.f32 0.0, %v2272
      %v2305 = vsub.f32 0.0, %v2273
      %v2306 = vsub.f32 0.0, %v2274
      %v2307 = vsub.f32 0.0, %v2275
      %v2308 = vsub.f32 0.0, %v2276
      %v2309 = vsub.f32 0.0, %v2277
      %v2310 = vsub.f32 0.0, %v2278
      %v2311 = vsub.f32 0.0, %v2279
      %v2312 = vsub.f32 0.0, %v2280
      %v2313 = vsub.f32 0.0, %v2281
      %v2314 = vsub.f32 0.0, %v2282
      %v2315 = vsub.f32 0.0, %v2283
      %v2316 = vsub.f32 0.0, %v2284
      %v2317 = vsub.f32 0.0, %v2285
      %v2318 = vsub.f32 0.0, %v2286
      %v2319 = vsub.f32 0.0, %v2287
      %v2320 = vsub.f32 0.0, %v2288
      %v2321 = vsub.f32 0.0, %v2289
      %v2322 = vsub.f32 0.0, %v2290
      %v2323 = vsub.f32 0.0, %v2291
      %v2324 = vsub.f32 0.0, %v2292
      %v2325 = vsub.f32 0.0, %v2293
      %v2326 = vsub.f32 0.0, %v2294
      %v2327 = vsub.f32 0.0, %v2295
      %v2328 = vsub.f32 0.0, %v2296
      %v2329 = vsub.f32 0.0, %v2297
      %v2330 = vsub.f32 0.0, %v2298
      %v2331 = vmul.f32 %v2299, 1.442695
      %v2332 = vpow.pop %v2331
      %v2333 = vmul.f32 %v2300, 1.442695
      %v2334 = vpow.pop %v2333
      %v2335 = vmul.f32 %v2301, 1.442695
      %v2336 = vpow.pop %v2335
      %v2337 = vmul.f32 %v2302, 1.442695
      %v2338 = vpow.pop %v2337
      %v2339 = vmul.f32 %v2303, 1.442695
      %v2340 = vpow.pop %v2339
      %v2341 = vmul.f32 %v2304, 1.442695
      %v2342 = vpow.pop %v2341
      %v2343 = vmul.f32 %v2305, 1.442695
      %v2344 = vpow.pop %v2343
      %v2345 = vmul.f32 %v2306, 1.442695
      %v2346 = vpow.pop %v2345
      %v2347 = vmul.f32 %v2307, 1.442695
      %v2348 = vpow.pop %v2347
      %v2349 = vmul.f32 %v2308, 1.442695
      %v2350 = vpow.pop %v2349
      %v2351 = vmul.f32 %v2309, 1.442695
      %v2352 = vpow.pop %v2351
      %v2353 = vmul.f32 %v2310, 1.442695
      %v2354 = vpow.pop %v2353
      %v2355 = vmul.f32 %v2311, 1.442695
      %v2356 = vpow.pop %v2355
      %v2357 = vmul.f32 %v2312, 1.442695
      %v2358 = vpow.pop %v2357
      %v2359 = vmul.f32 %v2313, 1.442695
      %v2360 = vpow.pop %v2359
      %v2361 = vmul.f32 %v2314, 1.442695
      %v2362 = vpow.pop %v2361
      %v2363 = vmul.f32 %v2315, 1.442695
      %v2364 = vpow.pop %v2363
      %v2365 = vmul.f32 %v2316, 1.442695
      %v2366 = vpow.pop %v2365
      %v2367 = vmul.f32 %v2317, 1.442695
      %v2368 = vpow.pop %v2367
      %v2369 = vmul.f32 %v2318, 1.442695
      %v2370 = vpow.pop %v2369
      %v2371 = vmul.f32 %v2319, 1.442695
      %v2372 = vpow.pop %v2371
      %v2373 = vmul.f32 %v2320, 1.442695
      %v2374 = vpow.pop %v2373
      %v2375 = vmul.f32 %v2321, 1.442695
      %v2376 = vpow.pop %v2375
      %v2377 = vmul.f32 %v2322, 1.442695
      %v2378 = vpow.pop %v2377
      %v2379 = vmul.f32 %v2323, 1.442695
      %v2380 = vpow.pop %v2379
      %v2381 = vmul.f32 %v2324, 1.442695
      %v2382 = vpow.pop %v2381
      %v2383 = vmul.f32 %v2325, 1.442695
      %v2384 = vpow.pop %v2383
      %v2385 = vmul.f32 %v2326, 1.442695
      %v2386 = vpow.pop %v2385
      %v2387 = vmul.f32 %v2327, 1.442695
      %v2388 = vpow.pop %v2387
      %v2389 = vmul.f32 %v2328, 1.442695
      %v2390 = vpow.pop %v2389
      %v2391 = vmul.f32 %v2329, 1.442695
      %v2392 = vpow.pop %v2391
      %v2393 = vmul.f32 %v2330, 1.442695
      %v2394 = vpow.pop %v2393
      %v2395 = vmul.f32 %v2235, %v2332
      %v2396 = vmul.f32 %v2236, %v2334
      %v2397 = vmul.f32 %v2237, %v2336
      %v2398 = vmul.f32 %v2238, %v2338
      %v2399 = vmul.f32 %v2239, %v2340
      %v2400 = vmul.f32 %v2240, %v2342
      %v2401 = vmul.f32 %v2241, %v2344
      %v2402 = vmul.f32 %v2242, %v2346
      %v2403 = vmul.f32 %v2243, %v2348
      %v2404 = vmul.f32 %v2244, %v2350
      %v2405 = vmul.f32 %v2245, %v2352
      %v2406 = vmul.f32 %v2246, %v2354
      %v2407 = vmul.f32 %v2247, %v2356
      %v2408 = vmul.f32 %v2248, %v2358
      %v2409 = vmul.f32 %v2249, %v2360
      %v2410 = vmul.f32 %v2250, %v2362
      %v2411 = vmul.f32 %v2251, %v2364
      %v2412 = vmul.f32 %v2252, %v2366
      %v2413 = vmul.f32 %v2253, %v2368
      %v2414 = vmul.f32 %v2254, %v2370
      %v2415 = vmul.f32 %v2255, %v2372
      %v2416 = vmul.f32 %v2256, %v2374
      %v2417 = vmul.f32 %v2257, %v2376
      %v2418 = vmul.f32 %v2258, %v2378
      %v2419 = vmul.f32 %v2259, %v2380
      %v2420 = vmul.f32 %v2260, %v2382
      %v2421 = vmul.f32 %v2261, %v2384
      %v2422 = vmul.f32 %v2262, %v2386
      %v2423 = vmul.f32 %v2263, %v2388
      %v2424 = vmul.f32 %v2264, %v2390
      %v2425 = vmul.f32 %v2265, %v2392
      %v2426 = vmul.f32 %v2266, %v2394
      %v2427 = vsub.f32 1.0, %v2395
      %v2428 = vsub.f32 1.0, %v2396
      %v2429 = vsub.f32 1.0, %v2397
      %v2430 = vsub.f32 1.0, %v2398
      %v2431 = vsub.f32 1.0, %v2399
      %v2432 = vsub.f32 1.0, %v2400
      %v2433 = vsub.f32 1.0, %v2401
      %v2434 = vsub.f32 1.0, %v2402
      %v2435 = vsub.f32 1.0, %v2403
      %v2436 = vsub.f32 1.0, %v2404
      %v2437 = vsub.f32 1.0, %v2405
      %v2438 = vsub.f32 1.0, %v2406
      %v2439 = vsub.f32 1.0, %v2407
      %v2440 = vsub.f32 1.0, %v2408
      %v2441 = vsub.f32 1.0, %v2409
      %v2442 = vsub.f32 1.0, %v2410
      %v2443 = vsub.f32 1.0, %v2411
      %v2444 = vsub.f32 1.0, %v2412
      %v2445 = vsub.f32 1.0, %v2413
      %v2446 = vsub.f32 1.0, %v2414
      %v2447 = vsub.f32 1.0, %v2415
      %v2448 = vsub.f32 1.0, %v2416
      %v2449 = vsub.f32 1.0, %v2417
      %v2450 = vsub.f32 1.0, %v2418
      %v2451 = vsub.f32 1.0, %v2419
      %v2452 = vsub.f32 1.0, %v2420
      %v2453 = vsub.f32 1.0, %v2421
      %v2454 = vsub.f32 1.0, %v2422
      %v2455 = vsub.f32 1.0, %v2423
      %v2456 = vsub.f32 1.0, %v2424
      %v2457 = vsub.f32 1.0, %v2425
      %v2458 = vsub.f32 1.0, %v2426
      %vm2459 = vcmp.lt.f32.partialorder %v1787, 0.0
      %vm2460 = vcmp.lt.f32.partialorder %v1788, 0.0
      %vm2461 = vcmp.lt.f32.partialorder %v1789, 0.0
      %vm2462 = vcmp.lt.f32.partialorder %v1790, 0.0
      %vm2463 = vcmp.lt.f32.partialorder %v1791, 0.0
      %vm2464 = vcmp.lt.f32.partialorder %v1792, 0.0
      %vm2465 = vcmp.lt.f32.partialorder %v1793, 0.0
      %vm2466 = vcmp.lt.f32.partialorder %v1794, 0.0
      %vm2467 = vcmp.lt.f32.partialorder %v1795, 0.0
      %vm2468 = vcmp.lt.f32.partialorder %v1796, 0.0
      %vm2469 = vcmp.lt.f32.partialorder %v1797, 0.0
      %vm2470 = vcmp.lt.f32.partialorder %v1798, 0.0
      %vm2471 = vcmp.lt.f32.partialorder %v1799, 0.0
      %vm2472 = vcmp.lt.f32.partialorder %v1800, 0.0
      %vm2473 = vcmp.lt.f32.partialorder %v1801, 0.0
      %vm2474 = vcmp.lt.f32.partialorder %v1802, 0.0
      %vm2475 = vcmp.lt.f32.partialorder %v1803, 0.0
      %vm2476 = vcmp.lt.f32.partialorder %v1804, 0.0
      %vm2477 = vcmp.lt.f32.partialorder %v1805, 0.0
      %vm2478 = vcmp.lt.f32.partialorder %v1806, 0.0
      %vm2479 = vcmp.lt.f32.partialorder %v1807, 0.0
      %vm2480 = vcmp.lt.f32.partialorder %v1808, 0.0
      %vm2481 = vcmp.lt.f32.partialorder %v1809, 0.0
      %vm2482 = vcmp.lt.f32.partialorder %v1810, 0.0
      %vm2483 = vcmp.lt.f32.partialorder %v1811, 0.0
      %vm2484 = vcmp.lt.f32.partialorder %v1812, 0.0
      %vm2485 = vcmp.lt.f32.partialorder %v1813, 0.0
      %vm2486 = vcmp.lt.f32.partialorder %v1814, 0.0
      %vm2487 = vcmp.lt.f32.partialorder %v1815, 0.0
      %vm2488 = vcmp.lt.f32.partialorder %v1816, 0.0
      %vm2489 = vcmp.lt.f32.partialorder %v1817, 0.0
      %vm2490 = vcmp.lt.f32.partialorder %v1818, 0.0
      %v2491 = vsub.f32 0.0, %v2427
      %v2492 = vsub.f32 0.0, %v2428
      %v2493 = vsub.f32 0.0, %v2429
      %v2494 = vsub.f32 0.0, %v2430
      %v2495 = vsub.f32 0.0, %v2431
      %v2496 = vsub.f32 0.0, %v2432
      %v2497 = vsub.f32 0.0, %v2433
      %v2498 = vsub.f32 0.0, %v2434
      %v2499 = vsub.f32 0.0, %v2435
      %v2500 = vsub.f32 0.0, %v2436
      %v2501 = vsub.f32 0.0, %v2437
      %v2502 = vsub.f32 0.0, %v2438
      %v2503 = vsub.f32 0.0, %v2439
      %v2504 = vsub.f32 0.0, %v2440
      %v2505 = vsub.f32 0.0, %v2441
      %v2506 = vsub.f32 0.0, %v2442
      %v2507 = vsub.f32 0.0, %v2443
      %v2508 = vsub.f32 0.0, %v2444
      %v2509 = vsub.f32 0.0, %v2445
      %v2510 = vsub.f32 0.0, %v2446
      %v2511 = vsub.f32 0.0, %v2447
      %v2512 = vsub.f32 0.0, %v2448
      %v2513 = vsub.f32 0.0, %v2449
      %v2514 = vsub.f32 0.0, %v2450
      %v2515 = vsub.f32 0.0, %v2451
      %v2516 = vsub.f32 0.0, %v2452
      %v2517 = vsub.f32 0.0, %v2453
      %v2518 = vsub.f32 0.0, %v2454
      %v2519 = vsub.f32 0.0, %v2455
      %v2520 = vsub.f32 0.0, %v2456
      %v2521 = vsub.f32 0.0, %v2457
      %v2522 = vsub.f32 0.0, %v2458
      %v2523 = vsel %vm2459, %v2491, %v2427
      %v2524 = vsel %vm2460, %v2492, %v2428
      %v2525 = vsel %vm2461, %v2493, %v2429
      %v2526 = vsel %vm2462, %v2494, %v2430
      %v2527 = vsel %vm2463, %v2495, %v2431
      %v2528 = vsel %vm2464, %v2496, %v2432
      %v2529 = vsel %vm2465, %v2497, %v2433
      %v2530 = vsel %vm2466, %v2498, %v2434
      %v2531 = vsel %vm2467, %v2499, %v2435
      %v2532 = vsel %vm2468, %v2500, %v2436
      %v2533 = vsel %vm2469, %v2501, %v2437
      %v2534 = vsel %vm2470, %v2502, %v2438
      %v2535 = vsel %vm2471, %v2503, %v2439
      %v2536 = vsel %vm2472, %v2504, %v2440
      %v2537 = vsel %vm2473, %v2505, %v2441
      %v2538 = vsel %vm2474, %v2506, %v2442
      %v2539 = vsel %vm2475, %v2507, %v2443
      %v2540 = vsel %vm2476, %v2508, %v2444
      %v2541 = vsel %vm2477, %v2509, %v2445
      %v2542 = vsel %vm2478, %v2510, %v2446
      %v2543 = vsel %vm2479, %v2511, %v2447
      %v2544 = vsel %vm2480, %v2512, %v2448
      %v2545 = vsel %vm2481, %v2513, %v2449
      %v2546 = vsel %vm2482, %v2514, %v2450
      %v2547 = vsel %vm2483, %v2515, %v2451
      %v2548 = vsel %vm2484, %v2516, %v2452
      %v2549 = vsel %vm2485, %v2517, %v2453
      %v2550 = vsel %vm2486, %v2518, %v2454
      %v2551 = vsel %vm2487, %v2519, %v2455
      %v2552 = vsel %vm2488, %v2520, %v2456
      %v2553 = vsel %vm2489, %v2521, %v2457
      %v2554 = vsel %vm2490, %v2522, %v2458
      %v2555 = vadd.f32 %v2523, 1.0
      %v2556 = vadd.f32 %v2524, 1.0
      %v2557 = vadd.f32 %v2525, 1.0
      %v2558 = vadd.f32 %v2526, 1.0
      %v2559 = vadd.f32 %v2527, 1.0
      %v2560 = vadd.f32 %v2528, 1.0
      %v2561 = vadd.f32 %v2529, 1.0
      %v2562 = vadd.f32 %v2530, 1.0
      %v2563 = vadd.f32 %v2531, 1.0
      %v2564 = vadd.f32 %v2532, 1.0
      %v2565 = vadd.f32 %v2533, 1.0
      %v2566 = vadd.f32 %v2534, 1.0
      %v2567 = vadd.f32 %v2535, 1.0
      %v2568 = vadd.f32 %v2536, 1.0
      %v2569 = vadd.f32 %v2537, 1.0
      %v2570 = vadd.f32 %v2538, 1.0
      %v2571 = vadd.f32 %v2539, 1.0
      %v2572 = vadd.f32 %v2540, 1.0
      %v2573 = vadd.f32 %v2541, 1.0
      %v2574 = vadd.f32 %v2542, 1.0
      %v2575 = vadd.f32 %v2543, 1.0
      %v2576 = vadd.f32 %v2544, 1.0
      %v2577 = vadd.f32 %v2545, 1.0
      %v2578 = vadd.f32 %v2546, 1.0
      %v2579 = vadd.f32 %v2547, 1.0
      %v2580 = vadd.f32 %v2548, 1.0
      %v2581 = vadd.f32 %v2549, 1.0
      %v2582 = vadd.f32 %v2550, 1.0
      %v2583 = vadd.f32 %v2551, 1.0
      %v2584 = vadd.f32 %v2552, 1.0
      %v2585 = vadd.f32 %v2553, 1.0
      %v2586 = vadd.f32 %v2554, 1.0
      %v2587 = vmul.f32 %v1755, %v2555
      %v2588 = vmul.f32 %v1756, %v2556
      %v2589 = vmul.f32 %v1757, %v2557
      %v2590 = vmul.f32 %v1758, %v2558
      %v2591 = vmul.f32 %v1759, %v2559
      %v2592 = vmul.f32 %v1760, %v2560
      %v2593 = vmul.f32 %v1761, %v2561
      %v2594 = vmul.f32 %v1762, %v2562
      %v2595 = vmul.f32 %v1763, %v2563
      %v2596 = vmul.f32 %v1764, %v2564
      %v2597 = vmul.f32 %v1765, %v2565
      %v2598 = vmul.f32 %v1766, %v2566
      %v2599 = vmul.f32 %v1767, %v2567
      %v2600 = vmul.f32 %v1768, %v2568
      %v2601 = vmul.f32 %v1769, %v2569
      %v2602 = vmul.f32 %v1770, %v2570
      %v2603 = vmul.f32 %v1771, %v2571
      %v2604 = vmul.f32 %v1772, %v2572
      %v2605 = vmul.f32 %v1773, %v2573
      %v2606 = vmul.f32 %v1774, %v2574
      %v2607 = vmul.f32 %v1775, %v2575
      %v2608 = vmul.f32 %v1776, %v2576
      %v2609 = vmul.f32 %v1777, %v2577
      %v2610 = vmul.f32 %v1778, %v2578
      %v2611 = vmul.f32 %v1779, %v2579
      %v2612 = vmul.f32 %v1780, %v2580
      %v2613 = vmul.f32 %v1781, %v2581
      %v2614 = vmul.f32 %v1782, %v2582
      %v2615 = vmul.f32 %v1783, %v2583
      %v2616 = vmul.f32 %v1784, %v2584
      %v2617 = vmul.f32 %v1785, %v2585
      %v2618 = vmul.f32 %v1786, %v2586
      %v2619 = vpack.c.bf16 %v2588, %v2587
      %v2620 = vpack.c.bf16 %v2590, %v2589
      %v2621 = vpack.c.bf16 %v2592, %v2591
      %v2622 = vpack.c.bf16 %v2594, %v2593
      %v2623 = vpack.c.bf16 %v2596, %v2595
      %v2624 = vpack.c.bf16 %v2598, %v2597
      %v2625 = vpack.c.bf16 %v2600, %v2599
      %v2626 = vpack.c.bf16 %v2602, %v2601
      %v2627 = vpack.c.bf16 %v2604, %v2603
      %v2628 = vpack.c.bf16 %v2606, %v2605
      %v2629 = vpack.c.bf16 %v2608, %v2607
      %v2630 = vpack.c.bf16 %v2610, %v2609
      %v2631 = vpack.c.bf16 %v2612, %v2611
      %v2632 = vpack.c.bf16 %v2614, %v2613
      %v2633 = vpack.c.bf16 %v2616, %v2615
      %v2634 = vpack.c.bf16 %v2618, %v2617
      %v2635 = vld [vmem:[%s5] sm:$0xf]
      %v2636 = vld [vmem:[%s5 + $0x4] sm:$0xf]
      %v2637 = vld [vmem:[%s5 + $0x8] sm:$0xf]
      %v2638 = vld [vmem:[%s5 + $0xc] sm:$0xf]
      %v2639 = vld [vmem:[%s5 + $0x10] sm:$0xf]
      %v2640 = vld [vmem:[%s5 + $0x14] sm:$0xf]
      %v2641 = vld [vmem:[%s5 + $0x18] sm:$0xf]
      %v2642 = vld [vmem:[%s5 + $0x1c] sm:$0xf]
      %v2643 = vld [vmem:[%s5 + $0x20] sm:$0xf]
      %v2644 = vld [vmem:[%s5 + $0x24] sm:$0xf]
      %v2645 = vld [vmem:[%s5 + $0x28] sm:$0xf]
      %v2646 = vld [vmem:[%s5 + $0x2c] sm:$0xf]
      %v2647 = vld [vmem:[%s5 + $0x30] sm:$0xf]
      %v2648 = vld [vmem:[%s5 + $0x34] sm:$0xf]
      %v2649 = vld [vmem:[%s5 + $0x38] sm:$0xf]
      %v2650 = vld [vmem:[%s5 + $0x3c] sm:$0xf]
      %v2651 = vld [vmem:[%s6] sm:$0x1]
      %v2653 = vlaneseq
      %v2654 = vshrl.u32 %v2653, 7
      %v2655 = vsub.s32 0, %v2654
      %v2656 = vrot.slane %v2651, %v2655
      %v2674 = vunpack.c.l.b16 %v2635
      %v2675 = vunpack.c.l.b16 %v2636
      %v2676 = vunpack.c.l.b16 %v2637
      %v2677 = vunpack.c.l.b16 %v2638
      %v2678 = vunpack.c.l.b16 %v2639
      %v2679 = vunpack.c.l.b16 %v2640
      %v2680 = vunpack.c.l.b16 %v2641
      %v2681 = vunpack.c.l.b16 %v2642
      %v2682 = vunpack.c.l.b16 %v2643
      %v2683 = vunpack.c.l.b16 %v2644
      %v2684 = vunpack.c.l.b16 %v2645
      %v2685 = vunpack.c.l.b16 %v2646
      %v2686 = vunpack.c.l.b16 %v2647
      %v2687 = vunpack.c.l.b16 %v2648
      %v2688 = vunpack.c.l.b16 %v2649
      %v2689 = vunpack.c.l.b16 %v2650
      %v2690 = vpack.c.b16 %v2675, %v2674
      %v2691 = vpack.c.b16 %v2677, %v2676
      %v2692 = vpack.c.b16 %v2679, %v2678
      %v2693 = vpack.c.b16 %v2681, %v2680
      %v2694 = vpack.c.b16 %v2683, %v2682
      %v2695 = vpack.c.b16 %v2685, %v2684
      %v2696 = vpack.c.b16 %v2687, %v2686
      %v2697 = vpack.c.b16 %v2689, %v2688
      %2706 = vmatprep.subr.bf16.mxu0 0
      %2707 = vmatpush1.bf16.msra.mxu0 %v2690
      %2708 = vmatprep.subr.bf16.mxu0 0
      %2709 = vmatpush1.bf16.msra.mxu0 %v2691
      %2710 = vmatprep.subr.bf16.mxu0 0
      %2711 = vmatpush1.bf16.msra.mxu0 %v2692
      %2712 = vmatprep.subr.bf16.mxu0 0
      %2713 = vmatpush1.bf16.msra.mxu0 %v2693
      %2714 = vmatprep.subr.bf16.mxu0 0
      %2715 = vmatpush1.bf16.msra.mxu0 %v2694
      %2716 = vmatprep.subr.bf16.mxu0 0
      %2717 = vmatpush1.bf16.msra.mxu0 %v2695
      %2718 = vmatprep.subr.bf16.mxu0 0
      %2719 = vmatpush1.bf16.msra.mxu0 %v2696
      %2720 = vmatprep.subr.bf16.mxu0 0
      %2721 = vmatpush1.bf16.msra.mxu0 %v2697
      %2722 = vmatprep.subr.bf16.mxu0 0
      %2723 = vmatpush1.bf16.msra.mxu0 0
      %2724 = vmatprep.subr.bf16.mxu0 0
      %2725 = vmatpush1.bf16.msra.mxu0 0
      %2726 = vmatprep.subr.bf16.mxu0 0
      %2727 = vmatpush1.bf16.msra.mxu0 0
      %2728 = vmatprep.subr.bf16.mxu0 0
      %2729 = vmatpush1.bf16.msra.mxu0 0
      %2730 = vmatprep.subr.bf16.mxu0 0
      %2731 = vmatpush1.bf16.msra.mxu0 0
      %2732 = vmatprep.subr.bf16.mxu0 0
      %2733 = vmatpush1.bf16.msra.mxu0 0
      %2734 = vmatprep.subr.bf16.mxu0 0
      %2735 = vmatpush1.bf16.msra.mxu0 0
      %2736 = vmatprep.subr.bf16.mxu0 0
      %2737 = vmatpush1.bf16.msra.mxu0 0
      %2738 = vmatprep.mubr.bf16.mxu0 0
      %2739 = vmatmul.mubr.bf16.gmra.mrb[0].mxu0 %v2619
      %v2740 = vpop.f32.mrb[0].mxu0
      %v2741 = vadd.f32 %v2656, %v2740
      %v2742 = vpop.f32.mrb[0].mxu0
      %v2743 = vpop.f32.mrb[0].mxu0
      %v2744 = vadd.f32 %v2656, %v2743
      %v2745 = vpop.f32.mrb[0].mxu0
      %2746 = vmatprep.mubr.bf16.mxu0 0
      %2747 = vmatmul.mubr.bf16.gmra.mrb[0].mxu0 %v2620
      %v2748 = vpop.f32.mrb[0].mxu0
      %v2749 = vadd.f32 %v2656, %v2748
      %v2750 = vpop.f32.mrb[0].mxu0
      %v2751 = vpop.f32.mrb[0].mxu0
      %v2752 = vadd.f32 %v2656, %v2751
      %v2753 = vpop.f32.mrb[0].mxu0
      %2754 = vmatprep.mubr.bf16.mxu0 0
      %2755 = vmatmul.mubr.bf16.gmra.mrb[0].mxu0 %v2621
      %v2756 = vpop.f32.mrb[0].mxu0
      %v2757 = vadd.f32 %v2656, %v2756
      %v2758 = vpop.f32.mrb[0].mxu0
      %v2759 = vpop.f32.mrb[0].mxu0
      %v2760 = vadd.f32 %v2656, %v2759
      %v2761 = vpop.f32.mrb[0].mxu0
      %2762 = vmatprep.mubr.bf16.mxu0 0
      %2763 = vmatmul.mubr.bf16.gmra.mrb[0].mxu0 %v2622
      %v2764 = vpop.f32.mrb[0].mxu0
      %v2765 = vadd.f32 %v2656, %v2764
      %v2766 = vpop.f32.mrb[0].mxu0
      %v2767 = vpop.f32.mrb[0].mxu0
      %v2768 = vadd.f32 %v2656, %v2767
      %v2769 = vpop.f32.mrb[0].mxu0
      %2770 = vmatprep.mubr.bf16.mxu0 0
      %2771 = vmatmul.mubr.bf16.gmra.mrb[0].mxu0 %v2623
      %v2772 = vpop.f32.mrb[0].mxu0
      %v2773 = vadd.f32 %v2656, %v2772
      %v2774 = vpop.f32.mrb[0].mxu0
      %v2775 = vpop.f32.mrb[0].mxu0
      %v2776 = vadd.f32 %v2656, %v2775
      %v2777 = vpop.f32.mrb[0].mxu0
      %2778 = vmatprep.mubr.bf16.mxu0 0
      %2779 = vmatmul.mubr.bf16.gmra.mrb[0].mxu0 %v2624
      %v2780 = vpop.f32.mrb[0].mxu0
      %v2781 = vadd.f32 %v2656, %v2780
      %v2782 = vpop.f32.mrb[0].mxu0
      %v2783 = vpop.f32.mrb[0].mxu0
      %v2784 = vadd.f32 %v2656, %v2783
      %v2785 = vpop.f32.mrb[0].mxu0
      %2786 = vmatprep.mubr.bf16.mxu0 0
      %2787 = vmatmul.mubr.bf16.gmra.mrb[0].mxu0 %v2625
      %v2788 = vpop.f32.mrb[0].mxu0
      %v2789 = vadd.f32 %v2656, %v2788
      %v2790 = vpop.f32.mrb[0].mxu0
      %v2791 = vpop.f32.mrb[0].mxu0
      %v2792 = vadd.f32 %v2656, %v2791
      %v2793 = vpop.f32.mrb[0].mxu0
      %2794 = vmatprep.mubr.bf16.mxu0 0
      %2795 = vmatmul.mubr.bf16.gmra.mrb[0].mxu0 %v2626
      %v2796 = vpop.f32.mrb[0].mxu0
      %v2797 = vadd.f32 %v2656, %v2796
      %v2798 = vpop.f32.mrb[0].mxu0
      %v2799 = vpop.f32.mrb[0].mxu0
      %v2800 = vadd.f32 %v2656, %v2799
      %v2801 = vpop.f32.mrb[0].mxu0
      %2802 = vmatprep.mubr.bf16.mxu0 0
      %2803 = vmatmul.mubr.bf16.gmra.mrb[0].mxu0 %v2627
      %v2804 = vpop.f32.mrb[0].mxu0
      %v2805 = vadd.f32 %v2656, %v2804
      %v2806 = vpop.f32.mrb[0].mxu0
      %v2807 = vpop.f32.mrb[0].mxu0
      %v2808 = vadd.f32 %v2656, %v2807
      %v2809 = vpop.f32.mrb[0].mxu0
      %2810 = vmatprep.mubr.bf16.mxu0 0
      %2811 = vmatmul.mubr.bf16.gmra.mrb[0].mxu0 %v2628
      %v2812 = vpop.f32.mrb[0].mxu0
      %v2813 = vadd.f32 %v2656, %v2812
      %v2814 = vpop.f32.mrb[0].mxu0
      %v2815 = vpop.f32.mrb[0].mxu0
      %v2816 = vadd.f32 %v2656, %v2815
      %v2817 = vpop.f32.mrb[0].mxu0
      %2818 = vmatprep.mubr.bf16.mxu0 0
      %2819 = vmatmul.mubr.bf16.gmra.mrb[0].mxu0 %v2629
      %v2820 = vpop.f32.mrb[0].mxu0
      %v2821 = vadd.f32 %v2656, %v2820
      %v2822 = vpop.f32.mrb[0].mxu0
      %v2823 = vpop.f32.mrb[0].mxu0
      %v2824 = vadd.f32 %v2656, %v2823
      %v2825 = vpop.f32.mrb[0].mxu0
      %2826 = vmatprep.mubr.bf16.mxu0 0
      %2827 = vmatmul.mubr.bf16.gmra.mrb[0].mxu0 %v2630
      %v2828 = vpop.f32.mrb[0].mxu0
      %v2829 = vadd.f32 %v2656, %v2828
      %v2830 = vpop.f32.mrb[0].mxu0
      %v2831 = vpop.f32.mrb[0].mxu0
      %v2832 = vadd.f32 %v2656, %v2831
      %v2833 = vpop.f32.mrb[0].mxu0
      %2834 = vmatprep.mubr.bf16.mxu0 0
      %2835 = vmatmul.mubr.bf16.gmra.mrb[0].mxu0 %v2631
      %v2836 = vpop.f32.mrb[0].mxu0
      %v2837 = vadd.f32 %v2656, %v2836
      %v2838 = vpop.f32.mrb[0].mxu0
      %v2839 = vpop.f32.mrb[0].mxu0
      %v2840 = vadd.f32 %v2656, %v2839
      %v2841 = vpop.f32.mrb[0].mxu0
      %2842 = vmatprep.mubr.bf16.mxu0 0
      %2843 = vmatmul.mubr.bf16.gmra.mrb[0].mxu0 %v2632
      %v2844 = vpop.f32.mrb[0].mxu0
      %v2845 = vadd.f32 %v2656, %v2844
      %v2846 = vpop.f32.mrb[0].mxu0
      %v2847 = vpop.f32.mrb[0].mxu0
      %v2848 = vadd.f32 %v2656, %v2847
      %v2849 = vpop.f32.mrb[0].mxu0
      %2850 = vmatprep.mubr.bf16.mxu0 0
      %2851 = vmatmul.mubr.bf16.gmra.mrb[0].mxu0 %v2633
      %v2852 = vpop.f32.mrb[0].mxu0
      %v2853 = vadd.f32 %v2656, %v2852
      %v2854 = vpop.f32.mrb[0].mxu0
      %v2855 = vpop.f32.mrb[0].mxu0
      %v2856 = vadd.f32 %v2656, %v2855
      %v2857 = vpop.f32.mrb[0].mxu0
      %2858 = vmatprep.mubr.bf16.mxu0 0
      %2859 = vmatmul.mubr.bf16.gmra.mrb[0].mxu0 %v2634
      %v2860 = vpop.f32.mrb[0].mxu0
      %v2861 = vadd.f32 %v2656, %v2860
      %v2862 = vpop.f32.mrb[0].mxu0
      %v2863 = vpop.f32.mrb[0].mxu0
      %v2864 = vadd.f32 %v2656, %v2863
      %v2865 = vpop.f32.mrb[0].mxu0
      %2866 = vdwg.mxu0
      %2867 = vst [vmem:[%s280] sm:$0xff] %v2741
      %2868 = vst [vmem:[%s280 + $0x8] sm:$0xff] %v2744
      %2869 = vst [vmem:[%s280 + $0x10] sm:$0xff] %v2749
      %2870 = vst [vmem:[%s280 + $0x18] sm:$0xff] %v2752
      %2871 = vst [vmem:[%s280 + $0x20] sm:$0xff] %v2757
      %2872 = vst [vmem:[%s280 + $0x28] sm:$0xff] %v2760
      %2873 = vst [vmem:[%s280 + $0x30] sm:$0xff] %v2765
      %2874 = vst [vmem:[%s280 + $0x38] sm:$0xff] %v2768
      %2875 = vst [vmem:[%s280 + $0x40] sm:$0xff] %v2773
      %2876 = vst [vmem:[%s280 + $0x48] sm:$0xff] %v2776
      %2877 = vst [vmem:[%s280 + $0x50] sm:$0xff] %v2781
      %2878 = vst [vmem:[%s280 + $0x58] sm:$0xff] %v2784
      %2879 = vst [vmem:[%s280 + $0x60] sm:$0xff] %v2789
      %2880 = vst [vmem:[%s280 + $0x68] sm:$0xff] %v2792
      %2881 = vst [vmem:[%s280 + $0x70] sm:$0xff] %v2797
      %2882 = vst [vmem:[%s280 + $0x78] sm:$0xff] %v2800
      %2883 = vst [vmem:[%s280 + $0x80] sm:$0xff] %v2805
      %2884 = vst [vmem:[%s280 + $0x88] sm:$0xff] %v2808
      %2885 = vst [vmem:[%s280 + $0x90] sm:$0xff] %v2813
      %2886 = vst [vmem:[%s280 + $0x98] sm:$0xff] %v2816
      %2887 = vst [vmem:[%s280 + $0xa0] sm:$0xff] %v2821
      %2888 = vst [vmem:[%s280 + $0xa8] sm:$0xff] %v2824
      %2889 = vst [vmem:[%s280 + $0xb0] sm:$0xff] %v2829
      %2890 = vst [vmem:[%s280 + $0xb8] sm:$0xff] %v2832
      %2891 = vst [vmem:[%s280 + $0xc0] sm:$0xff] %v2837
      %2892 = vst [vmem:[%s280 + $0xc8] sm:$0xff] %v2840
      %2893 = vst [vmem:[%s280 + $0xd0] sm:$0xff] %v2845
      %2894 = vst [vmem:[%s280 + $0xd8] sm:$0xff] %v2848
      %2895 = vst [vmem:[%s280 + $0xe0] sm:$0xff] %v2853
      %2896 = vst [vmem:[%s280 + $0xe8] sm:$0xff] %v2856
      %2897 = vst [vmem:[%s280 + $0xf0] sm:$0xff] %v2861
      %2898 = vst [vmem:[%s280 + $0xf8] sm:$0xff] %v2864
      %s2899 = smul.u32 32, %s18
      %p2900 = scmp.lt.s32.totalorder %s2899, 63
      %s2901 = scalar_select %p2900, %s2899, 63
      %s2902 = smul.addr %s2901, 8
      %s2903 = scalar_lea.vmem %s7, %s2902
      // Predicated region
      $region49: #{model_forward.1} parent=47 // pred_check
        %p2904 = pneg %p188
      $region50: #{model_forward.1} parent=47 // pred_check_branch
        %2906 = sbr.rel (%p2904) target = $region52
      $region51: #{model_forward.1} parent=47 // pred_region
        %s2907 = smul.u32 32, %s18
      $region52: #{model_forward.1} parent=47 // pred_fallthru
        _
    $region48: #{model_forward.1} parent=5 // pred_fallthru
      _
    %p2908 = scmp.le.s32.totalorder 2, %s13
    // Predicated region
    $region53: #{model_forward.1} parent=5 // pred_check
      %p2909 = pneg %p2908
    $region54: #{model_forward.1} parent=5 // pred_check_branch
      %2911 = sbr.rel (%p2909) target = $region56
    $region55: #{model_forward.1} parent=5 // pred_region
      %s2912 = ssub.s32 %s13, 2
      // Predicated region
      $region57: #{model_forward.1} parent=55 // pred_check
        %p2913 = pneg %p194
      $region58: #{model_forward.1} parent=55 // pred_check_branch
        %2915 = sbr.rel (%p2913) target = $region60
      $region59: #{model_forward.1} parent=55 // pred_region
        %s2916 = smul.u32 32, %s19
        %p2917 = scmp.lt.s32.totalorder %s2916, 63
        %s2918 = scalar_select %p2917, %s2916, 63
        %s2919 = smul.addr %s2918, 8
        %s2920 = scalar_lea.vmem %s7, %s2919
      $region60: #{model_forward.1} parent=55 // pred_fallthru
        _
    $region56: #{model_forward.1} parent=5 // pred_fallthru
      _
  $region6: #{model_forward.1} parent=0 // loop_footer
    %s17 = sadd.s32 1, %s13
  $region7: #{model_forward.1} parent=0 // loop_footer_branch
    %12 = sbr.rel target = $region3
  $region8: #{model_forward.1} parent=0 // loop_exit
    _

</llo_original>
